<compile_context>
chip_gen: v5e
topology: v5e:2x2
jax: 0.10.0
libtpu: 0.0.40
codegen_flags: <defaults>
</compile_context>

<pallas_src>
import numpy as np
import jax
import jax.numpy as jnp
from jax.experimental import pallas as pl
from jax.experimental.pallas import tpu as pltpu


_VMEM = pl.BlockSpec(memory_space=pltpu.MemorySpace.VMEM)
_EPS = 1e-5


def _build_kernel(n_batch, band, louts, zw, out_f):
    """Build the fused kernel for a static layer configuration.

    Activation layout: one (rows, W*C) channels-last matrix for the whole batch; sample n
    occupies rows [n*band, n*band + h_valid).  Rows past h_valid inside a band are padding.
    """
    n_layers = len(louts)
    bgb_base = n_batch * band            # first bias/gamma/beta row in the const slab
    bout_row = bgb_base + 3 * n_layers   # linear-bias row in the const slab

    def kernel(x_ref, const_ref, *rest):
        wb_refs = rest[0:2 * n_layers:2]
        g_refs = rest[1:2 * n_layers:2]
        wp_ref = rest[2 * n_layers]
        o_ref = rest[2 * n_layers + 1]

        a = x_ref[...]                   # (n_batch*band, W*Cin) f32
        r = n_batch * band
        for li in range(n_layers):
            lout = louts[li]
            r_out = r - 2
            h_out = band - 2 * (li + 1)  # valid rows (= valid cols, square) per sample
            wb_ref = wb_refs[li]

            # 3x3 valid conv == 3 batched MXU matmuls: dx/channel mixing folded into the
            # host-packed banded weights, dy handled by a static row slice of the LHS.
            acc = jnp.dot(a[0:r_out, :].astype(jnp.bfloat16), wb_ref[0],
                          preferred_element_type=jnp.float32)
            acc = acc + jnp.dot(a[1:r_out + 1, :].astype(jnp.bfloat16), wb_ref[1],
                                preferred_element_type=jnp.float32)
            acc = acc + jnp.dot(a[2:r_out + 2, :].astype(jnp.bfloat16), wb_ref[2],
                                preferred_element_type=jnp.float32)

            row = bgb_base + 3 * li
            bias_full = const_ref[row:row + 1, 0:lout]       # (1, lout)
            gamma_full = const_ref[row + 1:row + 2, 0:lout]
            beta_full = const_ref[row + 2:row + 3, 0:lout]

            o = acc + bias_full
            # ELU(alpha=1); exp argument clamped so the EUP never sees large positives.
            o = jnp.where(o > 0.0, o, jnp.exp(jnp.minimum(o, 0.0)) - 1.0)
            # Zero the per-sample padding rows so BN statistics are exact (and padding
            # magnitudes never grow across layers).
            valid = const_ref[0:r_out, li:li + 1] > 0.5      # (r_out, 1)
            o = jnp.where(valid, o, 0.0)

            # BatchNorm2d (training-mode forward, biased var): per-channel reduce AND
            # re-broadcast across the W*C lane groups with ONE stacked matmul against the
            # host-built same-channel 0/1 matrix G.
            stats = jnp.concatenate(
                [jnp.sum(o, axis=0, keepdims=True),
                 jnp.sum(o * o, axis=0, keepdims=True)], axis=0)          # (2, lout)
            inv_count = 1.0 / float(n_batch * h_out * h_out)
            full = jnp.dot(stats, g_refs[li][...],
                           preferred_element_type=jnp.float32) * inv_count
            mean_full = full[0:1, :]
            var_full = jnp.maximum(full[1:2, :] - mean_full * mean_full, 0.0)
            inv_full = jax.lax.rsqrt(var_full + _EPS)
            scale_full = gamma_full * inv_full
            shift_full = beta_full - mean_full * scale_full
            a = o * scale_full + shift_full
            r = r_out

        # Final Linear: zw small GEMMs batched over N (one per output spatial row).  The
        # PyTorch NCHW flatten order is absorbed into the host permutation of W_out.
        acc = None
        for hh in range(zw):
            rows = jnp.concatenate(
                [a[n * band + hh:n * band + hh + 1, :] for n in range(n_batch)],
                axis=0).astype(jnp.bfloat16)                              # (N, zw*hidden)
            p = jnp.dot(rows, wp_ref[hh], preferred_element_type=jnp.float32)
            acc = p if acc is None else acc + p
        b_out = const_ref[bout_row:bout_row + 1, 0:out_f]
        o_ref[...] = (acc + b_out).astype(o_ref.dtype)

    return kernel


@jax.jit
def l1_mlp_embed_forward(x_nchw, kparams):
    n, cin, h, w = x_nchw.shape
    band = h
    # Single tiny layout change at entry: NCHW -> one batched (N*H, W*Cin) channels-last matrix.
    x2d = jnp.transpose(x_nchw, (0, 2, 3, 1)).reshape(n * h, w * cin)
    wbs = kparams["wb"]
    gs = kparams["g"]
    wp = kparams["wp"]
    cslab = kparams["const"]
    louts = tuple(int(wb.shape[2]) for wb in wbs)
    zw = int(wp.shape[0])
    out_f = int(wp.shape[2])
    kernel = _build_kernel(n, band, louts, zw, out_f)

    flat = [x2d, cslab]
    for wb, g in zip(wbs, gs):
        flat += [wb, g]
    flat.append(wp)

    out = pl.pallas_call(
        kernel,
        out_shape=jax.ShapeDtypeStruct((n, out_f), jnp.float32),
        in_specs=[_VMEM] * len(flat),
        out_specs=_VMEM,
    )(*flat)
    return out.reshape(n, -1, zw, zw)


def init_params(key, in_dim, out_dim, hidden_dim, zw_dim):
    """Raw module parameters.  Conv weights are (kh, kw, Cin, Cout) == PyTorch
    weight.permute(2, 3, 1, 0); the Linear weight is (in_f, out_f) == PyTorch W.T with
    rows in NCHW-flatten order."""
    h2 = hidden_dim // 2
    chans = [(in_dim, h2), (h2, h2), (h2, hidden_dim), (hidden_dim, hidden_dim)]
    keys = jax.random.split(key, len(chans) * 2 + 2)
    convs = []
    for li, (cin, cout) in enumerate(chans):
        w = jax.random.normal(keys[2 * li], (3, 3, cin, cout), jnp.float32) * 0.1
        b = jax.random.normal(keys[2 * li + 1], (cout,), jnp.float32) * 0.05
        gamma = 1.0 + 0.1 * jnp.cos(jnp.arange(cout, dtype=jnp.float32))
        beta = 0.1 * jnp.sin(jnp.arange(cout, dtype=jnp.float32))
        convs.append((w, b, gamma, beta))
    in_f = hidden_dim * zw_dim * zw_dim
    out_f = out_dim * zw_dim * zw_dim
    w_out = jax.random.normal(keys[-2], (in_f, out_f), jnp.float32) * 0.02
    b_out = jax.random.normal(keys[-1], (out_f,), jnp.float32) * 0.05
    return {"convs": convs, "out": (w_out, b_out)}


def prepare_kernel_params(params, zw_dim, n_batch):
    """One-time host-side repacking into the kernel-ready layout."""
    band = zw_dim + 8                      # input H == W == per-sample row stride
    n_layers = len(params["convs"])
    win = band
    wbs, gs, bgb, louts = [], [], [], []
    for (w, b, gamma, beta) in params["convs"]:
        w_np = np.asarray(w, np.float32)
        _, _, cin, cout = w_np.shape
        wo = win - 2
        lout = wo * cout
        k_in = win * cin
        # banded weight: wb[dy, (j+dx)*Cin + ci, j*Cout + co] = w[dy, dx, ci, co]
        wb = np.zeros((3, k_in, lout), np.float32)
        for dy in range(3):
            for dx in range(3):
                for j in range(wo):
                    wb[dy, (j + dx) * cin:(j + dx + 1) * cin,
                       j * cout:(j + 1) * cout] = w_np[dy, dx]
        wbs.append(jnp.asarray(wb, jnp.bfloat16))
        # same-channel 0/1 matrix: (stats @ G) reduces per channel AND broadcasts the
        # per-channel result back across the W*C lanes in one MXU pass.
        ch = np.arange(lout) % cout
        gs.append(jnp.asarray((ch[:, None] == ch[None, :]).astype(np.float32)))
        bgb.append((np.tile(np.asarray(b, np.float32), wo),
                    np.tile(np.asarray(gamma, np.float32), wo),
                    np.tile(np.asarray(beta, np.float32), wo)))
        louts.append(lout)
        win = wo

    w_out, b_out = params["out"]
    w_out = np.asarray(w_out, np.float32)
    out_f = w_out.shape[1]
    hidden = np.asarray(params["convs"][-1][0]).shape[-1]
    # reorder rows from PyTorch NCHW flatten (c, h, w) to the kernel's (h, w, c) layout and
    # split into per-output-spatial-row blocks: (zw, zw*hidden, out_f)
    w_perm = (w_out.reshape(hidden, zw_dim, zw_dim, out_f)
              .transpose(1, 2, 0, 3)
              .reshape(zw_dim, zw_dim * hidden, out_f))

    # Constants slab: masks + bias/gamma/beta + linear bias coalesced into ONE input DMA.
    r0 = n_batch * band
    lane = max(max(louts), out_f, n_layers)
    slab = np.zeros((r0 + 3 * n_layers + 1, lane), np.float32)
    for li in range(n_layers):
        h_out = band - 2 * (li + 1)
        r_out = r0 - 2 * (li + 1)
        rr = np.arange(r_out)
        slab[:r_out, li] = ((rr % band) < h_out).astype(np.float32)   # valid-row mask
        lo = louts[li]
        slab[r0 + 3 * li + 0, :lo] = bgb[li][0]                        # bias (tiled per W)
        slab[r0 + 3 * li + 1, :lo] = bgb[li][1]                        # gamma
        slab[r0 + 3 * li + 2, :lo] = bgb[li][2]                        # beta
    slab[r0 + 3 * n_layers, :out_f] = np.asarray(b_out, np.float32)

    return {"wb": tuple(wbs), "g": tuple(gs),
            "wp": jnp.asarray(w_perm, jnp.bfloat16),
            "const": jnp.asarray(slab)}


def reference_forward(x_nchw, params):
    """Pure NumPy float64 reference of the PyTorch forward (training-mode BN)."""
    a = np.transpose(np.asarray(x_nchw, np.float64), (0, 2, 3, 1))  # NHWC
    for (w, b, gamma, beta) in params["convs"]:
        w64 = np.asarray(w, np.float64)
        n, h, ww, cin = a.shape
        ho, wo = h - 2, ww - 2
        cout = w64.shape[3]
        o = np.zeros((n, ho, wo, cout))
        for dy in range(3):
            for dx in range(3):
                o += np.einsum('nhwc,cd->nhwd', a[:, dy:dy + ho, dx:dx + wo, :], w64[dy, dx])
        o += np.asarray(b, np.float64)
        o = np.where(o > 0, o, np.expm1(np.minimum(o, 0)))
        mean = o.mean(axis=(0, 1, 2))
        var = o.var(axis=(0, 1, 2))  # biased, training-mode BN
        o = (o - mean) / np.sqrt(var + _EPS) * np.asarray(gamma, np.float64) \
            + np.asarray(beta, np.float64)
        a = o
    w_out, b_out = params["out"]
    feat = np.transpose(a, (0, 3, 1, 2)).reshape(a.shape[0], -1)   # PyTorch .view on NCHW
    out = feat @ np.asarray(w_out, np.float64) + np.asarray(b_out, np.float64)
    return out.reshape(a.shape[0], -1, 6, 6)


if __name__ == "__main__":
    in_dim, out_dim, hidden_dim, zw_dim = 4, 4, 32, 6
    N = 2
    H = W = zw_dim + 8   # 14 -> 12 -> 10 -> 8 -> 6 after four valid 3x3 convs

    key = jax.random.PRNGKey(0)
    xk, pk = jax.random.split(key)
    x = jax.random.normal(xk, (N, in_dim, H, W), jnp.float32)
    params = init_params(pk, in_dim, out_dim, hidden_dim, zw_dim)
    kparams = prepare_kernel_params(params, zw_dim, N)

    y = l1_mlp_embed_forward(x, kparams)
    jax.block_until_ready(y)

    assert y.shape == (N, out_dim, zw_dim, zw_dim), y.shape
    assert bool(jnp.all(jnp.isfinite(y)))

    # Numerical check vs a float64 reference (tolerance accommodates bf16 MXU inputs;
    # structural bugs would show up as O(1) mismatches).
    ref = reference_forward(x, params)
    np.testing.assert_allclose(np.asarray(y, np.float64), ref, rtol=5e-2, atol=5e-2)

    print("KERNEL_OK")
</pallas_src>

<mosaic_0001>
module attributes {stable_mosaic.version = 11 : i64} {
  func.func @kernel(%arg0: memref<28x56xf32, #tpu.memory_space<vmem>>, %arg1: memref<41x256xf32, #tpu.memory_space<vmem>>, %arg2: memref<3x56x192xbf16, #tpu.memory_space<vmem>>, %arg3: memref<192x192xf32, #tpu.memory_space<vmem>>, %arg4: memref<3x192x160xbf16, #tpu.memory_space<vmem>>, %arg5: memref<160x160xf32, #tpu.memory_space<vmem>>, %arg6: memref<3x160x256xbf16, #tpu.memory_space<vmem>>, %arg7: memref<256x256xf32, #tpu.memory_space<vmem>>, %arg8: memref<3x256x192xbf16, #tpu.memory_space<vmem>>, %arg9: memref<192x192xf32, #tpu.memory_space<vmem>>, %arg10: memref<6x192x144xbf16, #tpu.memory_space<vmem>>, %arg11: memref<2x144xf32, #tpu.memory_space<vmem>>) attributes {dimension_semantics = [], scalar_prefetch = 0 : i64, scratch_operands = 0 : i64, tpu.core_type = #tpu.core_type<tc>} {
    %c0 = arith.constant 0 : index
    %c0_0 = arith.constant 0 : index
    %0 = vector.load %arg0[%c0, %c0_0] : memref<28x56xf32, #tpu.memory_space<vmem>>, vector<28x56xf32>
    %1 = vector.extract_strided_slice %0 {offsets = [0, 0], sizes = [26, 56], strides = [1, 1]} : vector<28x56xf32> to vector<26x56xf32>
    %2 = arith.truncf %1 : vector<26x56xf32> to vector<26x56xbf16>
    %c0_1 = arith.constant 0 : index
    %c0_2 = arith.constant 0 : index
    %c0_3 = arith.constant 0 : index
    %3 = vector.load %arg2[%c0_1, %c0_2, %c0_3] : memref<3x56x192xbf16, #tpu.memory_space<vmem>>, vector<1x56x192xbf16>
    %4 = vector.shape_cast %3 : vector<1x56x192xbf16> to vector<56x192xbf16>
    %cst = arith.constant dense<0.000000e+00> : vector<26x192xf32>
    %5 = tpu.matmul %2, %4, %cst {dimension_numbers = #tpu.dot_dimension_numbers<[1], [0], [0], [1], [0, 0, 1, 1], [], []>} : vector<26x56xbf16>, vector<56x192xbf16>, vector<26x192xf32> -> vector<26x192xf32>
    %6 = vector.extract_strided_slice %0 {offsets = [1, 0], sizes = [26, 56], strides = [1, 1]} : vector<28x56xf32> to vector<26x56xf32>
    %7 = arith.truncf %6 : vector<26x56xf32> to vector<26x56xbf16>
    %c1 = arith.constant 1 : index
    %c0_4 = arith.constant 0 : index
    %c0_5 = arith.constant 0 : index
    %8 = vector.load %arg2[%c1, %c0_4, %c0_5] : memref<3x56x192xbf16, #tpu.memory_space<vmem>>, vector<1x56x192xbf16>
    %9 = vector.shape_cast %8 : vector<1x56x192xbf16> to vector<56x192xbf16>
    %cst_6 = arith.constant dense<0.000000e+00> : vector<26x192xf32>
    %10 = tpu.matmul %7, %9, %cst_6 {dimension_numbers = #tpu.dot_dimension_numbers<[1], [0], [0], [1], [0, 0, 1, 1], [], []>} : vector<26x56xbf16>, vector<56x192xbf16>, vector<26x192xf32> -> vector<26x192xf32>
    %11 = arith.addf %5, %10 : vector<26x192xf32>
    %12 = vector.extract_strided_slice %0 {offsets = [2, 0], sizes = [26, 56], strides = [1, 1]} : vector<28x56xf32> to vector<26x56xf32>
    %13 = arith.truncf %12 : vector<26x56xf32> to vector<26x56xbf16>
    %c2 = arith.constant 2 : index
    %c0_7 = arith.constant 0 : index
    %c0_8 = arith.constant 0 : index
    %14 = vector.load %arg2[%c2, %c0_7, %c0_8] : memref<3x56x192xbf16, #tpu.memory_space<vmem>>, vector<1x56x192xbf16>
    %15 = vector.shape_cast %14 : vector<1x56x192xbf16> to vector<56x192xbf16>
    %cst_9 = arith.constant dense<0.000000e+00> : vector<26x192xf32>
    %16 = tpu.matmul %13, %15, %cst_9 {dimension_numbers = #tpu.dot_dimension_numbers<[1], [0], [0], [1], [0, 0, 1, 1], [], []>} : vector<26x56xbf16>, vector<56x192xbf16>, vector<26x192xf32> -> vector<26x192xf32>
    %17 = arith.addf %11, %16 : vector<26x192xf32>
    %c28 = arith.constant 28 : index
    %c0_10 = arith.constant 0 : index
    %18 = vector.load %arg1[%c28, %c0_10] : memref<41x256xf32, #tpu.memory_space<vmem>>, vector<1x192xf32>
    %c29 = arith.constant 29 : index
    %c0_11 = arith.constant 0 : index
    %19 = vector.load %arg1[%c29, %c0_11] : memref<41x256xf32, #tpu.memory_space<vmem>>, vector<1x192xf32>
    %c30 = arith.constant 30 : index
    %c0_12 = arith.constant 0 : index
    %20 = vector.load %arg1[%c30, %c0_12] : memref<41x256xf32, #tpu.memory_space<vmem>>, vector<1x192xf32>
    %21 = vector.broadcast %18 : vector<1x192xf32> to vector<26x192xf32>
    %22 = arith.addf %17, %21 : vector<26x192xf32>
    %cst_13 = arith.constant 0.000000e+00 : f32
    %23 = vector.broadcast %cst_13 : f32 to vector<26x192xf32>
    %24 = arith.cmpf ogt, %22, %23 : vector<26x192xf32>
    %cst_14 = arith.constant 0.000000e+00 : f32
    %25 = vector.broadcast %cst_14 : f32 to vector<26x192xf32>
    %26 = arith.minimumf %22, %25 : vector<26x192xf32>
    %27 = math.exp %26 : vector<26x192xf32>
    %cst_15 = arith.constant 1.000000e+00 : f32
    %28 = vector.broadcast %cst_15 : f32 to vector<26x192xf32>
    %29 = arith.subf %27, %28 : vector<26x192xf32>
    %30 = arith.select %24, %22, %29 : vector<26x192xi1>, vector<26x192xf32>
    %c0_16 = arith.constant 0 : index
    %c0_17 = arith.constant 0 : index
    %31 = vector.load %arg1[%c0_16, %c0_17] : memref<41x256xf32, #tpu.memory_space<vmem>>, vector<26x1xf32>
    %cst_18 = arith.constant 5.000000e-01 : f32
    %32 = vector.broadcast %cst_18 : f32 to vector<26x1xf32>
    %33 = arith.cmpf ogt, %31, %32 : vector<26x1xf32>
    %cst_19 = arith.constant 0.000000e+00 : f32
    %34 = vector.shape_cast %33 : vector<26x1xi1> to vector<26x1xi1>
    %35 = vector.broadcast %34 : vector<26x1xi1> to vector<26x192xi1>
    %36 = vector.broadcast %cst_19 : f32 to vector<26x192xf32>
    %37 = arith.select %35, %30, %36 : vector<26x192xi1>, vector<26x192xf32>
    %cst_20 = arith.constant dense<0.000000e+00> : vector<192xf32>
    %38 = vector.multi_reduction <add>, %37, %cst_20 [0] : vector<26x192xf32> to vector<192xf32>
    %39 = vector.shape_cast %38 : vector<192xf32> to vector<1x192xf32>
    %40 = arith.mulf %37, %37 : vector<26x192xf32>
    %cst_21 = arith.constant dense<0.000000e+00> : vector<192xf32>
    %41 = vector.multi_reduction <add>, %40, %cst_21 [0] : vector<26x192xf32> to vector<192xf32>
    %42 = vector.shape_cast %41 : vector<192xf32> to vector<1x192xf32>
    %43 = tpu.concatenate %39, %42 in 0 : vector<1x192xf32>, vector<1x192xf32> -> vector<2x192xf32>
    %c0_22 = arith.constant 0 : index
    %c0_23 = arith.constant 0 : index
    %44 = vector.load %arg3[%c0_22, %c0_23] : memref<192x192xf32, #tpu.memory_space<vmem>>, vector<192x192xf32>
    %cst_24 = arith.constant dense<0.000000e+00> : vector<2x192xf32>
    %45 = tpu.matmul %43, %44, %cst_24 {dimension_numbers = #tpu.dot_dimension_numbers<[1], [0], [0], [1], [0, 0, 1, 1], [], []>} : vector<2x192xf32>, vector<192x192xf32>, vector<2x192xf32> -> vector<2x192xf32>
    %cst_25 = arith.constant 0.00347222225 : f32
    %46 = vector.broadcast %cst_25 : f32 to vector<2x192xf32>
    %47 = arith.mulf %45, %46 : vector<2x192xf32>
    %48 = vector.extract_strided_slice %47 {offsets = [0, 0], sizes = [1, 192], strides = [1, 1]} : vector<2x192xf32> to vector<1x192xf32>
    %49 = vector.extract_strided_slice %47 {offsets = [1, 0], sizes = [1, 192], strides = [1, 1]} : vector<2x192xf32> to vector<1x192xf32>
    %50 = arith.mulf %48, %48 : vector<1x192xf32>
    %51 = arith.subf %49, %50 : vector<1x192xf32>
    %cst_26 = arith.constant 0.000000e+00 : f32
    %52 = vector.broadcast %cst_26 : f32 to vector<1x192xf32>
    %53 = arith.maximumf %51, %52 : vector<1x192xf32>
    %cst_27 = arith.constant 9.99999974E-6 : f32
    %54 = vector.broadcast %cst_27 : f32 to vector<1x192xf32>
    %55 = arith.addf %53, %54 : vector<1x192xf32>
    %56 = math.rsqrt %55 : vector<1x192xf32>
    %57 = arith.mulf %19, %56 : vector<1x192xf32>
    %58 = arith.mulf %48, %57 : vector<1x192xf32>
    %59 = arith.subf %20, %58 : vector<1x192xf32>
    %60 = vector.broadcast %57 : vector<1x192xf32> to vector<26x192xf32>
    %61 = arith.mulf %37, %60 : vector<26x192xf32>
    %62 = vector.broadcast %59 : vector<1x192xf32> to vector<26x192xf32>
    %63 = arith.addf %61, %62 : vector<26x192xf32>
    %64 = vector.extract_strided_slice %63 {offsets = [0, 0], sizes = [24, 192], strides = [1, 1]} : vector<26x192xf32> to vector<24x192xf32>
    %65 = arith.truncf %64 : vector<24x192xf32> to vector<24x192xbf16>
    %c0_28 = arith.constant 0 : index
    %c0_29 = arith.constant 0 : index
    %c0_30 = arith.constant 0 : index
    %66 = vector.load %arg4[%c0_28, %c0_29, %c0_30] : memref<3x192x160xbf16, #tpu.memory_space<vmem>>, vector<1x192x160xbf16>
    %67 = vector.shape_cast %66 : vector<1x192x160xbf16> to vector<192x160xbf16>
    %cst_31 = arith.constant dense<0.000000e+00> : vector<24x160xf32>
    %68 = tpu.matmul %65, %67, %cst_31 {dimension_numbers = #tpu.dot_dimension_numbers<[1], [0], [0], [1], [0, 0, 1, 1], [], []>} : vector<24x192xbf16>, vector<192x160xbf16>, vector<24x160xf32> -> vector<24x160xf32>
    %69 = vector.extract_strided_slice %63 {offsets = [1, 0], sizes = [24, 192], strides = [1, 1]} : vector<26x192xf32> to vector<24x192xf32>
    %70 = arith.truncf %69 : vector<24x192xf32> to vector<24x192xbf16>
    %c1_32 = arith.constant 1 : index
    %c0_33 = arith.constant 0 : index
    %c0_34 = arith.constant 0 : index
    %71 = vector.load %arg4[%c1_32, %c0_33, %c0_34] : memref<3x192x160xbf16, #tpu.memory_space<vmem>>, vector<1x192x160xbf16>
    %72 = vector.shape_cast %71 : vector<1x192x160xbf16> to vector<192x160xbf16>
    %cst_35 = arith.constant dense<0.000000e+00> : vector<24x160xf32>
    %73 = tpu.matmul %70, %72, %cst_35 {dimension_numbers = #tpu.dot_dimension_numbers<[1], [0], [0], [1], [0, 0, 1, 1], [], []>} : vector<24x192xbf16>, vector<192x160xbf16>, vector<24x160xf32> -> vector<24x160xf32>
    %74 = arith.addf %68, %73 : vector<24x160xf32>
    %75 = vector.extract_strided_slice %63 {offsets = [2, 0], sizes = [24, 192], strides = [1, 1]} : vector<26x192xf32> to vector<24x192xf32>
    %76 = arith.truncf %75 : vector<24x192xf32> to vector<24x192xbf16>
    %c2_36 = arith.constant 2 : index
    %c0_37 = arith.constant 0 : index
    %c0_38 = arith.constant 0 : index
    %77 = vector.load %arg4[%c2_36, %c0_37, %c0_38] : memref<3x192x160xbf16, #tpu.memory_space<vmem>>, vector<1x192x160xbf16>
    %78 = vector.shape_cast %77 : vector<1x192x160xbf16> to vector<192x160xbf16>
    %cst_39 = arith.constant dense<0.000000e+00> : vector<24x160xf32>
    %79 = tpu.matmul %76, %78, %cst_39 {dimension_numbers = #tpu.dot_dimension_numbers<[1], [0], [0], [1], [0, 0, 1, 1], [], []>} : vector<24x192xbf16>, vector<192x160xbf16>, vector<24x160xf32> -> vector<24x160xf32>
    %80 = arith.addf %74, %79 : vector<24x160xf32>
    %c31 = arith.constant 31 : index
    %c0_40 = arith.constant 0 : index
    %81 = vector.load %arg1[%c31, %c0_40] : memref<41x256xf32, #tpu.memory_space<vmem>>, vector<1x160xf32>
    %c32 = arith.constant 32 : index
    %c0_41 = arith.constant 0 : index
    %82 = vector.load %arg1[%c32, %c0_41] : memref<41x256xf32, #tpu.memory_space<vmem>>, vector<1x160xf32>
    %c33 = arith.constant 33 : index
    %c0_42 = arith.constant 0 : index
    %83 = vector.load %arg1[%c33, %c0_42] : memref<41x256xf32, #tpu.memory_space<vmem>>, vector<1x160xf32>
    %84 = vector.broadcast %81 : vector<1x160xf32> to vector<24x160xf32>
    %85 = arith.addf %80, %84 : vector<24x160xf32>
    %cst_43 = arith.constant 0.000000e+00 : f32
    %86 = vector.broadcast %cst_43 : f32 to vector<24x160xf32>
    %87 = arith.cmpf ogt, %85, %86 : vector<24x160xf32>
    %cst_44 = arith.constant 0.000000e+00 : f32
    %88 = vector.broadcast %cst_44 : f32 to vector<24x160xf32>
    %89 = arith.minimumf %85, %88 : vector<24x160xf32>
    %90 = math.exp %89 : vector<24x160xf32>
    %cst_45 = arith.constant 1.000000e+00 : f32
    %91 = vector.broadcast %cst_45 : f32 to vector<24x160xf32>
    %92 = arith.subf %90, %91 : vector<24x160xf32>
    %93 = arith.select %87, %85, %92 : vector<24x160xi1>, vector<24x160xf32>
    %c0_46 = arith.constant 0 : index
    %c1_47 = arith.constant 1 : index
    %94 = vector.load %arg1[%c0_46, %c1_47] : memref<41x256xf32, #tpu.memory_space<vmem>>, vector<24x1xf32>
    %cst_48 = arith.constant 5.000000e-01 : f32
    %95 = vector.broadcast %cst_48 : f32 to vector<24x1xf32>
    %96 = arith.cmpf ogt, %94, %95 : vector<24x1xf32>
    %cst_49 = arith.constant 0.000000e+00 : f32
    %97 = vector.shape_cast %96 : vector<24x1xi1> to vector<24x1xi1>
    %98 = vector.broadcast %97 : vector<24x1xi1> to vector<24x160xi1>
    %99 = vector.broadcast %cst_49 : f32 to vector<24x160xf32>
    %100 = arith.select %98, %93, %99 : vector<24x160xi1>, vector<24x160xf32>
    %cst_50 = arith.constant dense<0.000000e+00> : vector<160xf32>
    %101 = vector.multi_reduction <add>, %100, %cst_50 [0] : vector<24x160xf32> to vector<160xf32>
    %102 = vector.shape_cast %101 : vector<160xf32> to vector<1x160xf32>
    %103 = arith.mulf %100, %100 : vector<24x160xf32>
    %cst_51 = arith.constant dense<0.000000e+00> : vector<160xf32>
    %104 = vector.multi_reduction <add>, %103, %cst_51 [0] : vector<24x160xf32> to vector<160xf32>
    %105 = vector.shape_cast %104 : vector<160xf32> to vector<1x160xf32>
    %106 = tpu.concatenate %102, %105 in 0 : vector<1x160xf32>, vector<1x160xf32> -> vector<2x160xf32>
    %c0_52 = arith.constant 0 : index
    %c0_53 = arith.constant 0 : index
    %107 = vector.load %arg5[%c0_52, %c0_53] : memref<160x160xf32, #tpu.memory_space<vmem>>, vector<160x160xf32>
    %cst_54 = arith.constant dense<0.000000e+00> : vector<2x160xf32>
    %108 = tpu.matmul %106, %107, %cst_54 {dimension_numbers = #tpu.dot_dimension_numbers<[1], [0], [0], [1], [0, 0, 1, 1], [], []>} : vector<2x160xf32>, vector<160x160xf32>, vector<2x160xf32> -> vector<2x160xf32>
    %cst_55 = arith.constant 5.000000e-03 : f32
    %109 = vector.broadcast %cst_55 : f32 to vector<2x160xf32>
    %110 = arith.mulf %108, %109 : vector<2x160xf32>
    %111 = vector.extract_strided_slice %110 {offsets = [0, 0], sizes = [1, 160], strides = [1, 1]} : vector<2x160xf32> to vector<1x160xf32>
    %112 = vector.extract_strided_slice %110 {offsets = [1, 0], sizes = [1, 160], strides = [1, 1]} : vector<2x160xf32> to vector<1x160xf32>
    %113 = arith.mulf %111, %111 : vector<1x160xf32>
    %114 = arith.subf %112, %113 : vector<1x160xf32>
    %cst_56 = arith.constant 0.000000e+00 : f32
    %115 = vector.broadcast %cst_56 : f32 to vector<1x160xf32>
    %116 = arith.maximumf %114, %115 : vector<1x160xf32>
    %cst_57 = arith.constant 9.99999974E-6 : f32
    %117 = vector.broadcast %cst_57 : f32 to vector<1x160xf32>
    %118 = arith.addf %116, %117 : vector<1x160xf32>
    %119 = math.rsqrt %118 : vector<1x160xf32>
    %120 = arith.mulf %82, %119 : vector<1x160xf32>
    %121 = arith.mulf %111, %120 : vector<1x160xf32>
    %122 = arith.subf %83, %121 : vector<1x160xf32>
    %123 = vector.broadcast %120 : vector<1x160xf32> to vector<24x160xf32>
    %124 = arith.mulf %100, %123 : vector<24x160xf32>
    %125 = vector.broadcast %122 : vector<1x160xf32> to vector<24x160xf32>
    %126 = arith.addf %124, %125 : vector<24x160xf32>
    %127 = vector.extract_strided_slice %126 {offsets = [0, 0], sizes = [22, 160], strides = [1, 1]} : vector<24x160xf32> to vector<22x160xf32>
    %128 = arith.truncf %127 : vector<22x160xf32> to vector<22x160xbf16>
    %c0_58 = arith.constant 0 : index
    %c0_59 = arith.constant 0 : index
    %c0_60 = arith.constant 0 : index
    %129 = vector.load %arg6[%c0_58, %c0_59, %c0_60] : memref<3x160x256xbf16, #tpu.memory_space<vmem>>, vector<1x160x256xbf16>
    %130 = vector.shape_cast %129 : vector<1x160x256xbf16> to vector<160x256xbf16>
    %cst_61 = arith.constant dense<0.000000e+00> : vector<22x256xf32>
    %131 = tpu.matmul %128, %130, %cst_61 {dimension_numbers = #tpu.dot_dimension_numbers<[1], [0], [0], [1], [0, 0, 1, 1], [], []>} : vector<22x160xbf16>, vector<160x256xbf16>, vector<22x256xf32> -> vector<22x256xf32>
    %132 = vector.extract_strided_slice %126 {offsets = [1, 0], sizes = [22, 160], strides = [1, 1]} : vector<24x160xf32> to vector<22x160xf32>
    %133 = arith.truncf %132 : vector<22x160xf32> to vector<22x160xbf16>
    %c1_62 = arith.constant 1 : index
    %c0_63 = arith.constant 0 : index
    %c0_64 = arith.constant 0 : index
    %134 = vector.load %arg6[%c1_62, %c0_63, %c0_64] : memref<3x160x256xbf16, #tpu.memory_space<vmem>>, vector<1x160x256xbf16>
    %135 = vector.shape_cast %134 : vector<1x160x256xbf16> to vector<160x256xbf16>
    %cst_65 = arith.constant dense<0.000000e+00> : vector<22x256xf32>
    %136 = tpu.matmul %133, %135, %cst_65 {dimension_numbers = #tpu.dot_dimension_numbers<[1], [0], [0], [1], [0, 0, 1, 1], [], []>} : vector<22x160xbf16>, vector<160x256xbf16>, vector<22x256xf32> -> vector<22x256xf32>
    %137 = arith.addf %131, %136 : vector<22x256xf32>
    %138 = vector.extract_strided_slice %126 {offsets = [2, 0], sizes = [22, 160], strides = [1, 1]} : vector<24x160xf32> to vector<22x160xf32>
    %139 = arith.truncf %138 : vector<22x160xf32> to vector<22x160xbf16>
    %c2_66 = arith.constant 2 : index
    %c0_67 = arith.constant 0 : index
    %c0_68 = arith.constant 0 : index
    %140 = vector.load %arg6[%c2_66, %c0_67, %c0_68] : memref<3x160x256xbf16, #tpu.memory_space<vmem>>, vector<1x160x256xbf16>
    %141 = vector.shape_cast %140 : vector<1x160x256xbf16> to vector<160x256xbf16>
    %cst_69 = arith.constant dense<0.000000e+00> : vector<22x256xf32>
    %142 = tpu.matmul %139, %141, %cst_69 {dimension_numbers = #tpu.dot_dimension_numbers<[1], [0], [0], [1], [0, 0, 1, 1], [], []>} : vector<22x160xbf16>, vector<160x256xbf16>, vector<22x256xf32> -> vector<22x256xf32>
    %143 = arith.addf %137, %142 : vector<22x256xf32>
    %c34 = arith.constant 34 : index
    %c0_70 = arith.constant 0 : index
    %144 = vector.load %arg1[%c34, %c0_70] : memref<41x256xf32, #tpu.memory_space<vmem>>, vector<1x256xf32>
    %c35 = arith.constant 35 : index
    %c0_71 = arith.constant 0 : index
    %145 = vector.load %arg1[%c35, %c0_71] : memref<41x256xf32, #tpu.memory_space<vmem>>, vector<1x256xf32>
    %c36 = arith.constant 36 : index
    %c0_72 = arith.constant 0 : index
    %146 = vector.load %arg1[%c36, %c0_72] : memref<41x256xf32, #tpu.memory_space<vmem>>, vector<1x256xf32>
    %147 = vector.broadcast %144 : vector<1x256xf32> to vector<22x256xf32>
    %148 = arith.addf %143, %147 : vector<22x256xf32>
    %cst_73 = arith.constant 0.000000e+00 : f32
    %149 = vector.broadcast %cst_73 : f32 to vector<22x256xf32>
    %150 = arith.cmpf ogt, %148, %149 : vector<22x256xf32>
    %cst_74 = arith.constant 0.000000e+00 : f32
    %151 = vector.broadcast %cst_74 : f32 to vector<22x256xf32>
    %152 = arith.minimumf %148, %151 : vector<22x256xf32>
    %153 = math.exp %152 : vector<22x256xf32>
    %cst_75 = arith.constant 1.000000e+00 : f32
    %154 = vector.broadcast %cst_75 : f32 to vector<22x256xf32>
    %155 = arith.subf %153, %154 : vector<22x256xf32>
    %156 = arith.select %150, %148, %155 : vector<22x256xi1>, vector<22x256xf32>
    %c0_76 = arith.constant 0 : index
    %c2_77 = arith.constant 2 : index
    %157 = vector.load %arg1[%c0_76, %c2_77] : memref<41x256xf32, #tpu.memory_space<vmem>>, vector<22x1xf32>
    %cst_78 = arith.constant 5.000000e-01 : f32
    %158 = vector.broadcast %cst_78 : f32 to vector<22x1xf32>
    %159 = arith.cmpf ogt, %157, %158 : vector<22x1xf32>
    %cst_79 = arith.constant 0.000000e+00 : f32
    %160 = vector.shape_cast %159 : vector<22x1xi1> to vector<22x1xi1>
    %161 = vector.broadcast %160 : vector<22x1xi1> to vector<22x256xi1>
    %162 = vector.broadcast %cst_79 : f32 to vector<22x256xf32>
    %163 = arith.select %161, %156, %162 : vector<22x256xi1>, vector<22x256xf32>
    %cst_80 = arith.constant dense<0.000000e+00> : vector<256xf32>
    %164 = vector.multi_reduction <add>, %163, %cst_80 [0] : vector<22x256xf32> to vector<256xf32>
    %165 = vector.shape_cast %164 : vector<256xf32> to vector<1x256xf32>
    %166 = arith.mulf %163, %163 : vector<22x256xf32>
    %cst_81 = arith.constant dense<0.000000e+00> : vector<256xf32>
    %167 = vector.multi_reduction <add>, %166, %cst_81 [0] : vector<22x256xf32> to vector<256xf32>
    %168 = vector.shape_cast %167 : vector<256xf32> to vector<1x256xf32>
    %169 = tpu.concatenate %165, %168 in 0 : vector<1x256xf32>, vector<1x256xf32> -> vector<2x256xf32>
    %c0_82 = arith.constant 0 : index
    %c0_83 = arith.constant 0 : index
    %170 = vector.load %arg7[%c0_82, %c0_83] : memref<256x256xf32, #tpu.memory_space<vmem>>, vector<256x256xf32>
    %cst_84 = arith.constant dense<0.000000e+00> : vector<2x256xf32>
    %171 = tpu.matmul %169, %170, %cst_84 {dimension_numbers = #tpu.dot_dimension_numbers<[1], [0], [0], [1], [0, 0, 1, 1], [], []>} : vector<2x256xf32>, vector<256x256xf32>, vector<2x256xf32> -> vector<2x256xf32>
    %cst_85 = arith.constant 7.812500e-03 : f32
    %172 = vector.broadcast %cst_85 : f32 to vector<2x256xf32>
    %173 = arith.mulf %171, %172 : vector<2x256xf32>
    %174 = vector.extract_strided_slice %173 {offsets = [0, 0], sizes = [1, 256], strides = [1, 1]} : vector<2x256xf32> to vector<1x256xf32>
    %175 = vector.extract_strided_slice %173 {offsets = [1, 0], sizes = [1, 256], strides = [1, 1]} : vector<2x256xf32> to vector<1x256xf32>
    %176 = arith.mulf %174, %174 : vector<1x256xf32>
    %177 = arith.subf %175, %176 : vector<1x256xf32>
    %cst_86 = arith.constant 0.000000e+00 : f32
    %178 = vector.broadcast %cst_86 : f32 to vector<1x256xf32>
    %179 = arith.maximumf %177, %178 : vector<1x256xf32>
    %cst_87 = arith.constant 9.99999974E-6 : f32
    %180 = vector.broadcast %cst_87 : f32 to vector<1x256xf32>
    %181 = arith.addf %179, %180 : vector<1x256xf32>
    %182 = math.rsqrt %181 : vector<1x256xf32>
    %183 = arith.mulf %145, %182 : vector<1x256xf32>
    %184 = arith.mulf %174, %183 : vector<1x256xf32>
    %185 = arith.subf %146, %184 : vector<1x256xf32>
    %186 = vector.broadcast %183 : vector<1x256xf32> to vector<22x256xf32>
    %187 = arith.mulf %163, %186 : vector<22x256xf32>
    %188 = vector.broadcast %185 : vector<1x256xf32> to vector<22x256xf32>
    %189 = arith.addf %187, %188 : vector<22x256xf32>
    %190 = vector.extract_strided_slice %189 {offsets = [0, 0], sizes = [20, 256], strides = [1, 1]} : vector<22x256xf32> to vector<20x256xf32>
    %191 = arith.truncf %190 : vector<20x256xf32> to vector<20x256xbf16>
    %c0_88 = arith.constant 0 : index
    %c0_89 = arith.constant 0 : index
    %c0_90 = arith.constant 0 : index
    %192 = vector.load %arg8[%c0_88, %c0_89, %c0_90] : memref<3x256x192xbf16, #tpu.memory_space<vmem>>, vector<1x256x192xbf16>
    %193 = vector.shape_cast %192 : vector<1x256x192xbf16> to vector<256x192xbf16>
    %cst_91 = arith.constant dense<0.000000e+00> : vector<20x192xf32>
    %194 = tpu.matmul %191, %193, %cst_91 {dimension_numbers = #tpu.dot_dimension_numbers<[1], [0], [0], [1], [0, 0, 1, 1], [], []>} : vector<20x256xbf16>, vector<256x192xbf16>, vector<20x192xf32> -> vector<20x192xf32>
    %195 = vector.extract_strided_slice %189 {offsets = [1, 0], sizes = [20, 256], strides = [1, 1]} : vector<22x256xf32> to vector<20x256xf32>
    %196 = arith.truncf %195 : vector<20x256xf32> to vector<20x256xbf16>
    %c1_92 = arith.constant 1 : index
    %c0_93 = arith.constant 0 : index
    %c0_94 = arith.constant 0 : index
    %197 = vector.load %arg8[%c1_92, %c0_93, %c0_94] : memref<3x256x192xbf16, #tpu.memory_space<vmem>>, vector<1x256x192xbf16>
    %198 = vector.shape_cast %197 : vector<1x256x192xbf16> to vector<256x192xbf16>
    %cst_95 = arith.constant dense<0.000000e+00> : vector<20x192xf32>
    %199 = tpu.matmul %196, %198, %cst_95 {dimension_numbers = #tpu.dot_dimension_numbers<[1], [0], [0], [1], [0, 0, 1, 1], [], []>} : vector<20x256xbf16>, vector<256x192xbf16>, vector<20x192xf32> -> vector<20x192xf32>
    %200 = arith.addf %194, %199 : vector<20x192xf32>
    %201 = vector.extract_strided_slice %189 {offsets = [2, 0], sizes = [20, 256], strides = [1, 1]} : vector<22x256xf32> to vector<20x256xf32>
    %202 = arith.truncf %201 : vector<20x256xf32> to vector<20x256xbf16>
    %c2_96 = arith.constant 2 : index
    %c0_97 = arith.constant 0 : index
    %c0_98 = arith.constant 0 : index
    %203 = vector.load %arg8[%c2_96, %c0_97, %c0_98] : memref<3x256x192xbf16, #tpu.memory_space<vmem>>, vector<1x256x192xbf16>
    %204 = vector.shape_cast %203 : vector<1x256x192xbf16> to vector<256x192xbf16>
    %cst_99 = arith.constant dense<0.000000e+00> : vector<20x192xf32>
    %205 = tpu.matmul %202, %204, %cst_99 {dimension_numbers = #tpu.dot_dimension_numbers<[1], [0], [0], [1], [0, 0, 1, 1], [], []>} : vector<20x256xbf16>, vector<256x192xbf16>, vector<20x192xf32> -> vector<20x192xf32>
    %206 = arith.addf %200, %205 : vector<20x192xf32>
    %c37 = arith.constant 37 : index
    %c0_100 = arith.constant 0 : index
    %207 = vector.load %arg1[%c37, %c0_100] : memref<41x256xf32, #tpu.memory_space<vmem>>, vector<1x192xf32>
    %c38 = arith.constant 38 : index
    %c0_101 = arith.constant 0 : index
    %208 = vector.load %arg1[%c38, %c0_101] : memref<41x256xf32, #tpu.memory_space<vmem>>, vector<1x192xf32>
    %c39 = arith.constant 39 : index
    %c0_102 = arith.constant 0 : index
    %209 = vector.load %arg1[%c39, %c0_102] : memref<41x256xf32, #tpu.memory_space<vmem>>, vector<1x192xf32>
    %210 = vector.broadcast %207 : vector<1x192xf32> to vector<20x192xf32>
    %211 = arith.addf %206, %210 : vector<20x192xf32>
    %cst_103 = arith.constant 0.000000e+00 : f32
    %212 = vector.broadcast %cst_103 : f32 to vector<20x192xf32>
    %213 = arith.cmpf ogt, %211, %212 : vector<20x192xf32>
    %cst_104 = arith.constant 0.000000e+00 : f32
    %214 = vector.broadcast %cst_104 : f32 to vector<20x192xf32>
    %215 = arith.minimumf %211, %214 : vector<20x192xf32>
    %216 = math.exp %215 : vector<20x192xf32>
    %cst_105 = arith.constant 1.000000e+00 : f32
    %217 = vector.broadcast %cst_105 : f32 to vector<20x192xf32>
    %218 = arith.subf %216, %217 : vector<20x192xf32>
    %219 = arith.select %213, %211, %218 : vector<20x192xi1>, vector<20x192xf32>
    %c0_106 = arith.constant 0 : index
    %c3 = arith.constant 3 : index
    %220 = vector.load %arg1[%c0_106, %c3] : memref<41x256xf32, #tpu.memory_space<vmem>>, vector<20x1xf32>
    %cst_107 = arith.constant 5.000000e-01 : f32
    %221 = vector.broadcast %cst_107 : f32 to vector<20x1xf32>
    %222 = arith.cmpf ogt, %220, %221 : vector<20x1xf32>
    %cst_108 = arith.constant 0.000000e+00 : f32
    %223 = vector.shape_cast %222 : vector<20x1xi1> to vector<20x1xi1>
    %224 = vector.broadcast %223 : vector<20x1xi1> to vector<20x192xi1>
    %225 = vector.broadcast %cst_108 : f32 to vector<20x192xf32>
    %226 = arith.select %224, %219, %225 : vector<20x192xi1>, vector<20x192xf32>
    %cst_109 = arith.constant dense<0.000000e+00> : vector<192xf32>
    %227 = vector.multi_reduction <add>, %226, %cst_109 [0] : vector<20x192xf32> to vector<192xf32>
    %228 = vector.shape_cast %227 : vector<192xf32> to vector<1x192xf32>
    %229 = arith.mulf %226, %226 : vector<20x192xf32>
    %cst_110 = arith.constant dense<0.000000e+00> : vector<192xf32>
    %230 = vector.multi_reduction <add>, %229, %cst_110 [0] : vector<20x192xf32> to vector<192xf32>
    %231 = vector.shape_cast %230 : vector<192xf32> to vector<1x192xf32>
    %232 = tpu.concatenate %228, %231 in 0 : vector<1x192xf32>, vector<1x192xf32> -> vector<2x192xf32>
    %c0_111 = arith.constant 0 : index
    %c0_112 = arith.constant 0 : index
    %233 = vector.load %arg9[%c0_111, %c0_112] : memref<192x192xf32, #tpu.memory_space<vmem>>, vector<192x192xf32>
    %cst_113 = arith.constant dense<0.000000e+00> : vector<2x192xf32>
    %234 = tpu.matmul %232, %233, %cst_113 {dimension_numbers = #tpu.dot_dimension_numbers<[1], [0], [0], [1], [0, 0, 1, 1], [], []>} : vector<2x192xf32>, vector<192x192xf32>, vector<2x192xf32> -> vector<2x192xf32>
    %cst_114 = arith.constant 0.013888889 : f32
    %235 = vector.broadcast %cst_114 : f32 to vector<2x192xf32>
    %236 = arith.mulf %234, %235 : vector<2x192xf32>
    %237 = vector.extract_strided_slice %236 {offsets = [0, 0], sizes = [1, 192], strides = [1, 1]} : vector<2x192xf32> to vector<1x192xf32>
    %238 = vector.extract_strided_slice %236 {offsets = [1, 0], sizes = [1, 192], strides = [1, 1]} : vector<2x192xf32> to vector<1x192xf32>
    %239 = arith.mulf %237, %237 : vector<1x192xf32>
    %240 = arith.subf %238, %239 : vector<1x192xf32>
    %cst_115 = arith.constant 0.000000e+00 : f32
    %241 = vector.broadcast %cst_115 : f32 to vector<1x192xf32>
    %242 = arith.maximumf %240, %241 : vector<1x192xf32>
    %cst_116 = arith.constant 9.99999974E-6 : f32
    %243 = vector.broadcast %cst_116 : f32 to vector<1x192xf32>
    %244 = arith.addf %242, %243 : vector<1x192xf32>
    %245 = math.rsqrt %244 : vector<1x192xf32>
    %246 = arith.mulf %208, %245 : vector<1x192xf32>
    %247 = arith.mulf %237, %246 : vector<1x192xf32>
    %248 = arith.subf %209, %247 : vector<1x192xf32>
    %249 = vector.broadcast %246 : vector<1x192xf32> to vector<20x192xf32>
    %250 = arith.mulf %226, %249 : vector<20x192xf32>
    %251 = vector.broadcast %248 : vector<1x192xf32> to vector<20x192xf32>
    %252 = arith.addf %250, %251 : vector<20x192xf32>
    %253 = vector.extract_strided_slice %252 {offsets = [0, 0], sizes = [1, 192], strides = [1, 1]} : vector<20x192xf32> to vector<1x192xf32>
    %254 = vector.extract_strided_slice %252 {offsets = [14, 0], sizes = [1, 192], strides = [1, 1]} : vector<20x192xf32> to vector<1x192xf32>
    %255 = tpu.concatenate %253, %254 in 0 : vector<1x192xf32>, vector<1x192xf32> -> vector<2x192xf32>
    %256 = arith.truncf %255 : vector<2x192xf32> to vector<2x192xbf16>
    %c0_117 = arith.constant 0 : index
    %c0_118 = arith.constant 0 : index
    %c0_119 = arith.constant 0 : index
    %257 = vector.load %arg10[%c0_117, %c0_118, %c0_119] : memref<6x192x144xbf16, #tpu.memory_space<vmem>>, vector<1x192x144xbf16>
    %258 = vector.shape_cast %257 : vector<1x192x144xbf16> to vector<192x144xbf16>
    %cst_120 = arith.constant dense<0.000000e+00> : vector<2x144xf32>
    %259 = tpu.matmul %256, %258, %cst_120 {dimension_numbers = #tpu.dot_dimension_numbers<[1], [0], [0], [1], [0, 0, 1, 1], [], []>} : vector<2x192xbf16>, vector<192x144xbf16>, vector<2x144xf32> -> vector<2x144xf32>
    %260 = vector.extract_strided_slice %252 {offsets = [1, 0], sizes = [1, 192], strides = [1, 1]} : vector<20x192xf32> to vector<1x192xf32>
    %261 = vector.extract_strided_slice %252 {offsets = [15, 0], sizes = [1, 192], strides = [1, 1]} : vector<20x192xf32> to vector<1x192xf32>
    %262 = tpu.concatenate %260, %261 in 0 : vector<1x192xf32>, vector<1x192xf32> -> vector<2x192xf32>
    %263 = arith.truncf %262 : vector<2x192xf32> to vector<2x192xbf16>
    %c1_121 = arith.constant 1 : index
    %c0_122 = arith.constant 0 : index
    %c0_123 = arith.constant 0 : index
    %264 = vector.load %arg10[%c1_121, %c0_122, %c0_123] : memref<6x192x144xbf16, #tpu.memory_space<vmem>>, vector<1x192x144xbf16>
    %265 = vector.shape_cast %264 : vector<1x192x144xbf16> to vector<192x144xbf16>
    %cst_124 = arith.constant dense<0.000000e+00> : vector<2x144xf32>
    %266 = tpu.matmul %263, %265, %cst_124 {dimension_numbers = #tpu.dot_dimension_numbers<[1], [0], [0], [1], [0, 0, 1, 1], [], []>} : vector<2x192xbf16>, vector<192x144xbf16>, vector<2x144xf32> -> vector<2x144xf32>
    %267 = arith.addf %259, %266 : vector<2x144xf32>
    %268 = vector.extract_strided_slice %252 {offsets = [2, 0], sizes = [1, 192], strides = [1, 1]} : vector<20x192xf32> to vector<1x192xf32>
    %269 = vector.extract_strided_slice %252 {offsets = [16, 0], sizes = [1, 192], strides = [1, 1]} : vector<20x192xf32> to vector<1x192xf32>
    %270 = tpu.concatenate %268, %269 in 0 : vector<1x192xf32>, vector<1x192xf32> -> vector<2x192xf32>
    %271 = arith.truncf %270 : vector<2x192xf32> to vector<2x192xbf16>
    %c2_125 = arith.constant 2 : index
    %c0_126 = arith.constant 0 : index
    %c0_127 = arith.constant 0 : index
    %272 = vector.load %arg10[%c2_125, %c0_126, %c0_127] : memref<6x192x144xbf16, #tpu.memory_space<vmem>>, vector<1x192x144xbf16>
    %273 = vector.shape_cast %272 : vector<1x192x144xbf16> to vector<192x144xbf16>
    %cst_128 = arith.constant dense<0.000000e+00> : vector<2x144xf32>
    %274 = tpu.matmul %271, %273, %cst_128 {dimension_numbers = #tpu.dot_dimension_numbers<[1], [0], [0], [1], [0, 0, 1, 1], [], []>} : vector<2x192xbf16>, vector<192x144xbf16>, vector<2x144xf32> -> vector<2x144xf32>
    %275 = arith.addf %267, %274 : vector<2x144xf32>
    %276 = vector.extract_strided_slice %252 {offsets = [3, 0], sizes = [1, 192], strides = [1, 1]} : vector<20x192xf32> to vector<1x192xf32>
    %277 = vector.extract_strided_slice %252 {offsets = [17, 0], sizes = [1, 192], strides = [1, 1]} : vector<20x192xf32> to vector<1x192xf32>
    %278 = tpu.concatenate %276, %277 in 0 : vector<1x192xf32>, vector<1x192xf32> -> vector<2x192xf32>
    %279 = arith.truncf %278 : vector<2x192xf32> to vector<2x192xbf16>
    %c3_129 = arith.constant 3 : index
    %c0_130 = arith.constant 0 : index
    %c0_131 = arith.constant 0 : index
    %280 = vector.load %arg10[%c3_129, %c0_130, %c0_131] : memref<6x192x144xbf16, #tpu.memory_space<vmem>>, vector<1x192x144xbf16>
    %281 = vector.shape_cast %280 : vector<1x192x144xbf16> to vector<192x144xbf16>
    %cst_132 = arith.constant dense<0.000000e+00> : vector<2x144xf32>
    %282 = tpu.matmul %279, %281, %cst_132 {dimension_numbers = #tpu.dot_dimension_numbers<[1], [0], [0], [1], [0, 0, 1, 1], [], []>} : vector<2x192xbf16>, vector<192x144xbf16>, vector<2x144xf32> -> vector<2x144xf32>
    %283 = arith.addf %275, %282 : vector<2x144xf32>
    %284 = vector.extract_strided_slice %252 {offsets = [4, 0], sizes = [1, 192], strides = [1, 1]} : vector<20x192xf32> to vector<1x192xf32>
    %285 = vector.extract_strided_slice %252 {offsets = [18, 0], sizes = [1, 192], strides = [1, 1]} : vector<20x192xf32> to vector<1x192xf32>
    %286 = tpu.concatenate %284, %285 in 0 : vector<1x192xf32>, vector<1x192xf32> -> vector<2x192xf32>
    %287 = arith.truncf %286 : vector<2x192xf32> to vector<2x192xbf16>
    %c4 = arith.constant 4 : index
    %c0_133 = arith.constant 0 : index
    %c0_134 = arith.constant 0 : index
    %288 = vector.load %arg10[%c4, %c0_133, %c0_134] : memref<6x192x144xbf16, #tpu.memory_space<vmem>>, vector<1x192x144xbf16>
    %289 = vector.shape_cast %288 : vector<1x192x144xbf16> to vector<192x144xbf16>
    %cst_135 = arith.constant dense<0.000000e+00> : vector<2x144xf32>
    %290 = tpu.matmul %287, %289, %cst_135 {dimension_numbers = #tpu.dot_dimension_numbers<[1], [0], [0], [1], [0, 0, 1, 1], [], []>} : vector<2x192xbf16>, vector<192x144xbf16>, vector<2x144xf32> -> vector<2x144xf32>
    %291 = arith.addf %283, %290 : vector<2x144xf32>
    %292 = vector.extract_strided_slice %252 {offsets = [5, 0], sizes = [1, 192], strides = [1, 1]} : vector<20x192xf32> to vector<1x192xf32>
    %293 = vector.extract_strided_slice %252 {offsets = [19, 0], sizes = [1, 192], strides = [1, 1]} : vector<20x192xf32> to vector<1x192xf32>
    %294 = tpu.concatenate %292, %293 in 0 : vector<1x192xf32>, vector<1x192xf32> -> vector<2x192xf32>
    %295 = arith.truncf %294 : vector<2x192xf32> to vector<2x192xbf16>
    %c5 = arith.constant 5 : index
    %c0_136 = arith.constant 0 : index
    %c0_137 = arith.constant 0 : index
    %296 = vector.load %arg10[%c5, %c0_136, %c0_137] : memref<6x192x144xbf16, #tpu.memory_space<vmem>>, vector<1x192x144xbf16>
    %297 = vector.shape_cast %296 : vector<1x192x144xbf16> to vector<192x144xbf16>
    %cst_138 = arith.constant dense<0.000000e+00> : vector<2x144xf32>
    %298 = tpu.matmul %295, %297, %cst_138 {dimension_numbers = #tpu.dot_dimension_numbers<[1], [0], [0], [1], [0, 0, 1, 1], [], []>} : vector<2x192xbf16>, vector<192x144xbf16>, vector<2x144xf32> -> vector<2x144xf32>
    %299 = arith.addf %291, %298 : vector<2x144xf32>
    %c40 = arith.constant 40 : index
    %c0_139 = arith.constant 0 : index
    %300 = vector.load %arg1[%c40, %c0_139] : memref<41x256xf32, #tpu.memory_space<vmem>>, vector<1x144xf32>
    %301 = vector.broadcast %300 : vector<1x144xf32> to vector<2x144xf32>
    %302 = arith.addf %299, %301 : vector<2x144xf32>
    %c0_140 = arith.constant 0 : index
    %c0_141 = arith.constant 0 : index
    %303 = vector.load %arg11[%c0_140, %c0_141] : memref<2x144xf32, #tpu.memory_space<vmem>>, vector<2x144xf32>
    tpu.vector_store %arg11[%c0_140, %c0_141], %302 {strides = array<i32>} : memref<2x144xf32, #tpu.memory_space<vmem>>, vector<2x144xf32>,
    return
  }
}

</mosaic_0001>

<llo_original>
// kernel: l1_mlp_embed_forward.1
$region0: #{l1_mlp_embed_forward.1}
  #allocation0 [shape = 'u32[]', space=smem, size = 0x4, offset = 0x4, fixed_abs, tag = 'smem constant byte address 0x4 - core index']
  #allocation1 [shape = 'u32[72,128]{1,0:T(1,128)}', space=vmem, size = 0x9000, scoped, tag = 'internal scratch']
  %s0 = inlined_call_operand.vmem [shape: f32[28,56], index: 0, kind: input, shape index: {}]
  %s1 = inlined_call_operand.vmem [shape: f32[41,256], index: 1, kind: input, shape index: {}]
  %s2 = inlined_call_operand.vmem [shape: bf16[3,56,192], index: 2, kind: input, shape index: {}]
  %s3 = inlined_call_operand.vmem [shape: f32[192,192], index: 3, kind: input, shape index: {}]
  %s4 = inlined_call_operand.vmem [shape: bf16[3,192,160], index: 4, kind: input, shape index: {}]
  %s5 = inlined_call_operand.vmem [shape: f32[160,160], index: 5, kind: input, shape index: {}]
  %s6 = inlined_call_operand.vmem [shape: bf16[3,160,256], index: 6, kind: input, shape index: {}]
  %s7 = inlined_call_operand.vmem [shape: f32[256,256], index: 7, kind: input, shape index: {}]
  %s8 = inlined_call_operand.vmem [shape: bf16[3,256,192], index: 8, kind: input, shape index: {}]
  %s9 = inlined_call_operand.vmem [shape: f32[192,192], index: 9, kind: input, shape index: {}]
  %s10 = inlined_call_operand.vmem [shape: bf16[6,192,144], index: 10, kind: input, shape index: {}]
  %s11 = inlined_call_operand.vmem [shape: f32[2,144], index: 11, kind: output, shape index: {}]
  %s12 = sld [smem:[#allocation0]]
  $region54: #{l1_mlp_embed_forward.1} parent=0
    _
  %s14 = ssub.s32 1, %s12
  %s15 = scalar_select 0, %s14, %s12
  // Predicated region
  $region2: #{l1_mlp_embed_forward.1} parent=0 // pred_check
    _
  $region3: #{l1_mlp_embed_forward.1} parent=0 // pred_check_branch
    %17 = sbr.rel (0) target = $region5
  $region4: #{l1_mlp_embed_forward.1} parent=0 // pred_region
    _
  $region5: #{l1_mlp_embed_forward.1} parent=0 // pred_fallthru
    _
  // Predicated region
  $region6: #{l1_mlp_embed_forward.1} parent=0 // pred_check
    _
  $region7: #{l1_mlp_embed_forward.1} parent=0 // pred_check_branch
    %19 = sbr.rel (0) target = $region9
  $region8: #{l1_mlp_embed_forward.1} parent=0 // pred_region
    _
  $region9: #{l1_mlp_embed_forward.1} parent=0 // pred_fallthru
    _
  // Predicated region
  $region10: #{l1_mlp_embed_forward.1} parent=0 // pred_check
    _
  $region11: #{l1_mlp_embed_forward.1} parent=0 // pred_check_branch
    %21 = sbr.rel (0) target = $region13
  $region12: #{l1_mlp_embed_forward.1} parent=0 // pred_region
    _
  $region13: #{l1_mlp_embed_forward.1} parent=0 // pred_fallthru
    _
  // Predicated region
  $region14: #{l1_mlp_embed_forward.1} parent=0 // pred_check
    _
  $region15: #{l1_mlp_embed_forward.1} parent=0 // pred_check_branch
    %23 = sbr.rel (0) target = $region17
  $region16: #{l1_mlp_embed_forward.1} parent=0 // pred_region
    _
  $region17: #{l1_mlp_embed_forward.1} parent=0 // pred_fallthru
    _
  // Predicated region
  $region18: #{l1_mlp_embed_forward.1} parent=0 // pred_check
    _
  $region19: #{l1_mlp_embed_forward.1} parent=0 // pred_check_branch
    %25 = sbr.rel (0) target = $region21
  $region20: #{l1_mlp_embed_forward.1} parent=0 // pred_region
    _
  $region21: #{l1_mlp_embed_forward.1} parent=0 // pred_fallthru
    _
  // Predicated region
  $region22: #{l1_mlp_embed_forward.1} parent=0 // pred_check
    _
  $region23: #{l1_mlp_embed_forward.1} parent=0 // pred_check_branch
    %27 = sbr.rel (0) target = $region25
  $region24: #{l1_mlp_embed_forward.1} parent=0 // pred_region
    _
  $region25: #{l1_mlp_embed_forward.1} parent=0 // pred_fallthru
    _
  // Predicated region
  $region26: #{l1_mlp_embed_forward.1} parent=0 // pred_check
    _
  $region27: #{l1_mlp_embed_forward.1} parent=0 // pred_check_branch
    %29 = sbr.rel (0) target = $region29
  $region28: #{l1_mlp_embed_forward.1} parent=0 // pred_region
    _
  $region29: #{l1_mlp_embed_forward.1} parent=0 // pred_fallthru
    _
  // Predicated region
  $region30: #{l1_mlp_embed_forward.1} parent=0 // pred_check
    _
  $region31: #{l1_mlp_embed_forward.1} parent=0 // pred_check_branch
    %31 = sbr.rel (0) target = $region33
  $region32: #{l1_mlp_embed_forward.1} parent=0 // pred_region
    _
  $region33: #{l1_mlp_embed_forward.1} parent=0 // pred_fallthru
    _
  // Predicated region
  $region34: #{l1_mlp_embed_forward.1} parent=0 // pred_check
    _
  $region35: #{l1_mlp_embed_forward.1} parent=0 // pred_check_branch
    %33 = sbr.rel (0) target = $region37
  $region36: #{l1_mlp_embed_forward.1} parent=0 // pred_region
    _
  $region37: #{l1_mlp_embed_forward.1} parent=0 // pred_fallthru
    _
  // Predicated region
  $region38: #{l1_mlp_embed_forward.1} parent=0 // pred_check
    _
  $region39: #{l1_mlp_embed_forward.1} parent=0 // pred_check_branch
    %35 = sbr.rel (0) target = $region41
  $region40: #{l1_mlp_embed_forward.1} parent=0 // pred_region
    _
  $region41: #{l1_mlp_embed_forward.1} parent=0 // pred_fallthru
    _
  // Predicated region
  $region42: #{l1_mlp_embed_forward.1} parent=0 // pred_check
    _
  $region43: #{l1_mlp_embed_forward.1} parent=0 // pred_check_branch
    %37 = sbr.rel (0) target = $region45
  $region44: #{l1_mlp_embed_forward.1} parent=0 // pred_region
    _
  $region45: #{l1_mlp_embed_forward.1} parent=0 // pred_fallthru
    _
  %v39 = vld [vmem:[%s0] sm:$0xff]
  %v40 = vld [vmem:[%s0 + $0x8] sm:$0xff]
  %v41 = vld [vmem:[%s0 + $0x10] sm:$0xff]
  %v42 = vld [vmem:[%s0 + $0x18] sm:$0xf]
  %v43 = vpack.c.bf16 %v40, %v39
  %v44 = vpack.c.bf16 %v42, %v41
  %v45 = vld [vmem:[%s2] sm:$0xff]
  %v46 = vld [vmem:[%s2 + $0x8] sm:$0xff]
  %v47 = vld [vmem:[%s2 + $0x10] sm:$0xff]
  %v48 = vld [vmem:[%s2 + $0x18] sm:$0xff]
  %v49 = vld [vmem:[%s2 + $0x20] sm:$0xff]
  %v50 = vld [vmem:[%s2 + $0x28] sm:$0xff]
  %v51 = vld [vmem:[%s2 + $0x30] sm:$0xff]
  %s52 = scalar_lea.vmem %s2, 56
  %v53 = vld [vmem:[%s52] sm:$0xff]
  %v54 = vld [vmem:[%s52 + $0x8] sm:$0xff]
  %v55 = vld [vmem:[%s52 + $0x10] sm:$0xff]
  %v56 = vld [vmem:[%s52 + $0x18] sm:$0xff]
  %v57 = vld [vmem:[%s52 + $0x20] sm:$0xff]
  %v58 = vld [vmem:[%s52 + $0x28] sm:$0xff]
  %v59 = vld [vmem:[%s52 + $0x30] sm:$0xff]
  %vm60 = vsmask.f32 7424
  %v62 = vshrl.u32 %v43, 16
  %v64 = vshll.u32 %v43, 16
  %v66 = vrot.slane %v64, 1
  %v67 = vor.u32 %v62, %v66
  %v69 = vshll.u32 %v44, 16
  %v71 = vrot.slane %v69, 1
  %v72 = vsel %vm60, %v67, %v71
  %v73 = vshrl.u32 %v44, 16
  %v75 = vor.u32 %v73, %v71
  %v83 = vunpack.c.l.b16 %v53
  %v84 = vunpack.c.h.b16 %v53
  %v85 = vunpack.c.l.b16 %v54
  %v86 = vunpack.c.h.b16 %v54
  %v87 = vunpack.c.l.b16 %v55
  %v88 = vunpack.c.h.b16 %v55
  %v89 = vunpack.c.l.b16 %v56
  %v90 = vunpack.c.h.b16 %v56
  %v91 = vunpack.c.l.b16 %v57
  %v92 = vunpack.c.h.b16 %v57
  %v93 = vunpack.c.l.b16 %v58
  %v94 = vunpack.c.h.b16 %v58
  %v95 = vunpack.c.l.b16 %v59
  %v96 = vunpack.c.h.b16 %v59
  %v97 = vpack.c.b16 %v85, %v83
  %v98 = vpack.c.b16 %v86, %v84
  %v99 = vpack.c.b16 %v89, %v87
  %v100 = vpack.c.b16 %v90, %v88
  %v101 = vpack.c.b16 %v93, %v91
  %v102 = vpack.c.b16 %v94, %v92
  %v103 = vpack.c.b16 %v95, %v95
  %v104 = vpack.c.b16 %v96, %v96
  %vm111 = vcmask 457728
  %v113 = vsel %vm111, %v72, 0
  %v116 = vsel %vm111, %v75, 0
  %vm118 = vcmask 1043456
  %v120 = vsel %vm118, %v103, 0
  %v123 = vsel %vm118, %v104, 0
  %125 = vmatpush.bf16.msra.mxu0 0
  %126 = vmatpush.bf16.msra.mxu0 0
  %127 = vmatpush.bf16.msra.mxu0 0
  %128 = vmatpush.bf16.msra.mxu0 0
  %129 = vmatpush.bf16.msra.mxu0 %v120
  %130 = vmatpush.bf16.msra.mxu0 %v101
  %131 = vmatpush.bf16.msra.mxu0 %v99
  %132 = vmatpush.bf16.msra.mxu0 %v97
  %133 = vmatmul.bf16.gmra.mxu0 %v113
  %v134 = vpop.f32.mrf.mxu0
  %v135 = vadd.f32 0.0, %v134
  %v136 = vpop.f32.mrf.mxu0
  %v137 = vadd.f32 0.0, %v136
  %138 = vmatmul.bf16.gmra.mxu0 %v116
  %v139 = vpop.f32.mrf.mxu0
  %v140 = vadd.f32 0.0, %v139
  %v141 = vpop.f32.mrf.mxu0
  %v142 = vadd.f32 0.0, %v141
  %143 = vdwg.mxu0
  %144 = vmatpush.bf16.msra.mxu0 0
  %145 = vmatpush.bf16.msra.mxu0 0
  %146 = vmatpush.bf16.msra.mxu0 0
  %147 = vmatpush.bf16.msra.mxu0 0
  %148 = vmatpush.bf16.msra.mxu0 %v123
  %149 = vmatpush.bf16.msra.mxu0 %v102
  %150 = vmatpush.bf16.msra.mxu0 %v100
  %151 = vmatpush.bf16.msra.mxu0 %v98
  %152 = vmatmul.bf16.gmra.mxu0 %v113
  %v153 = vpop.f32.mrf.mxu0
  %v154 = vadd.f32 0.0, %v153
  %v155 = vpop.f32.mrf.mxu0
  %v156 = vadd.f32 0.0, %v155
  %157 = vmatmul.bf16.gmra.mxu0 %v116
  %v158 = vpop.f32.mrf.mxu0
  %v159 = vadd.f32 0.0, %v158
  %v160 = vpop.f32.mrf.mxu0
  %v161 = vadd.f32 0.0, %v160
  %162 = vdwg.mxu0
  %v170 = vunpack.c.l.b16 %v45
  %v171 = vunpack.c.h.b16 %v45
  %v172 = vunpack.c.l.b16 %v46
  %v173 = vunpack.c.h.b16 %v46
  %v174 = vunpack.c.l.b16 %v47
  %v175 = vunpack.c.h.b16 %v47
  %v176 = vunpack.c.l.b16 %v48
  %v177 = vunpack.c.h.b16 %v48
  %v178 = vunpack.c.l.b16 %v49
  %v179 = vunpack.c.h.b16 %v49
  %v180 = vunpack.c.l.b16 %v50
  %v181 = vunpack.c.h.b16 %v50
  %v182 = vunpack.c.l.b16 %v51
  %v183 = vunpack.c.h.b16 %v51
  %v184 = vpack.c.b16 %v172, %v170
  %v185 = vpack.c.b16 %v173, %v171
  %v186 = vpack.c.b16 %v176, %v174
  %v187 = vpack.c.b16 %v177, %v175
  %v188 = vpack.c.b16 %v180, %v178
  %v189 = vpack.c.b16 %v181, %v179
  %v190 = vpack.c.b16 %v182, %v182
  %v191 = vpack.c.b16 %v183, %v183
  %v198 = vsel %vm111, %v43, 0
  %v200 = vsel %vm111, %v44, 0
  %v203 = vsel %vm118, %v190, 0
  %v206 = vsel %vm118, %v191, 0
  %208 = vmatpush.bf16.msra.mxu0 0
  %209 = vmatpush.bf16.msra.mxu0 0
  %210 = vmatpush.bf16.msra.mxu0 0
  %211 = vmatpush.bf16.msra.mxu0 0
  %212 = vmatpush.bf16.msra.mxu0 %v203
  %213 = vmatpush.bf16.msra.mxu0 %v188
  %214 = vmatpush.bf16.msra.mxu0 %v186
  %215 = vmatpush.bf16.msra.mxu0 %v184
  %216 = vmatmul.bf16.gmra.mxu0 %v198
  %v217 = vpop.f32.mrf.mxu0
  %v218 = vadd.f32 %v135, %v217
  %v219 = vpop.f32.mrf.mxu0
  %v220 = vadd.f32 %v137, %v219
  %221 = vmatmul.bf16.gmra.mxu0 %v200
  %v222 = vpop.f32.mrf.mxu0
  %v223 = vadd.f32 %v140, %v222
  %v224 = vpop.f32.mrf.mxu0
  %v225 = vadd.f32 %v142, %v224
  %226 = vdwg.mxu0
  %227 = vmatpush.bf16.msra.mxu0 0
  %228 = vmatpush.bf16.msra.mxu0 0
  %229 = vmatpush.bf16.msra.mxu0 0
  %230 = vmatpush.bf16.msra.mxu0 0
  %231 = vmatpush.bf16.msra.mxu0 %v206
  %232 = vmatpush.bf16.msra.mxu0 %v189
  %233 = vmatpush.bf16.msra.mxu0 %v187
  %234 = vmatpush.bf16.msra.mxu0 %v185
  %235 = vmatmul.bf16.gmra.mxu0 %v198
  %v236 = vpop.f32.mrf.mxu0
  %v237 = vadd.f32 %v154, %v236
  %v238 = vpop.f32.mrf.mxu0
  %v239 = vadd.f32 %v156, %v238
  %240 = vmatmul.bf16.gmra.mxu0 %v200
  %v241 = vpop.f32.mrf.mxu0
  %v242 = vadd.f32 %v159, %v241
  %v243 = vpop.f32.mrf.mxu0
  %v244 = vadd.f32 %v161, %v243
  %245 = vdwg.mxu0
  %s246 = scalar_lea.vmem %s2, 112
  %v247 = vld [vmem:[%s246] sm:$0xff]
  %v248 = vld [vmem:[%s246 + $0x8] sm:$0xff]
  %v249 = vld [vmem:[%s246 + $0x10] sm:$0xff]
  %v250 = vld [vmem:[%s246 + $0x18] sm:$0xff]
  %v251 = vld [vmem:[%s246 + $0x20] sm:$0xff]
  %v252 = vld [vmem:[%s246 + $0x28] sm:$0xff]
  %v253 = vld [vmem:[%s246 + $0x30] sm:$0xff]
  %vm256 = vcmask 1046528
  %v257 = vrot.slane %v43, 1
  %v258 = vrot.slane %v44, 1
  %v259 = vsel %vm256, %v257, %v258
  %v267 = vunpack.c.l.b16 %v247
  %v268 = vunpack.c.h.b16 %v247
  %v269 = vunpack.c.l.b16 %v248
  %v270 = vunpack.c.h.b16 %v248
  %v271 = vunpack.c.l.b16 %v249
  %v272 = vunpack.c.h.b16 %v249
  %v273 = vunpack.c.l.b16 %v250
  %v274 = vunpack.c.h.b16 %v250
  %v275 = vunpack.c.l.b16 %v251
  %v276 = vunpack.c.h.b16 %v251
  %v277 = vunpack.c.l.b16 %v252
  %v278 = vunpack.c.h.b16 %v252
  %v279 = vunpack.c.l.b16 %v253
  %v280 = vunpack.c.h.b16 %v253
  %v281 = vpack.c.b16 %v269, %v267
  %v282 = vpack.c.b16 %v270, %v268
  %v283 = vpack.c.b16 %v273, %v271
  %v284 = vpack.c.b16 %v274, %v272
  %v285 = vpack.c.b16 %v277, %v275
  %v286 = vpack.c.b16 %v278, %v276
  %v287 = vpack.c.b16 %v279, %v279
  %v288 = vpack.c.b16 %v280, %v280
  %v296 = vsel %vm111, %v259, 0
  %v299 = vsel %vm111, %v258, 0
  %v302 = vsel %vm118, %v287, 0
  %v305 = vsel %vm118, %v288, 0
  %307 = vmatpush.bf16.msra.mxu0 0
  %308 = vmatpush.bf16.msra.mxu0 0
  %309 = vmatpush.bf16.msra.mxu0 0
  %310 = vmatpush.bf16.msra.mxu0 0
  %311 = vmatpush.bf16.msra.mxu0 %v302
  %312 = vmatpush.bf16.msra.mxu0 %v285
  %313 = vmatpush.bf16.msra.mxu0 %v283
  %314 = vmatpush.bf16.msra.mxu0 %v281
  %315 = vmatmul.bf16.gmra.mxu0 %v296
  %v316 = vpop.f32.mrf.mxu0
  %v317 = vadd.f32 0.0, %v316
  %v318 = vpop.f32.mrf.mxu0
  %v319 = vadd.f32 0.0, %v318
  %320 = vmatmul.bf16.gmra.mxu0 %v299
  %v321 = vpop.f32.mrf.mxu0
  %v322 = vadd.f32 0.0, %v321
  %v323 = vpop.f32.mrf.mxu0
  %v324 = vadd.f32 0.0, %v323
  %325 = vdwg.mxu0
  %326 = vmatpush.bf16.msra.mxu0 0
  %327 = vmatpush.bf16.msra.mxu0 0
  %328 = vmatpush.bf16.msra.mxu0 0
  %329 = vmatpush.bf16.msra.mxu0 0
  %330 = vmatpush.bf16.msra.mxu0 %v305
  %331 = vmatpush.bf16.msra.mxu0 %v286
  %332 = vmatpush.bf16.msra.mxu0 %v284
  %333 = vmatpush.bf16.msra.mxu0 %v282
  %334 = vmatmul.bf16.gmra.mxu0 %v296
  %v335 = vpop.f32.mrf.mxu0
  %v336 = vadd.f32 0.0, %v335
  %v337 = vpop.f32.mrf.mxu0
  %v338 = vadd.f32 0.0, %v337
  %339 = vmatmul.bf16.gmra.mxu0 %v299
  %v340 = vpop.f32.mrf.mxu0
  %v341 = vadd.f32 0.0, %v340
  %v342 = vpop.f32.mrf.mxu0
  %v343 = vadd.f32 0.0, %v342
  %344 = vdwg.mxu0
  %v345 = vadd.f32 %v218, %v317
  %v346 = vadd.f32 %v237, %v336
  %v347 = vadd.f32 %v220, %v319
  %v348 = vadd.f32 %v239, %v338
  %v349 = vadd.f32 %v223, %v322
  %v350 = vadd.f32 %v242, %v341
  %v351 = vadd.f32 %v225, %v324
  %v352 = vadd.f32 %v244, %v343
  %s353 = scalar_lea.vmem %s1, 52
  %v354 = vld [vmem:[%s353] ss:$8 sm:$0x3]
  %s355 = scalar_lea.vmem %s1, 53
  %v356 = vld [vmem:[%s355] ss:$8 sm:$0x3]
  %s357 = scalar_lea.vmem %s1, 54
  %v358 = vld [vmem:[%s357] ss:$8 sm:$0x3]
  %v360 = vperm.slane %v354, 0
  %v361 = vperm.slane %v354, 1
  %v364 = vadd.f32 %v345, %v360
  %v365 = vadd.f32 %v346, %v361
  %v366 = vadd.f32 %v347, %v360
  %v367 = vadd.f32 %v348, %v361
  %v368 = vadd.f32 %v349, %v360
  %v369 = vadd.f32 %v350, %v361
  %v370 = vadd.f32 %v351, %v360
  %v371 = vadd.f32 %v352, %v361
  %vm372 = vcmp.gt.f32.partialorder %v364, 0.0
  %vm373 = vcmp.gt.f32.partialorder %v365, 0.0
  %vm374 = vcmp.gt.f32.partialorder %v366, 0.0
  %vm375 = vcmp.gt.f32.partialorder %v367, 0.0
  %vm376 = vcmp.gt.f32.partialorder %v368, 0.0
  %vm377 = vcmp.gt.f32.partialorder %v369, 0.0
  %vm378 = vcmp.gt.f32.partialorder %v370, 0.0
  %vm379 = vcmp.gt.f32.partialorder %v371, 0.0
  %v380 = vmin.f32 %v364, 0.0
  %v381 = vmin.f32 %v365, 0.0
  %v382 = vmin.f32 %v366, 0.0
  %v383 = vmin.f32 %v367, 0.0
  %v384 = vmin.f32 %v368, 0.0
  %v385 = vmin.f32 %v369, 0.0
  %v386 = vmin.f32 %v370, 0.0
  %v387 = vmin.f32 %v371, 0.0
  %v388 = vmul.f32 %v380, 1.442695
  %v389 = vpow.pop %v388
  %v390 = vmul.f32 %v381, 1.442695
  %v391 = vpow.pop %v390
  %v392 = vmul.f32 %v382, 1.442695
  %v393 = vpow.pop %v392
  %v394 = vmul.f32 %v383, 1.442695
  %v395 = vpow.pop %v394
  %v396 = vmul.f32 %v384, 1.442695
  %v397 = vpow.pop %v396
  %v398 = vmul.f32 %v385, 1.442695
  %v399 = vpow.pop %v398
  %v400 = vmul.f32 %v386, 1.442695
  %v401 = vpow.pop %v400
  %v402 = vmul.f32 %v387, 1.442695
  %v403 = vpow.pop %v402
  %v404 = vsub.f32 %v389, 1.0
  %v405 = vsub.f32 %v391, 1.0
  %v406 = vsub.f32 %v393, 1.0
  %v407 = vsub.f32 %v395, 1.0
  %v408 = vsub.f32 %v397, 1.0
  %v409 = vsub.f32 %v399, 1.0
  %v410 = vsub.f32 %v401, 1.0
  %v411 = vsub.f32 %v403, 1.0
  %v412 = vsel %vm372, %v364, %v404
  %v413 = vsel %vm373, %v365, %v405
  %v414 = vsel %vm374, %v366, %v406
  %v415 = vsel %vm375, %v367, %v407
  %v416 = vsel %vm376, %v368, %v408
  %v417 = vsel %vm377, %v369, %v409
  %v418 = vsel %vm378, %v370, %v410
  %v419 = vsel %vm379, %v371, %v411
  %v420 = vld [vmem:[%s1] sm:$0xff]
  %v421 = vld [vmem:[%s1 + $0x10] sm:$0xff]
  %v422 = vld [vmem:[%s1 + $0x20] sm:$0xff]
  %v423 = vld [vmem:[%s1 + $0x30] sm:$0x3]
  %vm424 = vcmp.gt.f32.partialorder %v420, 0.5
  %vm425 = vcmp.gt.f32.partialorder %v421, 0.5
  %vm426 = vcmp.gt.f32.partialorder %v422, 0.5
  %vm427 = vcmp.gt.f32.partialorder %v423, 0.5
  %v428 = vsel %vm424, 1, 0
  %v429 = vsel %vm425, 1, 0
  %v430 = vsel %vm426, 1, 0
  %v431 = vsel %vm427, 1, 0
  %432 = vset.pattern.permute.xlu0 0
  %433 = vperm.xlu0 %432, %v428
  %v434 = vpop.permute.xlu0 %433
  %435 = vset.pattern.permute.xlu0 0
  %436 = vperm.xlu0 %435, %v429
  %v437 = vpop.permute.xlu0 %436
  %438 = vset.pattern.permute.xlu0 0
  %439 = vperm.xlu0 %438, %v430
  %v440 = vpop.permute.xlu0 %439
  %441 = vset.pattern.permute.xlu0 0
  %442 = vperm.xlu0 %441, %v431
  %v443 = vpop.permute.xlu0 %442
  %vm444 = vcmp.eq.s32.totalorder %v434, 1
  %vm445 = vcmp.eq.s32.totalorder %v437, 1
  %vm446 = vcmp.eq.s32.totalorder %v440, 1
  %vm447 = vcmp.eq.s32.totalorder %v443, 1
  %v448 = vsel %vm444, %v412, 0.0
  %v449 = vsel %vm444, %v413, 0.0
  %v450 = vsel %vm445, %v414, 0.0
  %v451 = vsel %vm445, %v415, 0.0
  %v452 = vsel %vm446, %v416, 0.0
  %v453 = vsel %vm446, %v417, 0.0
  %v454 = vsel %vm447, %v418, 0.0
  %v455 = vsel %vm447, %v419, 0.0
  %v456 = vadd.f32 %v448, %v450
  %v457 = vadd.f32 %v456, %v452
  %vm458 = vcmask 1041408
  %v459 = vsel %vm458, %v454, 0.0
  %v460 = vadd.f32 %v457, %v459
  %v461 = vrot.slane %v460, 4
  %v462 = vadd.f32 %v460, %v461
  %v463 = vrot.slane %v462, 2
  %v464 = vadd.f32 %v462, %v463
  %v465 = vrot.slane %v464, 1
  %v466 = vadd.f32 %v464, %v465
  %vm467 = vcmask 523264
  %v468 = vsel %vm467, %v449, 0.0
  %v469 = vsel %vm467, %v451, 0.0
  %v470 = vadd.f32 %v468, %v469
  %v471 = vsel %vm467, %v453, 0.0
  %v472 = vadd.f32 %v470, %v471
  %vm473 = vcmask 517120
  %v474 = vsel %vm473, %v455, 0.0
  %v475 = vadd.f32 %v472, %v474
  %v476 = vrot.slane %v475, 4
  %v477 = vadd.f32 %v475, %v476
  %v478 = vrot.slane %v477, 2
  %v479 = vadd.f32 %v477, %v478
  %v480 = vrot.slane %v479, 1
  %v481 = vadd.f32 %v479, %v480
  %v482 = vmul.f32 %v448, %v448
  %v483 = vmul.f32 %v449, %v449
  %v484 = vmul.f32 %v450, %v450
  %v485 = vmul.f32 %v451, %v451
  %v486 = vmul.f32 %v452, %v452
  %v487 = vmul.f32 %v453, %v453
  %v488 = vmul.f32 %v454, %v454
  %v489 = vmul.f32 %v455, %v455
  %v490 = vadd.f32 %v482, %v484
  %v491 = vadd.f32 %v490, %v486
  %v492 = vsel %vm458, %v488, 0.0
  %v493 = vadd.f32 %v491, %v492
  %v494 = vrot.slane %v493, 4
  %v495 = vadd.f32 %v493, %v494
  %v496 = vrot.slane %v495, 2
  %v497 = vadd.f32 %v495, %v496
  %v498 = vrot.slane %v497, 1
  %v499 = vadd.f32 %v497, %v498
  %v500 = vsel %vm467, %v483, 0.0
  %v501 = vsel %vm467, %v485, 0.0
  %v502 = vadd.f32 %v500, %v501
  %v503 = vsel %vm467, %v487, 0.0
  %v504 = vadd.f32 %v502, %v503
  %v505 = vsel %vm473, %v489, 0.0
  %v506 = vadd.f32 %v504, %v505
  %v507 = vrot.slane %v506, 4
  %v508 = vadd.f32 %v506, %v507
  %v509 = vrot.slane %v508, 2
  %v510 = vadd.f32 %v508, %v509
  %v511 = vrot.slane %v510, 1
  %v512 = vadd.f32 %v510, %v511
  %vm513 = vcmask 1040384
  %v514 = vsel %vm513, %v466, %v499
  %v515 = vsel %vm513, %v481, %v512
  %v516 = vld [vmem:[%s3] sm:$0xff]
  %v517 = vld [vmem:[%s3 + $0x8] sm:$0xff]
  %v518 = vld [vmem:[%s3 + $0x10] sm:$0xff]
  %v519 = vld [vmem:[%s3 + $0x18] sm:$0xff]
  %v520 = vld [vmem:[%s3 + $0x20] sm:$0xff]
  %v521 = vld [vmem:[%s3 + $0x28] sm:$0xff]
  %v522 = vld [vmem:[%s3 + $0x30] sm:$0xff]
  %v523 = vld [vmem:[%s3 + $0x38] sm:$0xff]
  %v524 = vld [vmem:[%s3 + $0x40] sm:$0xff]
  %v525 = vld [vmem:[%s3 + $0x48] sm:$0xff]
  %v526 = vld [vmem:[%s3 + $0x50] sm:$0xff]
  %v527 = vld [vmem:[%s3 + $0x58] sm:$0xff]
  %v528 = vld [vmem:[%s3 + $0x60] sm:$0xff]
  %v529 = vld [vmem:[%s3 + $0x68] sm:$0xff]
  %v530 = vld [vmem:[%s3 + $0x70] sm:$0xff]
  %v531 = vld [vmem:[%s3 + $0x78] sm:$0xff]
  %v532 = vld [vmem:[%s3 + $0x80] sm:$0xff]
  %v533 = vld [vmem:[%s3 + $0x88] sm:$0xff]
  %v534 = vld [vmem:[%s3 + $0x90] sm:$0xff]
  %v535 = vld [vmem:[%s3 + $0x98] sm:$0xff]
  %v536 = vld [vmem:[%s3 + $0xa0] sm:$0xff]
  %v537 = vld [vmem:[%s3 + $0xa8] sm:$0xff]
  %v538 = vld [vmem:[%s3 + $0xb0] sm:$0xff]
  %v539 = vld [vmem:[%s3 + $0xb8] sm:$0xff]
  %v540 = vld [vmem:[%s3 + $0xc0] sm:$0xff]
  %v541 = vld [vmem:[%s3 + $0xc8] sm:$0xff]
  %v542 = vld [vmem:[%s3 + $0xd0] sm:$0xff]
  %v543 = vld [vmem:[%s3 + $0xd8] sm:$0xff]
  %v544 = vld [vmem:[%s3 + $0xe0] sm:$0xff]
  %v545 = vld [vmem:[%s3 + $0xe8] sm:$0xff]
  %v546 = vld [vmem:[%s3 + $0xf0] sm:$0xff]
  %v547 = vld [vmem:[%s3 + $0xf8] sm:$0xff]
  %v548 = vld [vmem:[%s3 + $0x100] sm:$0xff]
  %v549 = vld [vmem:[%s3 + $0x108] sm:$0xff]
  %v550 = vld [vmem:[%s3 + $0x110] sm:$0xff]
  %v551 = vld [vmem:[%s3 + $0x118] sm:$0xff]
  %v552 = vld [vmem:[%s3 + $0x120] sm:$0xff]
  %v553 = vld [vmem:[%s3 + $0x128] sm:$0xff]
  %v554 = vld [vmem:[%s3 + $0x130] sm:$0xff]
  %v555 = vld [vmem:[%s3 + $0x138] sm:$0xff]
  %v556 = vld [vmem:[%s3 + $0x140] sm:$0xff]
  %v557 = vld [vmem:[%s3 + $0x148] sm:$0xff]
  %v558 = vld [vmem:[%s3 + $0x150] sm:$0xff]
  %v559 = vld [vmem:[%s3 + $0x158] sm:$0xff]
  %v560 = vld [vmem:[%s3 + $0x160] sm:$0xff]
  %v561 = vld [vmem:[%s3 + $0x168] sm:$0xff]
  %v562 = vld [vmem:[%s3 + $0x170] sm:$0xff]
  %v563 = vld [vmem:[%s3 + $0x178] sm:$0xff]
  %v565 = vsel %vm467, %v515, 0
  %567 = vmatpush.msra.mxu0 %v546
  %568 = vmatpush.msra.mxu0 %v544
  %569 = vmatpush.msra.mxu0 %v542
  %570 = vmatpush.msra.mxu0 %v540
  %571 = vmatpush.msra.mxu0 %v538
  %572 = vmatpush.msra.mxu0 %v536
  %573 = vmatpush.msra.mxu0 %v534
  %574 = vmatpush.msra.mxu0 %v532
  %575 = vmatpush.msra.mxu0 %v530
  %576 = vmatpush.msra.mxu0 %v528
  %577 = vmatpush.msra.mxu0 %v526
  %578 = vmatpush.msra.mxu0 %v524
  %579 = vmatpush.msra.mxu0 %v522
  %580 = vmatpush.msra.mxu0 %v520
  %581 = vmatpush.msra.mxu0 %v518
  %582 = vmatpush.msra.mxu0 %v516
  %583 = vmatmul.f32.gmra.mxu0 %v514
  %v584 = vpop.f32.mrf.mxu0
  %v585 = vadd.f32 0.0, %v584
  %586 = vdwg.mxu0
  %587 = vmatpush.msra.mxu0 0.0
  %588 = vmatpush.msra.mxu0 0.0
  %589 = vmatpush.msra.mxu0 0.0
  %590 = vmatpush.msra.mxu0 0.0
  %591 = vmatpush.msra.mxu0 0.0
  %592 = vmatpush.msra.mxu0 0.0
  %593 = vmatpush.msra.mxu0 0.0
  %594 = vmatpush.msra.mxu0 0.0
  %595 = vmatpush.msra.mxu0 %v562
  %596 = vmatpush.msra.mxu0 %v560
  %597 = vmatpush.msra.mxu0 %v558
  %598 = vmatpush.msra.mxu0 %v556
  %599 = vmatpush.msra.mxu0 %v554
  %600 = vmatpush.msra.mxu0 %v552
  %601 = vmatpush.msra.mxu0 %v550
  %602 = vmatpush.msra.mxu0 %v548
  %603 = vmatmul.f32.gmra.mxu0 %v565
  %v604 = vpop.f32.mrf.mxu0
  %v605 = vadd.f32 %v585, %v604
  %606 = vdwg.mxu0
  %607 = vmatpush.msra.mxu0 %v547
  %608 = vmatpush.msra.mxu0 %v545
  %609 = vmatpush.msra.mxu0 %v543
  %610 = vmatpush.msra.mxu0 %v541
  %611 = vmatpush.msra.mxu0 %v539
  %612 = vmatpush.msra.mxu0 %v537
  %613 = vmatpush.msra.mxu0 %v535
  %614 = vmatpush.msra.mxu0 %v533
  %615 = vmatpush.msra.mxu0 %v531
  %616 = vmatpush.msra.mxu0 %v529
  %617 = vmatpush.msra.mxu0 %v527
  %618 = vmatpush.msra.mxu0 %v525
  %619 = vmatpush.msra.mxu0 %v523
  %620 = vmatpush.msra.mxu0 %v521
  %621 = vmatpush.msra.mxu0 %v519
  %622 = vmatpush.msra.mxu0 %v517
  %623 = vmatmul.f32.gmra.mxu0 %v514
  %v624 = vpop.f32.mrf.mxu0
  %v625 = vadd.f32 0.0, %v624
  %626 = vdwg.mxu0
  %627 = vmatpush.msra.mxu0 0.0
  %628 = vmatpush.msra.mxu0 0.0
  %629 = vmatpush.msra.mxu0 0.0
  %630 = vmatpush.msra.mxu0 0.0
  %631 = vmatpush.msra.mxu0 0.0
  %632 = vmatpush.msra.mxu0 0.0
  %633 = vmatpush.msra.mxu0 0.0
  %634 = vmatpush.msra.mxu0 0.0
  %635 = vmatpush.msra.mxu0 %v563
  %636 = vmatpush.msra.mxu0 %v561
  %637 = vmatpush.msra.mxu0 %v559
  %638 = vmatpush.msra.mxu0 %v557
  %639 = vmatpush.msra.mxu0 %v555
  %640 = vmatpush.msra.mxu0 %v553
  %641 = vmatpush.msra.mxu0 %v551
  %642 = vmatpush.msra.mxu0 %v549
  %643 = vmatmul.f32.gmra.mxu0 %v565
  %v644 = vpop.f32.mrf.mxu0
  %v645 = vadd.f32 %v625, %v644
  %646 = vdwg.mxu0
  %v647 = vmul.f32 %v605, 0.0034722222
  %v648 = vmul.f32 %v645, 0.0034722222
  %v649 = vmul.f32 %v647, %v647
  %v650 = vmul.f32 %v648, %v648
  %v653 = vrot.slane %v649, 7
  %v654 = vrot.slane %v650, 7
  %v657 = vsub.f32 %v647, %v653
  %v658 = vsub.f32 %v648, %v654
  %v659 = vmax.f32 %v657, 0.0
  %v660 = vmax.f32 %v658, 0.0
  %v661 = vadd.f32 %v659, 1e-05
  %v662 = vadd.f32 %v660, 1e-05
  %v663 = vrsqrt.pop %v661
  %v664 = vmul.f32 %v663, %v661
  %v665 = vmul.f32 %v664, %v663
  %v666 = vmul.f32 0.5, %v665
  %v667 = vsub.f32 1.5, %v666
  %v668 = vmul.f32 %v663, %v667
  %vm669 = vweird.f32 %v661
  %vm670 = vweird.f32 %v663
  %vm671 = vmor %vm669, %vm670
  %v672 = vsel %vm671, %v663, %v668
  %v673 = vrsqrt.pop %v662
  %v674 = vmul.f32 %v673, %v662
  %v675 = vmul.f32 %v674, %v673
  %v676 = vmul.f32 0.5, %v675
  %v677 = vsub.f32 1.5, %v676
  %v678 = vmul.f32 %v673, %v677
  %vm679 = vweird.f32 %v662
  %vm680 = vweird.f32 %v673
  %vm681 = vmor %vm679, %vm680
  %v682 = vsel %vm681, %v673, %v678
  %685 = vst [vmem:[#allocation1] sm:$0xff] %v672
  %686 = vst [vmem:[#allocation1 + $0x9] sm:$0xff] %v682
  %s687 = scalar_lea.vmem [#allocation1], 1
  %v688 = vld [vmem:[%s687] ss:$9 sm:$0xff]
  %v690 = vmul.f32 %v356, %v688
  %v692 = vperm.slane %v690, 0
  %v693 = vperm.slane %v690, 1
  %v696 = vmul.f32 %v647, %v692
  %v697 = vmul.f32 %v648, %v693
  %v700 = vrot.slane %v697, 7
  %v701 = vsel %vm513, %v696, %v700
  %v703 = vsub.f32 %v358, %v701
  %v704 = vmul.f32 %v448, %v692
  %v705 = vmul.f32 %v449, %v693
  %v706 = vmul.f32 %v450, %v692
  %v707 = vmul.f32 %v451, %v693
  %v708 = vmul.f32 %v452, %v692
  %v709 = vmul.f32 %v453, %v693
  %v710 = vmul.f32 %v454, %v692
  %v711 = vmul.f32 %v455, %v693
  %v713 = vperm.slane %v703, 0
  %v714 = vperm.slane %v703, 1
  %v717 = vadd.f32 %v704, %v713
  %v718 = vadd.f32 %v705, %v714
  %v719 = vadd.f32 %v706, %v713
  %v720 = vadd.f32 %v707, %v714
  %v721 = vadd.f32 %v708, %v713
  %v722 = vadd.f32 %v709, %v714
  %v723 = vadd.f32 %v710, %v713
  %v724 = vadd.f32 %v711, %v714
  %v725 = vpack.c.bf16 %v719, %v717
  %v726 = vpack.c.bf16 %v720, %v718
  %v727 = vpack.c.bf16 %v721, %v721
  %v728 = vpack.c.bf16 %v722, %v722
  %v729 = vld [vmem:[%s4] sm:$0xff]
  %v730 = vld [vmem:[%s4 + $0x8] sm:$0xff]
  %v731 = vld [vmem:[%s4 + $0x10] sm:$0xff]
  %v732 = vld [vmem:[%s4 + $0x18] sm:$0xff]
  %v733 = vld [vmem:[%s4 + $0x20] sm:$0xff]
  %v734 = vld [vmem:[%s4 + $0x28] sm:$0xff]
  %v735 = vld [vmem:[%s4 + $0x30] sm:$0xff]
  %v736 = vld [vmem:[%s4 + $0x38] sm:$0xff]
  %v737 = vld [vmem:[%s4 + $0x40] sm:$0xff]
  %v738 = vld [vmem:[%s4 + $0x48] sm:$0xff]
  %v739 = vld [vmem:[%s4 + $0x50] sm:$0xff]
  %v740 = vld [vmem:[%s4 + $0x58] sm:$0xff]
  %v741 = vld [vmem:[%s4 + $0x60] sm:$0xff]
  %v742 = vld [vmem:[%s4 + $0x68] sm:$0xff]
  %v743 = vld [vmem:[%s4 + $0x70] sm:$0xff]
  %v744 = vld [vmem:[%s4 + $0x78] sm:$0xff]
  %v745 = vld [vmem:[%s4 + $0x80] sm:$0xff]
  %v746 = vld [vmem:[%s4 + $0x88] sm:$0xff]
  %v747 = vld [vmem:[%s4 + $0x90] sm:$0xff]
  %v748 = vld [vmem:[%s4 + $0x98] sm:$0xff]
  %v749 = vld [vmem:[%s4 + $0xa0] sm:$0xff]
  %v750 = vld [vmem:[%s4 + $0xa8] sm:$0xff]
  %v751 = vld [vmem:[%s4 + $0xb0] sm:$0xff]
  %v752 = vld [vmem:[%s4 + $0xb8] sm:$0xff]
  %v753 = vpack.c.bf16 %v723, %v721
  %v754 = vpack.c.bf16 %v724, %v722
  %s755 = scalar_lea.vmem %s4, 192
  %v756 = vld [vmem:[%s755] sm:$0xff]
  %v757 = vld [vmem:[%s755 + $0x8] sm:$0xff]
  %v758 = vld [vmem:[%s755 + $0x10] sm:$0xff]
  %v759 = vld [vmem:[%s755 + $0x18] sm:$0xff]
  %v760 = vld [vmem:[%s755 + $0x20] sm:$0xff]
  %v761 = vld [vmem:[%s755 + $0x28] sm:$0xff]
  %v762 = vld [vmem:[%s755 + $0x30] sm:$0xff]
  %v763 = vld [vmem:[%s755 + $0x38] sm:$0xff]
  %v764 = vld [vmem:[%s755 + $0x40] sm:$0xff]
  %v765 = vld [vmem:[%s755 + $0x48] sm:$0xff]
  %v766 = vld [vmem:[%s755 + $0x50] sm:$0xff]
  %v767 = vld [vmem:[%s755 + $0x58] sm:$0xff]
  %v768 = vld [vmem:[%s755 + $0x60] sm:$0xff]
  %v769 = vld [vmem:[%s755 + $0x68] sm:$0xff]
  %v770 = vld [vmem:[%s755 + $0x70] sm:$0xff]
  %v771 = vld [vmem:[%s755 + $0x78] sm:$0xff]
  %v772 = vld [vmem:[%s755 + $0x80] sm:$0xff]
  %v773 = vld [vmem:[%s755 + $0x88] sm:$0xff]
  %v774 = vld [vmem:[%s755 + $0x90] sm:$0xff]
  %v775 = vld [vmem:[%s755 + $0x98] sm:$0xff]
  %v776 = vld [vmem:[%s755 + $0xa0] sm:$0xff]
  %v777 = vld [vmem:[%s755 + $0xa8] sm:$0xff]
  %v778 = vld [vmem:[%s755 + $0xb0] sm:$0xff]
  %v779 = vld [vmem:[%s755 + $0xb8] sm:$0xff]
  %v781 = vshrl.u32 %v725, 16
  %v783 = vshll.u32 %v725, 16
  %v785 = vrot.slane %v783, 1
  %v786 = vor.u32 %v781, %v785
  %v788 = vshll.u32 %v753, 16
  %v790 = vrot.slane %v788, 1
  %v791 = vsel %vm60, %v786, %v790
  %v793 = vshrl.u32 %v726, 16
  %v795 = vshll.u32 %v726, 16
  %v797 = vrot.slane %v795, 1
  %v798 = vor.u32 %v793, %v797
  %v800 = vshll.u32 %v754, 16
  %v802 = vrot.slane %v800, 1
  %v803 = vsel %vm60, %v798, %v802
  %v804 = vshrl.u32 %v753, 16
  %v806 = vor.u32 %v804, %v790
  %v807 = vshrl.u32 %v754, 16
  %v809 = vor.u32 %v807, %v802
  %v836 = vunpack.c.l.b16 %v756
  %v837 = vunpack.c.h.b16 %v756
  %v838 = vunpack.c.l.b16 %v757
  %v839 = vunpack.c.h.b16 %v757
  %v840 = vunpack.c.l.b16 %v758
  %v841 = vunpack.c.h.b16 %v758
  %v842 = vunpack.c.l.b16 %v759
  %v843 = vunpack.c.h.b16 %v759
  %v844 = vunpack.c.l.b16 %v760
  %v845 = vunpack.c.h.b16 %v760
  %v846 = vunpack.c.l.b16 %v761
  %v847 = vunpack.c.h.b16 %v761
  %v848 = vunpack.c.l.b16 %v762
  %v849 = vunpack.c.h.b16 %v762
  %v850 = vunpack.c.l.b16 %v763
  %v851 = vunpack.c.h.b16 %v763
  %v852 = vunpack.c.l.b16 %v764
  %v853 = vunpack.c.h.b16 %v764
  %v854 = vunpack.c.l.b16 %v765
  %v855 = vunpack.c.h.b16 %v765
  %v856 = vunpack.c.l.b16 %v766
  %v857 = vunpack.c.h.b16 %v766
  %v858 = vunpack.c.l.b16 %v767
  %v859 = vunpack.c.h.b16 %v767
  %v860 = vunpack.c.l.b16 %v768
  %v861 = vunpack.c.h.b16 %v768
  %v862 = vunpack.c.l.b16 %v769
  %v863 = vunpack.c.h.b16 %v769
  %v864 = vunpack.c.l.b16 %v770
  %v865 = vunpack.c.h.b16 %v770
  %v866 = vunpack.c.l.b16 %v771
  %v867 = vunpack.c.h.b16 %v771
  %v868 = vunpack.c.l.b16 %v772
  %v869 = vunpack.c.h.b16 %v772
  %v870 = vunpack.c.l.b16 %v773
  %v871 = vunpack.c.h.b16 %v773
  %v872 = vunpack.c.l.b16 %v774
  %v873 = vunpack.c.h.b16 %v774
  %v874 = vunpack.c.l.b16 %v775
  %v875 = vunpack.c.h.b16 %v775
  %v876 = vunpack.c.l.b16 %v776
  %v877 = vunpack.c.h.b16 %v776
  %v878 = vunpack.c.l.b16 %v777
  %v879 = vunpack.c.h.b16 %v777
  %v880 = vunpack.c.l.b16 %v778
  %v881 = vunpack.c.h.b16 %v778
  %v882 = vunpack.c.l.b16 %v779
  %v883 = vunpack.c.h.b16 %v779
  %v884 = vpack.c.b16 %v838, %v836
  %v885 = vpack.c.b16 %v839, %v837
  %v886 = vpack.c.b16 %v842, %v840
  %v887 = vpack.c.b16 %v843, %v841
  %v888 = vpack.c.b16 %v846, %v844
  %v889 = vpack.c.b16 %v847, %v845
  %v890 = vpack.c.b16 %v850, %v848
  %v891 = vpack.c.b16 %v851, %v849
  %v892 = vpack.c.b16 %v854, %v852
  %v893 = vpack.c.b16 %v855, %v853
  %v894 = vpack.c.b16 %v858, %v856
  %v895 = vpack.c.b16 %v859, %v857
  %v896 = vpack.c.b16 %v862, %v860
  %v897 = vpack.c.b16 %v863, %v861
  %v898 = vpack.c.b16 %v866, %v864
  %v899 = vpack.c.b16 %v867, %v865
  %v900 = vpack.c.b16 %v870, %v868
  %v901 = vpack.c.b16 %v871, %v869
  %v902 = vpack.c.b16 %v874, %v872
  %v903 = vpack.c.b16 %v875, %v873
  %v904 = vpack.c.b16 %v878, %v876
  %v905 = vpack.c.b16 %v879, %v877
  %v906 = vpack.c.b16 %v882, %v880
  %v907 = vpack.c.b16 %v883, %v881
  %v933 = vsel %vm467, %v803, 0
  %v936 = vsel %vm467, %v809, 0
  %938 = vmatpush.bf16.msra.mxu0 %v898
  %939 = vmatpush.bf16.msra.mxu0 %v896
  %940 = vmatpush.bf16.msra.mxu0 %v894
  %941 = vmatpush.bf16.msra.mxu0 %v892
  %942 = vmatpush.bf16.msra.mxu0 %v890
  %943 = vmatpush.bf16.msra.mxu0 %v888
  %944 = vmatpush.bf16.msra.mxu0 %v886
  %945 = vmatpush.bf16.msra.mxu0 %v884
  %946 = vmatmul.bf16.gmra.mxu0 %v791
  %v947 = vpop.f32.mrf.mxu0
  %v948 = vadd.f32 0.0, %v947
  %v949 = vpop.f32.mrf.mxu0
  %v950 = vadd.f32 0.0, %v949
  %951 = vmatmul.bf16.gmra.mxu0 %v806
  %v952 = vpop.f32.mrf.mxu0
  %v953 = vadd.f32 0.0, %v952
  %v954 = vpop.f32.mrf.mxu0
  %955 = vdwg.mxu0
  %956 = vmatpush.bf16.msra.mxu0 0
  %957 = vmatpush.bf16.msra.mxu0 0
  %958 = vmatpush.bf16.msra.mxu0 0
  %959 = vmatpush.bf16.msra.mxu0 0
  %960 = vmatpush.bf16.msra.mxu0 %v906
  %961 = vmatpush.bf16.msra.mxu0 %v904
  %962 = vmatpush.bf16.msra.mxu0 %v902
  %963 = vmatpush.bf16.msra.mxu0 %v900
  %964 = vmatmul.bf16.gmra.mxu0 %v933
  %v965 = vpop.f32.mrf.mxu0
  %v966 = vadd.f32 %v948, %v965
  %v967 = vpop.f32.mrf.mxu0
  %v968 = vadd.f32 %v950, %v967
  %969 = vmatmul.bf16.gmra.mxu0 %v936
  %v970 = vpop.f32.mrf.mxu0
  %v971 = vadd.f32 %v953, %v970
  %v972 = vpop.f32.mrf.mxu0
  %973 = vdwg.mxu0
  %974 = vmatpush.bf16.msra.mxu0 %v899
  %975 = vmatpush.bf16.msra.mxu0 %v897
  %976 = vmatpush.bf16.msra.mxu0 %v895
  %977 = vmatpush.bf16.msra.mxu0 %v893
  %978 = vmatpush.bf16.msra.mxu0 %v891
  %979 = vmatpush.bf16.msra.mxu0 %v889
  %980 = vmatpush.bf16.msra.mxu0 %v887
  %981 = vmatpush.bf16.msra.mxu0 %v885
  %982 = vmatmul.bf16.gmra.mxu0 %v791
  %v983 = vpop.f32.mrf.mxu0
  %v984 = vadd.f32 0.0, %v983
  %v985 = vpop.f32.mrf.mxu0
  %v986 = vadd.f32 0.0, %v985
  %987 = vmatmul.bf16.gmra.mxu0 %v806
  %v988 = vpop.f32.mrf.mxu0
  %v989 = vadd.f32 0.0, %v988
  %v990 = vpop.f32.mrf.mxu0
  %991 = vdwg.mxu0
  %992 = vmatpush.bf16.msra.mxu0 0
  %993 = vmatpush.bf16.msra.mxu0 0
  %994 = vmatpush.bf16.msra.mxu0 0
  %995 = vmatpush.bf16.msra.mxu0 0
  %996 = vmatpush.bf16.msra.mxu0 %v907
  %997 = vmatpush.bf16.msra.mxu0 %v905
  %998 = vmatpush.bf16.msra.mxu0 %v903
  %999 = vmatpush.bf16.msra.mxu0 %v901
  %1000 = vmatmul.bf16.gmra.mxu0 %v933
  %v1001 = vpop.f32.mrf.mxu0
  %v1002 = vadd.f32 %v984, %v1001
  %v1003 = vpop.f32.mrf.mxu0
  %v1004 = vadd.f32 %v986, %v1003
  %1005 = vmatmul.bf16.gmra.mxu0 %v936
  %v1006 = vpop.f32.mrf.mxu0
  %v1007 = vadd.f32 %v989, %v1006
  %v1008 = vpop.f32.mrf.mxu0
  %1009 = vdwg.mxu0
  %v1034 = vunpack.c.l.b16 %v729
  %v1035 = vunpack.c.h.b16 %v729
  %v1036 = vunpack.c.l.b16 %v730
  %v1037 = vunpack.c.h.b16 %v730
  %v1038 = vunpack.c.l.b16 %v731
  %v1039 = vunpack.c.h.b16 %v731
  %v1040 = vunpack.c.l.b16 %v732
  %v1041 = vunpack.c.h.b16 %v732
  %v1042 = vunpack.c.l.b16 %v733
  %v1043 = vunpack.c.h.b16 %v733
  %v1044 = vunpack.c.l.b16 %v734
  %v1045 = vunpack.c.h.b16 %v734
  %v1046 = vunpack.c.l.b16 %v735
  %v1047 = vunpack.c.h.b16 %v735
  %v1048 = vunpack.c.l.b16 %v736
  %v1049 = vunpack.c.h.b16 %v736
  %v1050 = vunpack.c.l.b16 %v737
  %v1051 = vunpack.c.h.b16 %v737
  %v1052 = vunpack.c.l.b16 %v738
  %v1053 = vunpack.c.h.b16 %v738
  %v1054 = vunpack.c.l.b16 %v739
  %v1055 = vunpack.c.h.b16 %v739
  %v1056 = vunpack.c.l.b16 %v740
  %v1057 = vunpack.c.h.b16 %v740
  %v1058 = vunpack.c.l.b16 %v741
  %v1059 = vunpack.c.h.b16 %v741
  %v1060 = vunpack.c.l.b16 %v742
  %v1061 = vunpack.c.h.b16 %v742
  %v1062 = vunpack.c.l.b16 %v743
  %v1063 = vunpack.c.h.b16 %v743
  %v1064 = vunpack.c.l.b16 %v744
  %v1065 = vunpack.c.h.b16 %v744
  %v1066 = vunpack.c.l.b16 %v745
  %v1067 = vunpack.c.h.b16 %v745
  %v1068 = vunpack.c.l.b16 %v746
  %v1069 = vunpack.c.h.b16 %v746
  %v1070 = vunpack.c.l.b16 %v747
  %v1071 = vunpack.c.h.b16 %v747
  %v1072 = vunpack.c.l.b16 %v748
  %v1073 = vunpack.c.h.b16 %v748
  %v1074 = vunpack.c.l.b16 %v749
  %v1075 = vunpack.c.h.b16 %v749
  %v1076 = vunpack.c.l.b16 %v750
  %v1077 = vunpack.c.h.b16 %v750
  %v1078 = vunpack.c.l.b16 %v751
  %v1079 = vunpack.c.h.b16 %v751
  %v1080 = vunpack.c.l.b16 %v752
  %v1081 = vunpack.c.h.b16 %v752
  %v1082 = vpack.c.b16 %v1036, %v1034
  %v1083 = vpack.c.b16 %v1037, %v1035
  %v1084 = vpack.c.b16 %v1040, %v1038
  %v1085 = vpack.c.b16 %v1041, %v1039
  %v1086 = vpack.c.b16 %v1044, %v1042
  %v1087 = vpack.c.b16 %v1045, %v1043
  %v1088 = vpack.c.b16 %v1048, %v1046
  %v1089 = vpack.c.b16 %v1049, %v1047
  %v1090 = vpack.c.b16 %v1052, %v1050
  %v1091 = vpack.c.b16 %v1053, %v1051
  %v1092 = vpack.c.b16 %v1056, %v1054
  %v1093 = vpack.c.b16 %v1057, %v1055
  %v1094 = vpack.c.b16 %v1060, %v1058
  %v1095 = vpack.c.b16 %v1061, %v1059
  %v1096 = vpack.c.b16 %v1064, %v1062
  %v1097 = vpack.c.b16 %v1065, %v1063
  %v1098 = vpack.c.b16 %v1068, %v1066
  %v1099 = vpack.c.b16 %v1069, %v1067
  %v1100 = vpack.c.b16 %v1072, %v1070
  %v1101 = vpack.c.b16 %v1073, %v1071
  %v1102 = vpack.c.b16 %v1076, %v1074
  %v1103 = vpack.c.b16 %v1077, %v1075
  %v1104 = vpack.c.b16 %v1080, %v1078
  %v1105 = vpack.c.b16 %v1081, %v1079
  %v1130 = vsel %vm467, %v726, 0
  %v1133 = vsel %vm467, %v728, 0
  %1135 = vmatpush.bf16.msra.mxu0 %v1096
  %1136 = vmatpush.bf16.msra.mxu0 %v1094
  %1137 = vmatpush.bf16.msra.mxu0 %v1092
  %1138 = vmatpush.bf16.msra.mxu0 %v1090
  %1139 = vmatpush.bf16.msra.mxu0 %v1088
  %1140 = vmatpush.bf16.msra.mxu0 %v1086
  %1141 = vmatpush.bf16.msra.mxu0 %v1084
  %1142 = vmatpush.bf16.msra.mxu0 %v1082
  %1143 = vmatmul.bf16.gmra.mxu0 %v725
  %v1144 = vpop.f32.mrf.mxu0
  %v1145 = vadd.f32 %v966, %v1144
  %v1146 = vpop.f32.mrf.mxu0
  %v1147 = vadd.f32 %v968, %v1146
  %1148 = vmatmul.bf16.gmra.mxu0 %v727
  %v1149 = vpop.f32.mrf.mxu0
  %v1150 = vadd.f32 %v971, %v1149
  %v1151 = vpop.f32.mrf.mxu0
  %1152 = vdwg.mxu0
  %1153 = vmatpush.bf16.msra.mxu0 0
  %1154 = vmatpush.bf16.msra.mxu0 0
  %1155 = vmatpush.bf16.msra.mxu0 0
  %1156 = vmatpush.bf16.msra.mxu0 0
  %1157 = vmatpush.bf16.msra.mxu0 %v1104
  %1158 = vmatpush.bf16.msra.mxu0 %v1102
  %1159 = vmatpush.bf16.msra.mxu0 %v1100
  %1160 = vmatpush.bf16.msra.mxu0 %v1098
  %1161 = vmatmul.bf16.gmra.mxu0 %v1130
  %v1162 = vpop.f32.mrf.mxu0
  %v1163 = vadd.f32 %v1145, %v1162
  %v1164 = vpop.f32.mrf.mxu0
  %v1165 = vadd.f32 %v1147, %v1164
  %1166 = vmatmul.bf16.gmra.mxu0 %v1133
  %v1167 = vpop.f32.mrf.mxu0
  %v1168 = vadd.f32 %v1150, %v1167
  %v1169 = vpop.f32.mrf.mxu0
  %1170 = vdwg.mxu0
  %1171 = vmatpush.bf16.msra.mxu0 %v1097
  %1172 = vmatpush.bf16.msra.mxu0 %v1095
  %1173 = vmatpush.bf16.msra.mxu0 %v1093
  %1174 = vmatpush.bf16.msra.mxu0 %v1091
  %1175 = vmatpush.bf16.msra.mxu0 %v1089
  %1176 = vmatpush.bf16.msra.mxu0 %v1087
  %1177 = vmatpush.bf16.msra.mxu0 %v1085
  %1178 = vmatpush.bf16.msra.mxu0 %v1083
  %1179 = vmatmul.bf16.gmra.mxu0 %v725
  %v1180 = vpop.f32.mrf.mxu0
  %v1181 = vadd.f32 %v1002, %v1180
  %v1182 = vpop.f32.mrf.mxu0
  %v1183 = vadd.f32 %v1004, %v1182
  %1184 = vmatmul.bf16.gmra.mxu0 %v727
  %v1185 = vpop.f32.mrf.mxu0
  %v1186 = vadd.f32 %v1007, %v1185
  %v1187 = vpop.f32.mrf.mxu0
  %1188 = vdwg.mxu0
  %1189 = vmatpush.bf16.msra.mxu0 0
  %1190 = vmatpush.bf16.msra.mxu0 0
  %1191 = vmatpush.bf16.msra.mxu0 0
  %1192 = vmatpush.bf16.msra.mxu0 0
  %1193 = vmatpush.bf16.msra.mxu0 %v1105
  %1194 = vmatpush.bf16.msra.mxu0 %v1103
  %1195 = vmatpush.bf16.msra.mxu0 %v1101
  %1196 = vmatpush.bf16.msra.mxu0 %v1099
  %1197 = vmatmul.bf16.gmra.mxu0 %v1130
  %v1198 = vpop.f32.mrf.mxu0
  %v1199 = vadd.f32 %v1181, %v1198
  %v1200 = vpop.f32.mrf.mxu0
  %v1201 = vadd.f32 %v1183, %v1200
  %1202 = vmatmul.bf16.gmra.mxu0 %v1133
  %v1203 = vpop.f32.mrf.mxu0
  %v1204 = vadd.f32 %v1186, %v1203
  %v1205 = vpop.f32.mrf.mxu0
  %1206 = vdwg.mxu0
  %s1207 = scalar_lea.vmem %s4, 384
  %v1208 = vld [vmem:[%s1207] sm:$0xff]
  %v1209 = vld [vmem:[%s1207 + $0x8] sm:$0xff]
  %v1210 = vld [vmem:[%s1207 + $0x10] sm:$0xff]
  %v1211 = vld [vmem:[%s1207 + $0x18] sm:$0xff]
  %v1212 = vld [vmem:[%s1207 + $0x20] sm:$0xff]
  %v1213 = vld [vmem:[%s1207 + $0x28] sm:$0xff]
  %v1214 = vld [vmem:[%s1207 + $0x30] sm:$0xff]
  %v1215 = vld [vmem:[%s1207 + $0x38] sm:$0xff]
  %v1216 = vld [vmem:[%s1207 + $0x40] sm:$0xff]
  %v1217 = vld [vmem:[%s1207 + $0x48] sm:$0xff]
  %v1218 = vld [vmem:[%s1207 + $0x50] sm:$0xff]
  %v1219 = vld [vmem:[%s1207 + $0x58] sm:$0xff]
  %v1220 = vld [vmem:[%s1207 + $0x60] sm:$0xff]
  %v1221 = vld [vmem:[%s1207 + $0x68] sm:$0xff]
  %v1222 = vld [vmem:[%s1207 + $0x70] sm:$0xff]
  %v1223 = vld [vmem:[%s1207 + $0x78] sm:$0xff]
  %v1224 = vld [vmem:[%s1207 + $0x80] sm:$0xff]
  %v1225 = vld [vmem:[%s1207 + $0x88] sm:$0xff]
  %v1226 = vld [vmem:[%s1207 + $0x90] sm:$0xff]
  %v1227 = vld [vmem:[%s1207 + $0x98] sm:$0xff]
  %v1228 = vld [vmem:[%s1207 + $0xa0] sm:$0xff]
  %v1229 = vld [vmem:[%s1207 + $0xa8] sm:$0xff]
  %v1230 = vld [vmem:[%s1207 + $0xb0] sm:$0xff]
  %v1231 = vld [vmem:[%s1207 + $0xb8] sm:$0xff]
  %v1236 = vrot.slane %v725, 1
  %v1237 = vrot.slane %v753, 1
  %v1238 = vsel %vm256, %v1236, %v1237
  %v1239 = vrot.slane %v726, 1
  %v1240 = vrot.slane %v754, 1
  %v1241 = vsel %vm256, %v1239, %v1240
  %v1268 = vunpack.c.l.b16 %v1208
  %v1269 = vunpack.c.h.b16 %v1208
  %v1270 = vunpack.c.l.b16 %v1209
  %v1271 = vunpack.c.h.b16 %v1209
  %v1272 = vunpack.c.l.b16 %v1210
  %v1273 = vunpack.c.h.b16 %v1210
  %v1274 = vunpack.c.l.b16 %v1211
  %v1275 = vunpack.c.h.b16 %v1211
  %v1276 = vunpack.c.l.b16 %v1212
  %v1277 = vunpack.c.h.b16 %v1212
  %v1278 = vunpack.c.l.b16 %v1213
  %v1279 = vunpack.c.h.b16 %v1213
  %v1280 = vunpack.c.l.b16 %v1214
  %v1281 = vunpack.c.h.b16 %v1214
  %v1282 = vunpack.c.l.b16 %v1215
  %v1283 = vunpack.c.h.b16 %v1215
  %v1284 = vunpack.c.l.b16 %v1216
  %v1285 = vunpack.c.h.b16 %v1216
  %v1286 = vunpack.c.l.b16 %v1217
  %v1287 = vunpack.c.h.b16 %v1217
  %v1288 = vunpack.c.l.b16 %v1218
  %v1289 = vunpack.c.h.b16 %v1218
  %v1290 = vunpack.c.l.b16 %v1219
  %v1291 = vunpack.c.h.b16 %v1219
  %v1292 = vunpack.c.l.b16 %v1220
  %v1293 = vunpack.c.h.b16 %v1220
  %v1294 = vunpack.c.l.b16 %v1221
  %v1295 = vunpack.c.h.b16 %v1221
  %v1296 = vunpack.c.l.b16 %v1222
  %v1297 = vunpack.c.h.b16 %v1222
  %v1298 = vunpack.c.l.b16 %v1223
  %v1299 = vunpack.c.h.b16 %v1223
  %v1300 = vunpack.c.l.b16 %v1224
  %v1301 = vunpack.c.h.b16 %v1224
  %v1302 = vunpack.c.l.b16 %v1225
  %v1303 = vunpack.c.h.b16 %v1225
  %v1304 = vunpack.c.l.b16 %v1226
  %v1305 = vunpack.c.h.b16 %v1226
  %v1306 = vunpack.c.l.b16 %v1227
  %v1307 = vunpack.c.h.b16 %v1227
  %v1308 = vunpack.c.l.b16 %v1228
  %v1309 = vunpack.c.h.b16 %v1228
  %v1310 = vunpack.c.l.b16 %v1229
  %v1311 = vunpack.c.h.b16 %v1229
  %v1312 = vunpack.c.l.b16 %v1230
  %v1313 = vunpack.c.h.b16 %v1230
  %v1314 = vunpack.c.l.b16 %v1231
  %v1315 = vunpack.c.h.b16 %v1231
  %v1316 = vpack.c.b16 %v1270, %v1268
  %v1317 = vpack.c.b16 %v1271, %v1269
  %v1318 = vpack.c.b16 %v1274, %v1272
  %v1319 = vpack.c.b16 %v1275, %v1273
  %v1320 = vpack.c.b16 %v1278, %v1276
  %v1321 = vpack.c.b16 %v1279, %v1277
  %v1322 = vpack.c.b16 %v1282, %v1280
  %v1323 = vpack.c.b16 %v1283, %v1281
  %v1324 = vpack.c.b16 %v1286, %v1284
  %v1325 = vpack.c.b16 %v1287, %v1285
  %v1326 = vpack.c.b16 %v1290, %v1288
  %v1327 = vpack.c.b16 %v1291, %v1289
  %v1328 = vpack.c.b16 %v1294, %v1292
  %v1329 = vpack.c.b16 %v1295, %v1293
  %v1330 = vpack.c.b16 %v1298, %v1296
  %v1331 = vpack.c.b16 %v1299, %v1297
  %v1332 = vpack.c.b16 %v1302, %v1300
  %v1333 = vpack.c.b16 %v1303, %v1301
  %v1334 = vpack.c.b16 %v1306, %v1304
  %v1335 = vpack.c.b16 %v1307, %v1305
  %v1336 = vpack.c.b16 %v1310, %v1308
  %v1337 = vpack.c.b16 %v1311, %v1309
  %v1338 = vpack.c.b16 %v1314, %v1312
  %v1339 = vpack.c.b16 %v1315, %v1313
  %v1365 = vsel %vm467, %v1241, 0
  %v1368 = vsel %vm467, %v1240, 0
  %1370 = vmatpush.bf16.msra.mxu0 %v1330
  %1371 = vmatpush.bf16.msra.mxu0 %v1328
  %1372 = vmatpush.bf16.msra.mxu0 %v1326
  %1373 = vmatpush.bf16.msra.mxu0 %v1324
  %1374 = vmatpush.bf16.msra.mxu0 %v1322
  %1375 = vmatpush.bf16.msra.mxu0 %v1320
  %1376 = vmatpush.bf16.msra.mxu0 %v1318
  %1377 = vmatpush.bf16.msra.mxu0 %v1316
  %1378 = vmatmul.bf16.gmra.mxu0 %v1238
  %v1379 = vpop.f32.mrf.mxu0
  %v1380 = vadd.f32 0.0, %v1379
  %v1381 = vpop.f32.mrf.mxu0
  %v1382 = vadd.f32 0.0, %v1381
  %1383 = vmatmul.bf16.gmra.mxu0 %v1237
  %v1384 = vpop.f32.mrf.mxu0
  %v1385 = vadd.f32 0.0, %v1384
  %v1386 = vpop.f32.mrf.mxu0
  %1387 = vdwg.mxu0
  %1388 = vmatpush.bf16.msra.mxu0 0
  %1389 = vmatpush.bf16.msra.mxu0 0
  %1390 = vmatpush.bf16.msra.mxu0 0
  %1391 = vmatpush.bf16.msra.mxu0 0
  %1392 = vmatpush.bf16.msra.mxu0 %v1338
  %1393 = vmatpush.bf16.msra.mxu0 %v1336
  %1394 = vmatpush.bf16.msra.mxu0 %v1334
  %1395 = vmatpush.bf16.msra.mxu0 %v1332
  %1396 = vmatmul.bf16.gmra.mxu0 %v1365
  %v1397 = vpop.f32.mrf.mxu0
  %v1398 = vadd.f32 %v1380, %v1397
  %v1399 = vpop.f32.mrf.mxu0
  %v1400 = vadd.f32 %v1382, %v1399
  %1401 = vmatmul.bf16.gmra.mxu0 %v1368
  %v1402 = vpop.f32.mrf.mxu0
  %v1403 = vadd.f32 %v1385, %v1402
  %v1404 = vpop.f32.mrf.mxu0
  %1405 = vdwg.mxu0
  %1406 = vmatpush.bf16.msra.mxu0 %v1331
  %1407 = vmatpush.bf16.msra.mxu0 %v1329
  %1408 = vmatpush.bf16.msra.mxu0 %v1327
  %1409 = vmatpush.bf16.msra.mxu0 %v1325
  %1410 = vmatpush.bf16.msra.mxu0 %v1323
  %1411 = vmatpush.bf16.msra.mxu0 %v1321
  %1412 = vmatpush.bf16.msra.mxu0 %v1319
  %1413 = vmatpush.bf16.msra.mxu0 %v1317
  %1414 = vmatmul.bf16.gmra.mxu0 %v1238
  %v1415 = vpop.f32.mrf.mxu0
  %v1416 = vadd.f32 0.0, %v1415
  %v1417 = vpop.f32.mrf.mxu0
  %v1418 = vadd.f32 0.0, %v1417
  %1419 = vmatmul.bf16.gmra.mxu0 %v1237
  %v1420 = vpop.f32.mrf.mxu0
  %v1421 = vadd.f32 0.0, %v1420
  %v1422 = vpop.f32.mrf.mxu0
  %1423 = vdwg.mxu0
  %1424 = vmatpush.bf16.msra.mxu0 0
  %1425 = vmatpush.bf16.msra.mxu0 0
  %1426 = vmatpush.bf16.msra.mxu0 0
  %1427 = vmatpush.bf16.msra.mxu0 0
  %1428 = vmatpush.bf16.msra.mxu0 %v1339
  %1429 = vmatpush.bf16.msra.mxu0 %v1337
  %1430 = vmatpush.bf16.msra.mxu0 %v1335
  %1431 = vmatpush.bf16.msra.mxu0 %v1333
  %1432 = vmatmul.bf16.gmra.mxu0 %v1365
  %v1433 = vpop.f32.mrf.mxu0
  %v1434 = vadd.f32 %v1416, %v1433
  %v1435 = vpop.f32.mrf.mxu0
  %v1436 = vadd.f32 %v1418, %v1435
  %1437 = vmatmul.bf16.gmra.mxu0 %v1368
  %v1438 = vpop.f32.mrf.mxu0
  %v1439 = vadd.f32 %v1421, %v1438
  %v1440 = vpop.f32.mrf.mxu0
  %1441 = vdwg.mxu0
  %v1442 = vadd.f32 %v1163, %v1398
  %v1443 = vadd.f32 %v1199, %v1434
  %v1444 = vadd.f32 %v1165, %v1400
  %v1445 = vadd.f32 %v1201, %v1436
  %v1446 = vadd.f32 %v1168, %v1403
  %v1447 = vadd.f32 %v1204, %v1439
  %s1448 = scalar_lea.vmem %s1, 55
  %v1449 = vld [vmem:[%s1448] ss:$8 sm:$0x3]
  %s1450 = scalar_lea.vmem %s1, 64
  %v1451 = vld [vmem:[%s1450] ss:$8 sm:$0x3]
  %s1452 = scalar_lea.vmem %s1, 65
  %v1453 = vld [vmem:[%s1452] ss:$8 sm:$0x3]
  %v1455 = vperm.slane %v1449, 0
  %v1456 = vperm.slane %v1449, 1
  %v1459 = vadd.f32 %v1442, %v1455
  %v1460 = vadd.f32 %v1443, %v1456
  %v1461 = vadd.f32 %v1444, %v1455
  %v1462 = vadd.f32 %v1445, %v1456
  %v1463 = vadd.f32 %v1446, %v1455
  %v1464 = vadd.f32 %v1447, %v1456
  %vm1465 = vcmp.gt.f32.partialorder %v1459, 0.0
  %vm1466 = vcmp.gt.f32.partialorder %v1460, 0.0
  %vm1467 = vcmp.gt.f32.partialorder %v1461, 0.0
  %vm1468 = vcmp.gt.f32.partialorder %v1462, 0.0
  %vm1469 = vcmp.gt.f32.partialorder %v1463, 0.0
  %vm1470 = vcmp.gt.f32.partialorder %v1464, 0.0
  %v1471 = vmin.f32 %v1459, 0.0
  %v1472 = vmin.f32 %v1460, 0.0
  %v1473 = vmin.f32 %v1461, 0.0
  %v1474 = vmin.f32 %v1462, 0.0
  %v1475 = vmin.f32 %v1463, 0.0
  %v1476 = vmin.f32 %v1464, 0.0
  %v1477 = vmul.f32 %v1471, 1.442695
  %v1478 = vpow.pop %v1477
  %v1479 = vmul.f32 %v1472, 1.442695
  %v1480 = vpow.pop %v1479
  %v1481 = vmul.f32 %v1473, 1.442695
  %v1482 = vpow.pop %v1481
  %v1483 = vmul.f32 %v1474, 1.442695
  %v1484 = vpow.pop %v1483
  %v1485 = vmul.f32 %v1475, 1.442695
  %v1486 = vpow.pop %v1485
  %v1487 = vmul.f32 %v1476, 1.442695
  %v1488 = vpow.pop %v1487
  %v1489 = vsub.f32 %v1478, 1.0
  %v1490 = vsub.f32 %v1480, 1.0
  %v1491 = vsub.f32 %v1482, 1.0
  %v1492 = vsub.f32 %v1484, 1.0
  %v1493 = vsub.f32 %v1486, 1.0
  %v1494 = vsub.f32 %v1488, 1.0
  %v1495 = vsel %vm1465, %v1459, %v1489
  %v1496 = vsel %vm1466, %v1460, %v1490
  %v1497 = vsel %vm1467, %v1461, %v1491
  %v1498 = vsel %vm1468, %v1462, %v1492
  %v1499 = vsel %vm1469, %v1463, %v1493
  %v1500 = vsel %vm1470, %v1464, %v1494
  %v1501 = vld [vmem:[%s1] sm:$0xff]
  %v1502 = vld [vmem:[%s1 + $0x10] sm:$0xff]
  %v1503 = vld [vmem:[%s1 + $0x20] sm:$0xff]
  %vm1504 = vcmp.gt.f32.partialorder %v1501, 0.5
  %vm1505 = vcmp.gt.f32.partialorder %v1502, 0.5
  %vm1506 = vcmp.gt.f32.partialorder %v1503, 0.5
  %v1507 = vsel %vm1504, 1, 0
  %v1508 = vsel %vm1505, 1, 0
  %v1509 = vsel %vm1506, 1, 0
  %1510 = vset.pattern.permute.xlu0 1
  %1511 = vperm.xlu0 %1510, %v1507
  %v1512 = vpop.permute.xlu0 %1511
  %1513 = vset.pattern.permute.xlu0 1
  %1514 = vperm.xlu0 %1513, %v1508
  %v1515 = vpop.permute.xlu0 %1514
  %1516 = vset.pattern.permute.xlu0 1
  %1517 = vperm.xlu0 %1516, %v1509
  %v1518 = vpop.permute.xlu0 %1517
  %vm1519 = vcmp.eq.s32.totalorder %v1512, 1
  %vm1520 = vcmp.eq.s32.totalorder %v1515, 1
  %vm1521 = vcmp.eq.s32.totalorder %v1518, 1
  %v1522 = vsel %vm1519, %v1495, 0.0
  %v1523 = vsel %vm1519, %v1496, 0.0
  %v1524 = vsel %vm1520, %v1497, 0.0
  %v1525 = vsel %vm1520, %v1498, 0.0
  %v1526 = vsel %vm1521, %v1499, 0.0
  %v1527 = vsel %vm1521, %v1500, 0.0
  %v1528 = vadd.f32 %v1522, %v1524
  %v1529 = vadd.f32 %v1528, %v1526
  %v1530 = vrot.slane %v1529, 4
  %v1531 = vadd.f32 %v1529, %v1530
  %v1532 = vrot.slane %v1531, 2
  %v1533 = vadd.f32 %v1531, %v1532
  %v1534 = vrot.slane %v1533, 1
  %v1535 = vadd.f32 %v1533, %v1534
  %vm1536 = vcmask 261120
  %v1537 = vsel %vm1536, %v1523, 0.0
  %v1538 = vsel %vm1536, %v1525, 0.0
  %v1539 = vadd.f32 %v1537, %v1538
  %v1540 = vsel %vm1536, %v1527, 0.0
  %v1541 = vadd.f32 %v1539, %v1540
  %v1542 = vrot.slane %v1541, 4
  %v1543 = vadd.f32 %v1541, %v1542
  %v1544 = vrot.slane %v1543, 2
  %v1545 = vadd.f32 %v1543, %v1544
  %v1546 = vrot.slane %v1545, 1
  %v1547 = vadd.f32 %v1545, %v1546
  %v1548 = vmul.f32 %v1522, %v1522
  %v1549 = vmul.f32 %v1523, %v1523
  %v1550 = vmul.f32 %v1524, %v1524
  %v1551 = vmul.f32 %v1525, %v1525
  %v1552 = vmul.f32 %v1526, %v1526
  %v1553 = vmul.f32 %v1527, %v1527
  %v1554 = vadd.f32 %v1548, %v1550
  %v1555 = vadd.f32 %v1554, %v1552
  %v1556 = vrot.slane %v1555, 4
  %v1557 = vadd.f32 %v1555, %v1556
  %v1558 = vrot.slane %v1557, 2
  %v1559 = vadd.f32 %v1557, %v1558
  %v1560 = vrot.slane %v1559, 1
  %v1561 = vadd.f32 %v1559, %v1560
  %v1562 = vsel %vm1536, %v1549, 0.0
  %v1563 = vsel %vm1536, %v1551, 0.0
  %v1564 = vadd.f32 %v1562, %v1563
  %v1565 = vsel %vm1536, %v1553, 0.0
  %v1566 = vadd.f32 %v1564, %v1565
  %v1567 = vrot.slane %v1566, 4
  %v1568 = vadd.f32 %v1566, %v1567
  %v1569 = vrot.slane %v1568, 2
  %v1570 = vadd.f32 %v1568, %v1569
  %v1571 = vrot.slane %v1570, 1
  %v1572 = vadd.f32 %v1570, %v1571
  %v1573 = vsel %vm513, %v1535, %v1561
  %v1574 = vsel %vm513, %v1547, %v1572
  %v1575 = vld [vmem:[%s5] sm:$0xff]
  %v1576 = vld [vmem:[%s5 + $0x8] sm:$0xff]
  %v1577 = vld [vmem:[%s5 + $0x10] sm:$0xff]
  %v1578 = vld [vmem:[%s5 + $0x18] sm:$0xff]
  %v1579 = vld [vmem:[%s5 + $0x20] sm:$0xff]
  %v1580 = vld [vmem:[%s5 + $0x28] sm:$0xff]
  %v1581 = vld [vmem:[%s5 + $0x30] sm:$0xff]
  %v1582 = vld [vmem:[%s5 + $0x38] sm:$0xff]
  %v1583 = vld [vmem:[%s5 + $0x40] sm:$0xff]
  %v1584 = vld [vmem:[%s5 + $0x48] sm:$0xff]
  %v1585 = vld [vmem:[%s5 + $0x50] sm:$0xff]
  %v1586 = vld [vmem:[%s5 + $0x58] sm:$0xff]
  %v1587 = vld [vmem:[%s5 + $0x60] sm:$0xff]
  %v1588 = vld [vmem:[%s5 + $0x68] sm:$0xff]
  %v1589 = vld [vmem:[%s5 + $0x70] sm:$0xff]
  %v1590 = vld [vmem:[%s5 + $0x78] sm:$0xff]
  %v1591 = vld [vmem:[%s5 + $0x80] sm:$0xff]
  %v1592 = vld [vmem:[%s5 + $0x88] sm:$0xff]
  %v1593 = vld [vmem:[%s5 + $0x90] sm:$0xff]
  %v1594 = vld [vmem:[%s5 + $0x98] sm:$0xff]
  %v1595 = vld [vmem:[%s5 + $0xa0] sm:$0xff]
  %v1596 = vld [vmem:[%s5 + $0xa8] sm:$0xff]
  %v1597 = vld [vmem:[%s5 + $0xb0] sm:$0xff]
  %v1598 = vld [vmem:[%s5 + $0xb8] sm:$0xff]
  %v1599 = vld [vmem:[%s5 + $0xc0] sm:$0xff]
  %v1600 = vld [vmem:[%s5 + $0xc8] sm:$0xff]
  %v1601 = vld [vmem:[%s5 + $0xd0] sm:$0xff]
  %v1602 = vld [vmem:[%s5 + $0xd8] sm:$0xff]
  %v1603 = vld [vmem:[%s5 + $0xe0] sm:$0xff]
  %v1604 = vld [vmem:[%s5 + $0xe8] sm:$0xff]
  %v1605 = vld [vmem:[%s5 + $0xf0] sm:$0xff]
  %v1606 = vld [vmem:[%s5 + $0xf8] sm:$0xff]
  %v1607 = vld [vmem:[%s5 + $0x100] sm:$0xff]
  %v1608 = vld [vmem:[%s5 + $0x108] sm:$0xff]
  %v1609 = vld [vmem:[%s5 + $0x110] sm:$0xff]
  %v1610 = vld [vmem:[%s5 + $0x118] sm:$0xff]
  %v1611 = vld [vmem:[%s5 + $0x120] sm:$0xff]
  %v1612 = vld [vmem:[%s5 + $0x128] sm:$0xff]
  %v1613 = vld [vmem:[%s5 + $0x130] sm:$0xff]
  %v1614 = vld [vmem:[%s5 + $0x138] sm:$0xff]
  %v1616 = vsel %vm1536, %v1574, 0
  %1618 = vmatpush.msra.mxu0 %v1605
  %1619 = vmatpush.msra.mxu0 %v1603
  %1620 = vmatpush.msra.mxu0 %v1601
  %1621 = vmatpush.msra.mxu0 %v1599
  %1622 = vmatpush.msra.mxu0 %v1597
  %1623 = vmatpush.msra.mxu0 %v1595
  %1624 = vmatpush.msra.mxu0 %v1593
  %1625 = vmatpush.msra.mxu0 %v1591
  %1626 = vmatpush.msra.mxu0 %v1589
  %1627 = vmatpush.msra.mxu0 %v1587
  %1628 = vmatpush.msra.mxu0 %v1585
  %1629 = vmatpush.msra.mxu0 %v1583
  %1630 = vmatpush.msra.mxu0 %v1581
  %1631 = vmatpush.msra.mxu0 %v1579
  %1632 = vmatpush.msra.mxu0 %v1577
  %1633 = vmatpush.msra.mxu0 %v1575
  %1634 = vmatmul.f32.gmra.mxu0 %v1573
  %v1635 = vpop.f32.mrf.mxu0
  %v1636 = vadd.f32 0.0, %v1635
  %1637 = vdwg.mxu0
  %1638 = vmatpush.msra.mxu0 0.0
  %1639 = vmatpush.msra.mxu0 0.0
  %1640 = vmatpush.msra.mxu0 0.0
  %1641 = vmatpush.msra.mxu0 0.0
  %1642 = vmatpush.msra.mxu0 0.0
  %1643 = vmatpush.msra.mxu0 0.0
  %1644 = vmatpush.msra.mxu0 0.0
  %1645 = vmatpush.msra.mxu0 0.0
  %1646 = vmatpush.msra.mxu0 0.0
  %1647 = vmatpush.msra.mxu0 0.0
  %1648 = vmatpush.msra.mxu0 0.0
  %1649 = vmatpush.msra.mxu0 0.0
  %1650 = vmatpush.msra.mxu0 %v1613
  %1651 = vmatpush.msra.mxu0 %v1611
  %1652 = vmatpush.msra.mxu0 %v1609
  %1653 = vmatpush.msra.mxu0 %v1607
  %1654 = vmatmul.f32.gmra.mxu0 %v1616
  %v1655 = vpop.f32.mrf.mxu0
  %v1656 = vadd.f32 %v1636, %v1655
  %1657 = vdwg.mxu0
  %1658 = vmatpush.msra.mxu0 %v1606
  %1659 = vmatpush.msra.mxu0 %v1604
  %1660 = vmatpush.msra.mxu0 %v1602
  %1661 = vmatpush.msra.mxu0 %v1600
  %1662 = vmatpush.msra.mxu0 %v1598
  %1663 = vmatpush.msra.mxu0 %v1596
  %1664 = vmatpush.msra.mxu0 %v1594
  %1665 = vmatpush.msra.mxu0 %v1592
  %1666 = vmatpush.msra.mxu0 %v1590
  %1667 = vmatpush.msra.mxu0 %v1588
  %1668 = vmatpush.msra.mxu0 %v1586
  %1669 = vmatpush.msra.mxu0 %v1584
  %1670 = vmatpush.msra.mxu0 %v1582
  %1671 = vmatpush.msra.mxu0 %v1580
  %1672 = vmatpush.msra.mxu0 %v1578
  %1673 = vmatpush.msra.mxu0 %v1576
  %1674 = vmatmul.f32.gmra.mxu0 %v1573
  %v1675 = vpop.f32.mrf.mxu0
  %v1676 = vadd.f32 0.0, %v1675
  %1677 = vdwg.mxu0
  %1678 = vmatpush.msra.mxu0 0.0
  %1679 = vmatpush.msra.mxu0 0.0
  %1680 = vmatpush.msra.mxu0 0.0
  %1681 = vmatpush.msra.mxu0 0.0
  %1682 = vmatpush.msra.mxu0 0.0
  %1683 = vmatpush.msra.mxu0 0.0
  %1684 = vmatpush.msra.mxu0 0.0
  %1685 = vmatpush.msra.mxu0 0.0
  %1686 = vmatpush.msra.mxu0 0.0
  %1687 = vmatpush.msra.mxu0 0.0
  %1688 = vmatpush.msra.mxu0 0.0
  %1689 = vmatpush.msra.mxu0 0.0
  %1690 = vmatpush.msra.mxu0 %v1614
  %1691 = vmatpush.msra.mxu0 %v1612
  %1692 = vmatpush.msra.mxu0 %v1610
  %1693 = vmatpush.msra.mxu0 %v1608
  %1694 = vmatmul.f32.gmra.mxu0 %v1616
  %v1695 = vpop.f32.mrf.mxu0
  %v1696 = vadd.f32 %v1676, %v1695
  %1697 = vdwg.mxu0
  %v1698 = vmul.f32 %v1656, 0.005
  %v1699 = vmul.f32 %v1696, 0.005
  %v1700 = vmul.f32 %v1698, %v1698
  %v1701 = vmul.f32 %v1699, %v1699
  %v1704 = vrot.slane %v1700, 7
  %v1705 = vrot.slane %v1701, 7
  %v1708 = vsub.f32 %v1698, %v1704
  %v1709 = vsub.f32 %v1699, %v1705
  %v1710 = vmax.f32 %v1708, 0.0
  %v1711 = vmax.f32 %v1709, 0.0
  %v1712 = vadd.f32 %v1710, 1e-05
  %v1713 = vadd.f32 %v1711, 1e-05
  %v1714 = vrsqrt.pop %v1712
  %v1715 = vmul.f32 %v1714, %v1712
  %v1716 = vmul.f32 %v1715, %v1714
  %v1717 = vmul.f32 0.5, %v1716
  %v1718 = vsub.f32 1.5, %v1717
  %v1719 = vmul.f32 %v1714, %v1718
  %vm1720 = vweird.f32 %v1712
  %vm1721 = vweird.f32 %v1714
  %vm1722 = vmor %vm1720, %vm1721
  %v1723 = vsel %vm1722, %v1714, %v1719
  %v1724 = vrsqrt.pop %v1713
  %v1725 = vmul.f32 %v1724, %v1713
  %v1726 = vmul.f32 %v1725, %v1724
  %v1727 = vmul.f32 0.5, %v1726
  %v1728 = vsub.f32 1.5, %v1727
  %v1729 = vmul.f32 %v1724, %v1728
  %vm1730 = vweird.f32 %v1713
  %vm1731 = vweird.f32 %v1724
  %vm1732 = vmor %vm1730, %vm1731
  %v1733 = vsel %vm1732, %v1724, %v1729
  %1736 = vst [vmem:[#allocation1] sm:$0xff] %v1723
  %1737 = vst [vmem:[#allocation1 + $0x9] sm:$0xff] %v1733
  %s1738 = scalar_lea.vmem [#allocation1], 1
  %v1739 = vld [vmem:[%s1738] ss:$9 sm:$0xff]
  %v1741 = vmul.f32 %v1451, %v1739
  %v1743 = vperm.slane %v1741, 0
  %v1744 = vperm.slane %v1741, 1
  %v1747 = vmul.f32 %v1698, %v1743
  %v1748 = vmul.f32 %v1699, %v1744
  %v1751 = vrot.slane %v1748, 7
  %v1752 = vsel %vm513, %v1747, %v1751
  %v1754 = vsub.f32 %v1453, %v1752
  %v1755 = vmul.f32 %v1522, %v1743
  %v1756 = vmul.f32 %v1523, %v1744
  %v1757 = vmul.f32 %v1524, %v1743
  %v1758 = vmul.f32 %v1525, %v1744
  %v1759 = vmul.f32 %v1526, %v1743
  %v1760 = vmul.f32 %v1527, %v1744
  %v1762 = vperm.slane %v1754, 0
  %v1763 = vperm.slane %v1754, 1
  %v1766 = vadd.f32 %v1755, %v1762
  %v1767 = vadd.f32 %v1756, %v1763
  %v1768 = vadd.f32 %v1757, %v1762
  %v1769 = vadd.f32 %v1758, %v1763
  %v1770 = vadd.f32 %v1759, %v1762
  %v1771 = vadd.f32 %v1760, %v1763
  %v1772 = vpack.c.bf16 %v1768, %v1766
  %v1773 = vpack.c.bf16 %v1769, %v1767
  %v1774 = vpack.c.bf16 %v1770, %v1770
  %v1775 = vpack.c.bf16 %v1771, %v1771
  %v1776 = vld [vmem:[%s6] sm:$0xff]
  %v1777 = vld [vmem:[%s6 + $0x8] sm:$0xff]
  %v1778 = vld [vmem:[%s6 + $0x10] sm:$0xff]
  %v1779 = vld [vmem:[%s6 + $0x18] sm:$0xff]
  %v1780 = vld [vmem:[%s6 + $0x20] sm:$0xff]
  %v1781 = vld [vmem:[%s6 + $0x28] sm:$0xff]
  %v1782 = vld [vmem:[%s6 + $0x30] sm:$0xff]
  %v1783 = vld [vmem:[%s6 + $0x38] sm:$0xff]
  %v1784 = vld [vmem:[%s6 + $0x40] sm:$0xff]
  %v1785 = vld [vmem:[%s6 + $0x48] sm:$0xff]
  %v1786 = vld [vmem:[%s6 + $0x50] sm:$0xff]
  %v1787 = vld [vmem:[%s6 + $0x58] sm:$0xff]
  %v1788 = vld [vmem:[%s6 + $0x60] sm:$0xff]
  %v1789 = vld [vmem:[%s6 + $0x68] sm:$0xff]
  %v1790 = vld [vmem:[%s6 + $0x70] sm:$0xff]
  %v1791 = vld [vmem:[%s6 + $0x78] sm:$0xff]
  %v1792 = vld [vmem:[%s6 + $0x80] sm:$0xff]
  %v1793 = vld [vmem:[%s6 + $0x88] sm:$0xff]
  %v1794 = vld [vmem:[%s6 + $0x90] sm:$0xff]
  %v1795 = vld [vmem:[%s6 + $0x98] sm:$0xff]
  %s1796 = scalar_lea.vmem %s6, 160
  %v1797 = vld [vmem:[%s1796] sm:$0xff]
  %v1798 = vld [vmem:[%s1796 + $0x8] sm:$0xff]
  %v1799 = vld [vmem:[%s1796 + $0x10] sm:$0xff]
  %v1800 = vld [vmem:[%s1796 + $0x18] sm:$0xff]
  %v1801 = vld [vmem:[%s1796 + $0x20] sm:$0xff]
  %v1802 = vld [vmem:[%s1796 + $0x28] sm:$0xff]
  %v1803 = vld [vmem:[%s1796 + $0x30] sm:$0xff]
  %v1804 = vld [vmem:[%s1796 + $0x38] sm:$0xff]
  %v1805 = vld [vmem:[%s1796 + $0x40] sm:$0xff]
  %v1806 = vld [vmem:[%s1796 + $0x48] sm:$0xff]
  %v1807 = vld [vmem:[%s1796 + $0x50] sm:$0xff]
  %v1808 = vld [vmem:[%s1796 + $0x58] sm:$0xff]
  %v1809 = vld [vmem:[%s1796 + $0x60] sm:$0xff]
  %v1810 = vld [vmem:[%s1796 + $0x68] sm:$0xff]
  %v1811 = vld [vmem:[%s1796 + $0x70] sm:$0xff]
  %v1812 = vld [vmem:[%s1796 + $0x78] sm:$0xff]
  %v1813 = vld [vmem:[%s1796 + $0x80] sm:$0xff]
  %v1814 = vld [vmem:[%s1796 + $0x88] sm:$0xff]
  %v1815 = vld [vmem:[%s1796 + $0x90] sm:$0xff]
  %v1816 = vld [vmem:[%s1796 + $0x98] sm:$0xff]
  %v1818 = vshrl.u32 %v1772, 16
  %v1820 = vshll.u32 %v1772, 16
  %v1822 = vrot.slane %v1820, 1
  %v1823 = vor.u32 %v1818, %v1822
  %v1825 = vshll.u32 %v1774, 16
  %v1827 = vrot.slane %v1825, 1
  %v1828 = vsel %vm60, %v1823, %v1827
  %v1830 = vshrl.u32 %v1773, 16
  %v1832 = vshll.u32 %v1773, 16
  %v1834 = vrot.slane %v1832, 1
  %v1835 = vor.u32 %v1830, %v1834
  %v1837 = vshll.u32 %v1775, 16
  %v1839 = vrot.slane %v1837, 1
  %v1840 = vsel %vm60, %v1835, %v1839
  %v1841 = vshrl.u32 %v1774, 16
  %v1843 = vor.u32 %v1841, %v1827
  %v1844 = vshrl.u32 %v1775, 16
  %v1846 = vor.u32 %v1844, %v1839
  %v1869 = vunpack.c.l.b16 %v1797
  %v1870 = vunpack.c.h.b16 %v1797
  %v1871 = vunpack.c.l.b16 %v1798
  %v1872 = vunpack.c.h.b16 %v1798
  %v1873 = vunpack.c.l.b16 %v1799
  %v1874 = vunpack.c.h.b16 %v1799
  %v1875 = vunpack.c.l.b16 %v1800
  %v1876 = vunpack.c.h.b16 %v1800
  %v1877 = vunpack.c.l.b16 %v1801
  %v1878 = vunpack.c.h.b16 %v1801
  %v1879 = vunpack.c.l.b16 %v1802
  %v1880 = vunpack.c.h.b16 %v1802
  %v1881 = vunpack.c.l.b16 %v1803
  %v1882 = vunpack.c.h.b16 %v1803
  %v1883 = vunpack.c.l.b16 %v1804
  %v1884 = vunpack.c.h.b16 %v1804
  %v1885 = vunpack.c.l.b16 %v1805
  %v1886 = vunpack.c.h.b16 %v1805
  %v1887 = vunpack.c.l.b16 %v1806
  %v1888 = vunpack.c.h.b16 %v1806
  %v1889 = vunpack.c.l.b16 %v1807
  %v1890 = vunpack.c.h.b16 %v1807
  %v1891 = vunpack.c.l.b16 %v1808
  %v1892 = vunpack.c.h.b16 %v1808
  %v1893 = vunpack.c.l.b16 %v1809
  %v1894 = vunpack.c.h.b16 %v1809
  %v1895 = vunpack.c.l.b16 %v1810
  %v1896 = vunpack.c.h.b16 %v1810
  %v1897 = vunpack.c.l.b16 %v1811
  %v1898 = vunpack.c.h.b16 %v1811
  %v1899 = vunpack.c.l.b16 %v1812
  %v1900 = vunpack.c.h.b16 %v1812
  %v1901 = vunpack.c.l.b16 %v1813
  %v1902 = vunpack.c.h.b16 %v1813
  %v1903 = vunpack.c.l.b16 %v1814
  %v1904 = vunpack.c.h.b16 %v1814
  %v1905 = vunpack.c.l.b16 %v1815
  %v1906 = vunpack.c.h.b16 %v1815
  %v1907 = vunpack.c.l.b16 %v1816
  %v1908 = vunpack.c.h.b16 %v1816
  %v1909 = vpack.c.b16 %v1871, %v1869
  %v1910 = vpack.c.b16 %v1872, %v1870
  %v1911 = vpack.c.b16 %v1875, %v1873
  %v1912 = vpack.c.b16 %v1876, %v1874
  %v1913 = vpack.c.b16 %v1879, %v1877
  %v1914 = vpack.c.b16 %v1880, %v1878
  %v1915 = vpack.c.b16 %v1883, %v1881
  %v1916 = vpack.c.b16 %v1884, %v1882
  %v1917 = vpack.c.b16 %v1887, %v1885
  %v1918 = vpack.c.b16 %v1888, %v1886
  %v1919 = vpack.c.b16 %v1891, %v1889
  %v1920 = vpack.c.b16 %v1892, %v1890
  %v1921 = vpack.c.b16 %v1895, %v1893
  %v1922 = vpack.c.b16 %v1896, %v1894
  %v1923 = vpack.c.b16 %v1899, %v1897
  %v1924 = vpack.c.b16 %v1900, %v1898
  %v1925 = vpack.c.b16 %v1903, %v1901
  %v1926 = vpack.c.b16 %v1904, %v1902
  %v1927 = vpack.c.b16 %v1907, %v1905
  %v1928 = vpack.c.b16 %v1908, %v1906
  %v1950 = vsel %vm1536, %v1840, 0
  %v1953 = vsel %vm1536, %v1846, 0
  %1955 = vmatpush.bf16.msra.mxu0 %v1923
  %1956 = vmatpush.bf16.msra.mxu0 %v1921
  %1957 = vmatpush.bf16.msra.mxu0 %v1919
  %1958 = vmatpush.bf16.msra.mxu0 %v1917
  %1959 = vmatpush.bf16.msra.mxu0 %v1915
  %1960 = vmatpush.bf16.msra.mxu0 %v1913
  %1961 = vmatpush.bf16.msra.mxu0 %v1911
  %1962 = vmatpush.bf16.msra.mxu0 %v1909
  %1963 = vmatmul.bf16.gmra.mxu0 %v1828
  %v1964 = vpop.f32.mrf.mxu0
  %v1965 = vadd.f32 0.0, %v1964
  %v1966 = vpop.f32.mrf.mxu0
  %v1967 = vadd.f32 0.0, %v1966
  %1968 = vmatmul.bf16.gmra.mxu0 %v1843
  %v1969 = vpop.f32.mrf.mxu0
  %v1970 = vadd.f32 0.0, %v1969
  %v1971 = vpop.f32.mrf.mxu0
  %1972 = vdwg.mxu0
  %1973 = vmatpush.bf16.msra.mxu0 0
  %1974 = vmatpush.bf16.msra.mxu0 0
  %1975 = vmatpush.bf16.msra.mxu0 0
  %1976 = vmatpush.bf16.msra.mxu0 0
  %1977 = vmatpush.bf16.msra.mxu0 0
  %1978 = vmatpush.bf16.msra.mxu0 0
  %1979 = vmatpush.bf16.msra.mxu0 %v1927
  %1980 = vmatpush.bf16.msra.mxu0 %v1925
  %1981 = vmatmul.bf16.gmra.mxu0 %v1950
  %v1982 = vpop.f32.mrf.mxu0
  %v1983 = vadd.f32 %v1965, %v1982
  %v1984 = vpop.f32.mrf.mxu0
  %v1985 = vadd.f32 %v1967, %v1984
  %1986 = vmatmul.bf16.gmra.mxu0 %v1953
  %v1987 = vpop.f32.mrf.mxu0
  %v1988 = vadd.f32 %v1970, %v1987
  %v1989 = vpop.f32.mrf.mxu0
  %1990 = vdwg.mxu0
  %1991 = vmatpush.bf16.msra.mxu0 %v1924
  %1992 = vmatpush.bf16.msra.mxu0 %v1922
  %1993 = vmatpush.bf16.msra.mxu0 %v1920
  %1994 = vmatpush.bf16.msra.mxu0 %v1918
  %1995 = vmatpush.bf16.msra.mxu0 %v1916
  %1996 = vmatpush.bf16.msra.mxu0 %v1914
  %1997 = vmatpush.bf16.msra.mxu0 %v1912
  %1998 = vmatpush.bf16.msra.mxu0 %v1910
  %1999 = vmatmul.bf16.gmra.mxu0 %v1828
  %v2000 = vpop.f32.mrf.mxu0
  %v2001 = vadd.f32 0.0, %v2000
  %v2002 = vpop.f32.mrf.mxu0
  %v2003 = vadd.f32 0.0, %v2002
  %2004 = vmatmul.bf16.gmra.mxu0 %v1843
  %v2005 = vpop.f32.mrf.mxu0
  %v2006 = vadd.f32 0.0, %v2005
  %v2007 = vpop.f32.mrf.mxu0
  %2008 = vdwg.mxu0
  %2009 = vmatpush.bf16.msra.mxu0 0
  %2010 = vmatpush.bf16.msra.mxu0 0
  %2011 = vmatpush.bf16.msra.mxu0 0
  %2012 = vmatpush.bf16.msra.mxu0 0
  %2013 = vmatpush.bf16.msra.mxu0 0
  %2014 = vmatpush.bf16.msra.mxu0 0
  %2015 = vmatpush.bf16.msra.mxu0 %v1928
  %2016 = vmatpush.bf16.msra.mxu0 %v1926
  %2017 = vmatmul.bf16.gmra.mxu0 %v1950
  %v2018 = vpop.f32.mrf.mxu0
  %v2019 = vadd.f32 %v2001, %v2018
  %v2020 = vpop.f32.mrf.mxu0
  %v2021 = vadd.f32 %v2003, %v2020
  %2022 = vmatmul.bf16.gmra.mxu0 %v1953
  %v2023 = vpop.f32.mrf.mxu0
  %v2024 = vadd.f32 %v2006, %v2023
  %v2025 = vpop.f32.mrf.mxu0
  %2026 = vdwg.mxu0
  %v2047 = vunpack.c.l.b16 %v1776
  %v2048 = vunpack.c.h.b16 %v1776
  %v2049 = vunpack.c.l.b16 %v1777
  %v2050 = vunpack.c.h.b16 %v1777
  %v2051 = vunpack.c.l.b16 %v1778
  %v2052 = vunpack.c.h.b16 %v1778
  %v2053 = vunpack.c.l.b16 %v1779
  %v2054 = vunpack.c.h.b16 %v1779
  %v2055 = vunpack.c.l.b16 %v1780
  %v2056 = vunpack.c.h.b16 %v1780
  %v2057 = vunpack.c.l.b16 %v1781
  %v2058 = vunpack.c.h.b16 %v1781
  %v2059 = vunpack.c.l.b16 %v1782
  %v2060 = vunpack.c.h.b16 %v1782
  %v2061 = vunpack.c.l.b16 %v1783
  %v2062 = vunpack.c.h.b16 %v1783
  %v2063 = vunpack.c.l.b16 %v1784
  %v2064 = vunpack.c.h.b16 %v1784
  %v2065 = vunpack.c.l.b16 %v1785
  %v2066 = vunpack.c.h.b16 %v1785
  %v2067 = vunpack.c.l.b16 %v1786
  %v2068 = vunpack.c.h.b16 %v1786
  %v2069 = vunpack.c.l.b16 %v1787
  %v2070 = vunpack.c.h.b16 %v1787
  %v2071 = vunpack.c.l.b16 %v1788
  %v2072 = vunpack.c.h.b16 %v1788
  %v2073 = vunpack.c.l.b16 %v1789
  %v2074 = vunpack.c.h.b16 %v1789
  %v2075 = vunpack.c.l.b16 %v1790
  %v2076 = vunpack.c.h.b16 %v1790
  %v2077 = vunpack.c.l.b16 %v1791
  %v2078 = vunpack.c.h.b16 %v1791
  %v2079 = vunpack.c.l.b16 %v1792
  %v2080 = vunpack.c.h.b16 %v1792
  %v2081 = vunpack.c.l.b16 %v1793
  %v2082 = vunpack.c.h.b16 %v1793
  %v2083 = vunpack.c.l.b16 %v1794
  %v2084 = vunpack.c.h.b16 %v1794
  %v2085 = vunpack.c.l.b16 %v1795
  %v2086 = vunpack.c.h.b16 %v1795
  %v2087 = vpack.c.b16 %v2049, %v2047
  %v2088 = vpack.c.b16 %v2050, %v2048
  %v2089 = vpack.c.b16 %v2053, %v2051
  %v2090 = vpack.c.b16 %v2054, %v2052
  %v2091 = vpack.c.b16 %v2057, %v2055
  %v2092 = vpack.c.b16 %v2058, %v2056
  %v2093 = vpack.c.b16 %v2061, %v2059
  %v2094 = vpack.c.b16 %v2062, %v2060
  %v2095 = vpack.c.b16 %v2065, %v2063
  %v2096 = vpack.c.b16 %v2066, %v2064
  %v2097 = vpack.c.b16 %v2069, %v2067
  %v2098 = vpack.c.b16 %v2070, %v2068
  %v2099 = vpack.c.b16 %v2073, %v2071
  %v2100 = vpack.c.b16 %v2074, %v2072
  %v2101 = vpack.c.b16 %v2077, %v2075
  %v2102 = vpack.c.b16 %v2078, %v2076
  %v2103 = vpack.c.b16 %v2081, %v2079
  %v2104 = vpack.c.b16 %v2082, %v2080
  %v2105 = vpack.c.b16 %v2085, %v2083
  %v2106 = vpack.c.b16 %v2086, %v2084
  %v2127 = vsel %vm1536, %v1773, 0
  %v2129 = vsel %vm1536, %v1775, 0
  %2131 = vmatpush.bf16.msra.mxu0 %v2101
  %2132 = vmatpush.bf16.msra.mxu0 %v2099
  %2133 = vmatpush.bf16.msra.mxu0 %v2097
  %2134 = vmatpush.bf16.msra.mxu0 %v2095
  %2135 = vmatpush.bf16.msra.mxu0 %v2093
  %2136 = vmatpush.bf16.msra.mxu0 %v2091
  %2137 = vmatpush.bf16.msra.mxu0 %v2089
  %2138 = vmatpush.bf16.msra.mxu0 %v2087
  %2139 = vmatmul.bf16.gmra.mxu0 %v1772
  %v2140 = vpop.f32.mrf.mxu0
  %v2141 = vadd.f32 %v1983, %v2140
  %v2142 = vpop.f32.mrf.mxu0
  %v2143 = vadd.f32 %v1985, %v2142
  %2144 = vmatmul.bf16.gmra.mxu0 %v1774
  %v2145 = vpop.f32.mrf.mxu0
  %v2146 = vadd.f32 %v1988, %v2145
  %v2147 = vpop.f32.mrf.mxu0
  %2148 = vdwg.mxu0
  %2149 = vmatpush.bf16.msra.mxu0 0
  %2150 = vmatpush.bf16.msra.mxu0 0
  %2151 = vmatpush.bf16.msra.mxu0 0
  %2152 = vmatpush.bf16.msra.mxu0 0
  %2153 = vmatpush.bf16.msra.mxu0 0
  %2154 = vmatpush.bf16.msra.mxu0 0
  %2155 = vmatpush.bf16.msra.mxu0 %v2105
  %2156 = vmatpush.bf16.msra.mxu0 %v2103
  %2157 = vmatmul.bf16.gmra.mxu0 %v2127
  %v2158 = vpop.f32.mrf.mxu0
  %v2159 = vadd.f32 %v2141, %v2158
  %v2160 = vpop.f32.mrf.mxu0
  %v2161 = vadd.f32 %v2143, %v2160
  %2162 = vmatmul.bf16.gmra.mxu0 %v2129
  %v2163 = vpop.f32.mrf.mxu0
  %v2164 = vadd.f32 %v2146, %v2163
  %v2165 = vpop.f32.mrf.mxu0
  %2166 = vdwg.mxu0
  %2167 = vmatpush.bf16.msra.mxu0 %v2102
  %2168 = vmatpush.bf16.msra.mxu0 %v2100
  %2169 = vmatpush.bf16.msra.mxu0 %v2098
  %2170 = vmatpush.bf16.msra.mxu0 %v2096
  %2171 = vmatpush.bf16.msra.mxu0 %v2094
  %2172 = vmatpush.bf16.msra.mxu0 %v2092
  %2173 = vmatpush.bf16.msra.mxu0 %v2090
  %2174 = vmatpush.bf16.msra.mxu0 %v2088
  %2175 = vmatmul.bf16.gmra.mxu0 %v1772
  %v2176 = vpop.f32.mrf.mxu0
  %v2177 = vadd.f32 %v2019, %v2176
  %v2178 = vpop.f32.mrf.mxu0
  %v2179 = vadd.f32 %v2021, %v2178
  %2180 = vmatmul.bf16.gmra.mxu0 %v1774
  %v2181 = vpop.f32.mrf.mxu0
  %v2182 = vadd.f32 %v2024, %v2181
  %v2183 = vpop.f32.mrf.mxu0
  %2184 = vdwg.mxu0
  %2185 = vmatpush.bf16.msra.mxu0 0
  %2186 = vmatpush.bf16.msra.mxu0 0
  %2187 = vmatpush.bf16.msra.mxu0 0
  %2188 = vmatpush.bf16.msra.mxu0 0
  %2189 = vmatpush.bf16.msra.mxu0 0
  %2190 = vmatpush.bf16.msra.mxu0 0
  %2191 = vmatpush.bf16.msra.mxu0 %v2106
  %2192 = vmatpush.bf16.msra.mxu0 %v2104
  %2193 = vmatmul.bf16.gmra.mxu0 %v2127
  %v2194 = vpop.f32.mrf.mxu0
  %v2195 = vadd.f32 %v2177, %v2194
  %v2196 = vpop.f32.mrf.mxu0
  %v2197 = vadd.f32 %v2179, %v2196
  %2198 = vmatmul.bf16.gmra.mxu0 %v2129
  %v2199 = vpop.f32.mrf.mxu0
  %v2200 = vadd.f32 %v2182, %v2199
  %v2201 = vpop.f32.mrf.mxu0
  %2202 = vdwg.mxu0
  %s2203 = scalar_lea.vmem %s6, 320
  %v2204 = vld [vmem:[%s2203] sm:$0xff]
  %v2205 = vld [vmem:[%s2203 + $0x8] sm:$0xff]
  %v2206 = vld [vmem:[%s2203 + $0x10] sm:$0xff]
  %v2207 = vld [vmem:[%s2203 + $0x18] sm:$0xff]
  %v2208 = vld [vmem:[%s2203 + $0x20] sm:$0xff]
  %v2209 = vld [vmem:[%s2203 + $0x28] sm:$0xff]
  %v2210 = vld [vmem:[%s2203 + $0x30] sm:$0xff]
  %v2211 = vld [vmem:[%s2203 + $0x38] sm:$0xff]
  %v2212 = vld [vmem:[%s2203 + $0x40] sm:$0xff]
  %v2213 = vld [vmem:[%s2203 + $0x48] sm:$0xff]
  %v2214 = vld [vmem:[%s2203 + $0x50] sm:$0xff]
  %v2215 = vld [vmem:[%s2203 + $0x58] sm:$0xff]
  %v2216 = vld [vmem:[%s2203 + $0x60] sm:$0xff]
  %v2217 = vld [vmem:[%s2203 + $0x68] sm:$0xff]
  %v2218 = vld [vmem:[%s2203 + $0x70] sm:$0xff]
  %v2219 = vld [vmem:[%s2203 + $0x78] sm:$0xff]
  %v2220 = vld [vmem:[%s2203 + $0x80] sm:$0xff]
  %v2221 = vld [vmem:[%s2203 + $0x88] sm:$0xff]
  %v2222 = vld [vmem:[%s2203 + $0x90] sm:$0xff]
  %v2223 = vld [vmem:[%s2203 + $0x98] sm:$0xff]
  %v2228 = vrot.slane %v1772, 1
  %v2229 = vrot.slane %v1774, 1
  %v2230 = vsel %vm256, %v2228, %v2229
  %v2231 = vrot.slane %v1773, 1
  %v2232 = vrot.slane %v1775, 1
  %v2233 = vsel %vm256, %v2231, %v2232
  %v2256 = vunpack.c.l.b16 %v2204
  %v2257 = vunpack.c.h.b16 %v2204
  %v2258 = vunpack.c.l.b16 %v2205
  %v2259 = vunpack.c.h.b16 %v2205
  %v2260 = vunpack.c.l.b16 %v2206
  %v2261 = vunpack.c.h.b16 %v2206
  %v2262 = vunpack.c.l.b16 %v2207
  %v2263 = vunpack.c.h.b16 %v2207
  %v2264 = vunpack.c.l.b16 %v2208
  %v2265 = vunpack.c.h.b16 %v2208
  %v2266 = vunpack.c.l.b16 %v2209
  %v2267 = vunpack.c.h.b16 %v2209
  %v2268 = vunpack.c.l.b16 %v2210
  %v2269 = vunpack.c.h.b16 %v2210
  %v2270 = vunpack.c.l.b16 %v2211
  %v2271 = vunpack.c.h.b16 %v2211
  %v2272 = vunpack.c.l.b16 %v2212
  %v2273 = vunpack.c.h.b16 %v2212
  %v2274 = vunpack.c.l.b16 %v2213
  %v2275 = vunpack.c.h.b16 %v2213
  %v2276 = vunpack.c.l.b16 %v2214
  %v2277 = vunpack.c.h.b16 %v2214
  %v2278 = vunpack.c.l.b16 %v2215
  %v2279 = vunpack.c.h.b16 %v2215
  %v2280 = vunpack.c.l.b16 %v2216
  %v2281 = vunpack.c.h.b16 %v2216
  %v2282 = vunpack.c.l.b16 %v2217
  %v2283 = vunpack.c.h.b16 %v2217
  %v2284 = vunpack.c.l.b16 %v2218
  %v2285 = vunpack.c.h.b16 %v2218
  %v2286 = vunpack.c.l.b16 %v2219
  %v2287 = vunpack.c.h.b16 %v2219
  %v2288 = vunpack.c.l.b16 %v2220
  %v2289 = vunpack.c.h.b16 %v2220
  %v2290 = vunpack.c.l.b16 %v2221
  %v2291 = vunpack.c.h.b16 %v2221
  %v2292 = vunpack.c.l.b16 %v2222
  %v2293 = vunpack.c.h.b16 %v2222
  %v2294 = vunpack.c.l.b16 %v2223
  %v2295 = vunpack.c.h.b16 %v2223
  %v2296 = vpack.c.b16 %v2258, %v2256
  %v2297 = vpack.c.b16 %v2259, %v2257
  %v2298 = vpack.c.b16 %v2262, %v2260
  %v2299 = vpack.c.b16 %v2263, %v2261
  %v2300 = vpack.c.b16 %v2266, %v2264
  %v2301 = vpack.c.b16 %v2267, %v2265
  %v2302 = vpack.c.b16 %v2270, %v2268
  %v2303 = vpack.c.b16 %v2271, %v2269
  %v2304 = vpack.c.b16 %v2274, %v2272
  %v2305 = vpack.c.b16 %v2275, %v2273
  %v2306 = vpack.c.b16 %v2278, %v2276
  %v2307 = vpack.c.b16 %v2279, %v2277
  %v2308 = vpack.c.b16 %v2282, %v2280
  %v2309 = vpack.c.b16 %v2283, %v2281
  %v2310 = vpack.c.b16 %v2286, %v2284
  %v2311 = vpack.c.b16 %v2287, %v2285
  %v2312 = vpack.c.b16 %v2290, %v2288
  %v2313 = vpack.c.b16 %v2291, %v2289
  %v2314 = vpack.c.b16 %v2294, %v2292
  %v2315 = vpack.c.b16 %v2295, %v2293
  %v2337 = vsel %vm1536, %v2233, 0
  %v2340 = vsel %vm1536, %v2232, 0
  %2342 = vmatpush.bf16.msra.mxu0 %v2310
  %2343 = vmatpush.bf16.msra.mxu0 %v2308
  %2344 = vmatpush.bf16.msra.mxu0 %v2306
  %2345 = vmatpush.bf16.msra.mxu0 %v2304
  %2346 = vmatpush.bf16.msra.mxu0 %v2302
  %2347 = vmatpush.bf16.msra.mxu0 %v2300
  %2348 = vmatpush.bf16.msra.mxu0 %v2298
  %2349 = vmatpush.bf16.msra.mxu0 %v2296
  %2350 = vmatmul.bf16.gmra.mxu0 %v2230
  %v2351 = vpop.f32.mrf.mxu0
  %v2352 = vadd.f32 0.0, %v2351
  %v2353 = vpop.f32.mrf.mxu0
  %v2354 = vadd.f32 0.0, %v2353
  %2355 = vmatmul.bf16.gmra.mxu0 %v2229
  %v2356 = vpop.f32.mrf.mxu0
  %v2357 = vadd.f32 0.0, %v2356
  %v2358 = vpop.f32.mrf.mxu0
  %2359 = vdwg.mxu0
  %2360 = vmatpush.bf16.msra.mxu0 0
  %2361 = vmatpush.bf16.msra.mxu0 0
  %2362 = vmatpush.bf16.msra.mxu0 0
  %2363 = vmatpush.bf16.msra.mxu0 0
  %2364 = vmatpush.bf16.msra.mxu0 0
  %2365 = vmatpush.bf16.msra.mxu0 0
  %2366 = vmatpush.bf16.msra.mxu0 %v2314
  %2367 = vmatpush.bf16.msra.mxu0 %v2312
  %2368 = vmatmul.bf16.gmra.mxu0 %v2337
  %v2369 = vpop.f32.mrf.mxu0
  %v2370 = vadd.f32 %v2352, %v2369
  %v2371 = vpop.f32.mrf.mxu0
  %v2372 = vadd.f32 %v2354, %v2371
  %2373 = vmatmul.bf16.gmra.mxu0 %v2340
  %v2374 = vpop.f32.mrf.mxu0
  %v2375 = vadd.f32 %v2357, %v2374
  %v2376 = vpop.f32.mrf.mxu0
  %2377 = vdwg.mxu0
  %2378 = vmatpush.bf16.msra.mxu0 %v2311
  %2379 = vmatpush.bf16.msra.mxu0 %v2309
  %2380 = vmatpush.bf16.msra.mxu0 %v2307
  %2381 = vmatpush.bf16.msra.mxu0 %v2305
  %2382 = vmatpush.bf16.msra.mxu0 %v2303
  %2383 = vmatpush.bf16.msra.mxu0 %v2301
  %2384 = vmatpush.bf16.msra.mxu0 %v2299
  %2385 = vmatpush.bf16.msra.mxu0 %v2297
  %2386 = vmatmul.bf16.gmra.mxu0 %v2230
  %v2387 = vpop.f32.mrf.mxu0
  %v2388 = vadd.f32 0.0, %v2387
  %v2389 = vpop.f32.mrf.mxu0
  %v2390 = vadd.f32 0.0, %v2389
  %2391 = vmatmul.bf16.gmra.mxu0 %v2229
  %v2392 = vpop.f32.mrf.mxu0
  %v2393 = vadd.f32 0.0, %v2392
  %v2394 = vpop.f32.mrf.mxu0
  %2395 = vdwg.mxu0
  %2396 = vmatpush.bf16.msra.mxu0 0
  %2397 = vmatpush.bf16.msra.mxu0 0
  %2398 = vmatpush.bf16.msra.mxu0 0
  %2399 = vmatpush.bf16.msra.mxu0 0
  %2400 = vmatpush.bf16.msra.mxu0 0
  %2401 = vmatpush.bf16.msra.mxu0 0
  %2402 = vmatpush.bf16.msra.mxu0 %v2315
  %2403 = vmatpush.bf16.msra.mxu0 %v2313
  %2404 = vmatmul.bf16.gmra.mxu0 %v2337
  %v2405 = vpop.f32.mrf.mxu0
  %v2406 = vadd.f32 %v2388, %v2405
  %v2407 = vpop.f32.mrf.mxu0
  %v2408 = vadd.f32 %v2390, %v2407
  %2409 = vmatmul.bf16.gmra.mxu0 %v2340
  %v2410 = vpop.f32.mrf.mxu0
  %v2411 = vadd.f32 %v2393, %v2410
  %v2412 = vpop.f32.mrf.mxu0
  %2413 = vdwg.mxu0
  %v2414 = vadd.f32 %v2159, %v2370
  %v2415 = vadd.f32 %v2195, %v2406
  %v2416 = vadd.f32 %v2161, %v2372
  %v2417 = vadd.f32 %v2197, %v2408
  %v2418 = vadd.f32 %v2164, %v2375
  %v2419 = vadd.f32 %v2200, %v2411
  %s2420 = scalar_lea.vmem %s1, 66
  %v2421 = vld [vmem:[%s2420] ss:$8 sm:$0x3]
  %s2422 = scalar_lea.vmem %s1, 67
  %v2423 = vld [vmem:[%s2422] ss:$8 sm:$0x3]
  %s2424 = scalar_lea.vmem %s1, 68
  %v2425 = vld [vmem:[%s2424] ss:$8 sm:$0x3]
  %v2427 = vperm.slane %v2421, 0
  %v2428 = vperm.slane %v2421, 1
  %v2431 = vadd.f32 %v2414, %v2427
  %v2432 = vadd.f32 %v2415, %v2428
  %v2433 = vadd.f32 %v2416, %v2427
  %v2434 = vadd.f32 %v2417, %v2428
  %v2435 = vadd.f32 %v2418, %v2427
  %v2436 = vadd.f32 %v2419, %v2428
  %vm2437 = vcmp.gt.f32.partialorder %v2431, 0.0
  %vm2438 = vcmp.gt.f32.partialorder %v2432, 0.0
  %vm2439 = vcmp.gt.f32.partialorder %v2433, 0.0
  %vm2440 = vcmp.gt.f32.partialorder %v2434, 0.0
  %vm2441 = vcmp.gt.f32.partialorder %v2435, 0.0
  %vm2442 = vcmp.gt.f32.partialorder %v2436, 0.0
  %v2443 = vmin.f32 %v2431, 0.0
  %v2444 = vmin.f32 %v2432, 0.0
  %v2445 = vmin.f32 %v2433, 0.0
  %v2446 = vmin.f32 %v2434, 0.0
  %v2447 = vmin.f32 %v2435, 0.0
  %v2448 = vmin.f32 %v2436, 0.0
  %v2449 = vmul.f32 %v2443, 1.442695
  %v2450 = vpow.pop %v2449
  %v2451 = vmul.f32 %v2444, 1.442695
  %v2452 = vpow.pop %v2451
  %v2453 = vmul.f32 %v2445, 1.442695
  %v2454 = vpow.pop %v2453
  %v2455 = vmul.f32 %v2446, 1.442695
  %v2456 = vpow.pop %v2455
  %v2457 = vmul.f32 %v2447, 1.442695
  %v2458 = vpow.pop %v2457
  %v2459 = vmul.f32 %v2448, 1.442695
  %v2460 = vpow.pop %v2459
  %v2461 = vsub.f32 %v2450, 1.0
  %v2462 = vsub.f32 %v2452, 1.0
  %v2463 = vsub.f32 %v2454, 1.0
  %v2464 = vsub.f32 %v2456, 1.0
  %v2465 = vsub.f32 %v2458, 1.0
  %v2466 = vsub.f32 %v2460, 1.0
  %v2467 = vsel %vm2437, %v2431, %v2461
  %v2468 = vsel %vm2438, %v2432, %v2462
  %v2469 = vsel %vm2439, %v2433, %v2463
  %v2470 = vsel %vm2440, %v2434, %v2464
  %v2471 = vsel %vm2441, %v2435, %v2465
  %v2472 = vsel %vm2442, %v2436, %v2466
  %v2473 = vld [vmem:[%s1] sm:$0xff]
  %v2474 = vld [vmem:[%s1 + $0x10] sm:$0xff]
  %v2475 = vld [vmem:[%s1 + $0x20] sm:$0x3f]
  %vm2476 = vcmp.gt.f32.partialorder %v2473, 0.5
  %vm2477 = vcmp.gt.f32.partialorder %v2474, 0.5
  %vm2478 = vcmp.gt.f32.partialorder %v2475, 0.5
  %v2479 = vsel %vm2476, 1, 0
  %v2480 = vsel %vm2477, 1, 0
  %v2481 = vsel %vm2478, 1, 0
  %2482 = vset.pattern.permute.xlu0 2
  %2483 = vperm.xlu0 %2482, %v2479
  %v2484 = vpop.permute.xlu0 %2483
  %2485 = vset.pattern.permute.xlu0 2
  %2486 = vperm.xlu0 %2485, %v2480
  %v2487 = vpop.permute.xlu0 %2486
  %2488 = vset.pattern.permute.xlu0 2
  %2489 = vperm.xlu0 %2488, %v2481
  %v2490 = vpop.permute.xlu0 %2489
  %vm2491 = vcmp.eq.s32.totalorder %v2484, 1
  %vm2492 = vcmp.eq.s32.totalorder %v2487, 1
  %vm2493 = vcmp.eq.s32.totalorder %v2490, 1
  %v2494 = vsel %vm2491, %v2467, 0.0
  %v2495 = vsel %vm2491, %v2468, 0.0
  %v2496 = vsel %vm2492, %v2469, 0.0
  %v2497 = vsel %vm2492, %v2470, 0.0
  %v2498 = vsel %vm2493, %v2471, 0.0
  %v2499 = vsel %vm2493, %v2472, 0.0
  %v2500 = vadd.f32 %v2494, %v2496
  %vm2501 = vcmask 1045504
  %v2502 = vsel %vm2501, %v2498, 0.0
  %v2503 = vadd.f32 %v2500, %v2502
  %v2504 = vrot.slane %v2503, 4
  %v2505 = vadd.f32 %v2503, %v2504
  %v2506 = vrot.slane %v2505, 2
  %v2507 = vadd.f32 %v2505, %v2506
  %v2508 = vrot.slane %v2507, 1
  %v2509 = vadd.f32 %v2507, %v2508
  %v2510 = vadd.f32 %v2495, %v2497
  %v2511 = vsel %vm2501, %v2499, 0.0
  %v2512 = vadd.f32 %v2510, %v2511
  %v2513 = vrot.slane %v2512, 4
  %v2514 = vadd.f32 %v2512, %v2513
  %v2515 = vrot.slane %v2514, 2
  %v2516 = vadd.f32 %v2514, %v2515
  %v2517 = vrot.slane %v2516, 1
  %v2518 = vadd.f32 %v2516, %v2517
  %v2519 = vmul.f32 %v2494, %v2494
  %v2520 = vmul.f32 %v2495, %v2495
  %v2521 = vmul.f32 %v2496, %v2496
  %v2522 = vmul.f32 %v2497, %v2497
  %v2523 = vmul.f32 %v2498, %v2498
  %v2524 = vmul.f32 %v2499, %v2499
  %v2525 = vadd.f32 %v2519, %v2521
  %v2526 = vsel %vm2501, %v2523, 0.0
  %v2527 = vadd.f32 %v2525, %v2526
  %v2528 = vrot.slane %v2527, 4
  %v2529 = vadd.f32 %v2527, %v2528
  %v2530 = vrot.slane %v2529, 2
  %v2531 = vadd.f32 %v2529, %v2530
  %v2532 = vrot.slane %v2531, 1
  %v2533 = vadd.f32 %v2531, %v2532
  %v2534 = vadd.f32 %v2520, %v2522
  %v2535 = vsel %vm2501, %v2524, 0.0
  %v2536 = vadd.f32 %v2534, %v2535
  %v2537 = vrot.slane %v2536, 4
  %v2538 = vadd.f32 %v2536, %v2537
  %v2539 = vrot.slane %v2538, 2
  %v2540 = vadd.f32 %v2538, %v2539
  %v2541 = vrot.slane %v2540, 1
  %v2542 = vadd.f32 %v2540, %v2541
  %v2543 = vsel %vm513, %v2509, %v2533
  %v2544 = vsel %vm513, %v2518, %v2542
  %v2545 = vld [vmem:[%s7] sm:$0xff]
  %v2546 = vld [vmem:[%s7 + $0x8] sm:$0xff]
  %v2547 = vld [vmem:[%s7 + $0x10] sm:$0xff]
  %v2548 = vld [vmem:[%s7 + $0x18] sm:$0xff]
  %v2549 = vld [vmem:[%s7 + $0x20] sm:$0xff]
  %v2550 = vld [vmem:[%s7 + $0x28] sm:$0xff]
  %v2551 = vld [vmem:[%s7 + $0x30] sm:$0xff]
  %v2552 = vld [vmem:[%s7 + $0x38] sm:$0xff]
  %v2553 = vld [vmem:[%s7 + $0x40] sm:$0xff]
  %v2554 = vld [vmem:[%s7 + $0x48] sm:$0xff]
  %v2555 = vld [vmem:[%s7 + $0x50] sm:$0xff]
  %v2556 = vld [vmem:[%s7 + $0x58] sm:$0xff]
  %v2557 = vld [vmem:[%s7 + $0x60] sm:$0xff]
  %v2558 = vld [vmem:[%s7 + $0x68] sm:$0xff]
  %v2559 = vld [vmem:[%s7 + $0x70] sm:$0xff]
  %v2560 = vld [vmem:[%s7 + $0x78] sm:$0xff]
  %v2561 = vld [vmem:[%s7 + $0x80] sm:$0xff]
  %v2562 = vld [vmem:[%s7 + $0x88] sm:$0xff]
  %v2563 = vld [vmem:[%s7 + $0x90] sm:$0xff]
  %v2564 = vld [vmem:[%s7 + $0x98] sm:$0xff]
  %v2565 = vld [vmem:[%s7 + $0xa0] sm:$0xff]
  %v2566 = vld [vmem:[%s7 + $0xa8] sm:$0xff]
  %v2567 = vld [vmem:[%s7 + $0xb0] sm:$0xff]
  %v2568 = vld [vmem:[%s7 + $0xb8] sm:$0xff]
  %v2569 = vld [vmem:[%s7 + $0xc0] sm:$0xff]
  %v2570 = vld [vmem:[%s7 + $0xc8] sm:$0xff]
  %v2571 = vld [vmem:[%s7 + $0xd0] sm:$0xff]
  %v2572 = vld [vmem:[%s7 + $0xd8] sm:$0xff]
  %v2573 = vld [vmem:[%s7 + $0xe0] sm:$0xff]
  %v2574 = vld [vmem:[%s7 + $0xe8] sm:$0xff]
  %v2575 = vld [vmem:[%s7 + $0xf0] sm:$0xff]
  %v2576 = vld [vmem:[%s7 + $0xf8] sm:$0xff]
  %v2577 = vld [vmem:[%s7 + $0x100] sm:$0xff]
  %v2578 = vld [vmem:[%s7 + $0x108] sm:$0xff]
  %v2579 = vld [vmem:[%s7 + $0x110] sm:$0xff]
  %v2580 = vld [vmem:[%s7 + $0x118] sm:$0xff]
  %v2581 = vld [vmem:[%s7 + $0x120] sm:$0xff]
  %v2582 = vld [vmem:[%s7 + $0x128] sm:$0xff]
  %v2583 = vld [vmem:[%s7 + $0x130] sm:$0xff]
  %v2584 = vld [vmem:[%s7 + $0x138] sm:$0xff]
  %v2585 = vld [vmem:[%s7 + $0x140] sm:$0xff]
  %v2586 = vld [vmem:[%s7 + $0x148] sm:$0xff]
  %v2587 = vld [vmem:[%s7 + $0x150] sm:$0xff]
  %v2588 = vld [vmem:[%s7 + $0x158] sm:$0xff]
  %v2589 = vld [vmem:[%s7 + $0x160] sm:$0xff]
  %v2590 = vld [vmem:[%s7 + $0x168] sm:$0xff]
  %v2591 = vld [vmem:[%s7 + $0x170] sm:$0xff]
  %v2592 = vld [vmem:[%s7 + $0x178] sm:$0xff]
  %v2593 = vld [vmem:[%s7 + $0x180] sm:$0xff]
  %v2594 = vld [vmem:[%s7 + $0x188] sm:$0xff]
  %v2595 = vld [vmem:[%s7 + $0x190] sm:$0xff]
  %v2596 = vld [vmem:[%s7 + $0x198] sm:$0xff]
  %v2597 = vld [vmem:[%s7 + $0x1a0] sm:$0xff]
  %v2598 = vld [vmem:[%s7 + $0x1a8] sm:$0xff]
  %v2599 = vld [vmem:[%s7 + $0x1b0] sm:$0xff]
  %v2600 = vld [vmem:[%s7 + $0x1b8] sm:$0xff]
  %v2601 = vld [vmem:[%s7 + $0x1c0] sm:$0xff]
  %v2602 = vld [vmem:[%s7 + $0x1c8] sm:$0xff]
  %v2603 = vld [vmem:[%s7 + $0x1d0] sm:$0xff]
  %v2604 = vld [vmem:[%s7 + $0x1d8] sm:$0xff]
  %v2605 = vld [vmem:[%s7 + $0x1e0] sm:$0xff]
  %v2606 = vld [vmem:[%s7 + $0x1e8] sm:$0xff]
  %v2607 = vld [vmem:[%s7 + $0x1f0] sm:$0xff]
  %v2608 = vld [vmem:[%s7 + $0x1f8] sm:$0xff]
  %2609 = vmatpush.msra.mxu0 %v2575
  %2610 = vmatpush.msra.mxu0 %v2573
  %2611 = vmatpush.msra.mxu0 %v2571
  %2612 = vmatpush.msra.mxu0 %v2569
  %2613 = vmatpush.msra.mxu0 %v2567
  %2614 = vmatpush.msra.mxu0 %v2565
  %2615 = vmatpush.msra.mxu0 %v2563
  %2616 = vmatpush.msra.mxu0 %v2561
  %2617 = vmatpush.msra.mxu0 %v2559
  %2618 = vmatpush.msra.mxu0 %v2557
  %2619 = vmatpush.msra.mxu0 %v2555
  %2620 = vmatpush.msra.mxu0 %v2553
  %2621 = vmatpush.msra.mxu0 %v2551
  %2622 = vmatpush.msra.mxu0 %v2549
  %2623 = vmatpush.msra.mxu0 %v2547
  %2624 = vmatpush.msra.mxu0 %v2545
  %2625 = vmatmul.f32.gmra.mxu0 %v2543
  %v2626 = vpop.f32.mrf.mxu0
  %v2627 = vadd.f32 0.0, %v2626
  %2628 = vdwg.mxu0
  %2629 = vmatpush.msra.mxu0 %v2607
  %2630 = vmatpush.msra.mxu0 %v2605
  %2631 = vmatpush.msra.mxu0 %v2603
  %2632 = vmatpush.msra.mxu0 %v2601
  %2633 = vmatpush.msra.mxu0 %v2599
  %2634 = vmatpush.msra.mxu0 %v2597
  %2635 = vmatpush.msra.mxu0 %v2595
  %2636 = vmatpush.msra.mxu0 %v2593
  %2637 = vmatpush.msra.mxu0 %v2591
  %2638 = vmatpush.msra.mxu0 %v2589
  %2639 = vmatpush.msra.mxu0 %v2587
  %2640 = vmatpush.msra.mxu0 %v2585
  %2641 = vmatpush.msra.mxu0 %v2583
  %2642 = vmatpush.msra.mxu0 %v2581
  %2643 = vmatpush.msra.mxu0 %v2579
  %2644 = vmatpush.msra.mxu0 %v2577
  %2645 = vmatmul.f32.gmra.mxu0 %v2544
  %v2646 = vpop.f32.mrf.mxu0
  %v2647 = vadd.f32 %v2627, %v2646
  %2648 = vdwg.mxu0
  %2649 = vmatpush.msra.mxu0 %v2576
  %2650 = vmatpush.msra.mxu0 %v2574
  %2651 = vmatpush.msra.mxu0 %v2572
  %2652 = vmatpush.msra.mxu0 %v2570
  %2653 = vmatpush.msra.mxu0 %v2568
  %2654 = vmatpush.msra.mxu0 %v2566
  %2655 = vmatpush.msra.mxu0 %v2564
  %2656 = vmatpush.msra.mxu0 %v2562
  %2657 = vmatpush.msra.mxu0 %v2560
  %2658 = vmatpush.msra.mxu0 %v2558
  %2659 = vmatpush.msra.mxu0 %v2556
  %2660 = vmatpush.msra.mxu0 %v2554
  %2661 = vmatpush.msra.mxu0 %v2552
  %2662 = vmatpush.msra.mxu0 %v2550
  %2663 = vmatpush.msra.mxu0 %v2548
  %2664 = vmatpush.msra.mxu0 %v2546
  %2665 = vmatmul.f32.gmra.mxu0 %v2543
  %v2666 = vpop.f32.mrf.mxu0
  %v2667 = vadd.f32 0.0, %v2666
  %2668 = vdwg.mxu0
  %2669 = vmatpush.msra.mxu0 %v2608
  %2670 = vmatpush.msra.mxu0 %v2606
  %2671 = vmatpush.msra.mxu0 %v2604
  %2672 = vmatpush.msra.mxu0 %v2602
  %2673 = vmatpush.msra.mxu0 %v2600
  %2674 = vmatpush.msra.mxu0 %v2598
  %2675 = vmatpush.msra.mxu0 %v2596
  %2676 = vmatpush.msra.mxu0 %v2594
  %2677 = vmatpush.msra.mxu0 %v2592
  %2678 = vmatpush.msra.mxu0 %v2590
  %2679 = vmatpush.msra.mxu0 %v2588
  %2680 = vmatpush.msra.mxu0 %v2586
  %2681 = vmatpush.msra.mxu0 %v2584
  %2682 = vmatpush.msra.mxu0 %v2582
  %2683 = vmatpush.msra.mxu0 %v2580
  %2684 = vmatpush.msra.mxu0 %v2578
  %2685 = vmatmul.f32.gmra.mxu0 %v2544
  %v2686 = vpop.f32.mrf.mxu0
  %v2687 = vadd.f32 %v2667, %v2686
  %2688 = vdwg.mxu0
  %v2689 = vmul.f32 %v2647, 0.0078125
  %v2690 = vmul.f32 %v2687, 0.0078125
  %v2691 = vmul.f32 %v2689, %v2689
  %v2692 = vmul.f32 %v2690, %v2690
  %v2695 = vrot.slane %v2691, 7
  %v2696 = vrot.slane %v2692, 7
  %v2699 = vsub.f32 %v2689, %v2695
  %v2700 = vsub.f32 %v2690, %v2696
  %v2701 = vmax.f32 %v2699, 0.0
  %v2702 = vmax.f32 %v2700, 0.0
  %v2703 = vadd.f32 %v2701, 1e-05
  %v2704 = vadd.f32 %v2702, 1e-05
  %v2705 = vrsqrt.pop %v2703
  %v2706 = vmul.f32 %v2705, %v2703
  %v2707 = vmul.f32 %v2706, %v2705
  %v2708 = vmul.f32 0.5, %v2707
  %v2709 = vsub.f32 1.5, %v2708
  %v2710 = vmul.f32 %v2705, %v2709
  %vm2711 = vweird.f32 %v2703
  %vm2712 = vweird.f32 %v2705
  %vm2713 = vmor %vm2711, %vm2712
  %v2714 = vsel %vm2713, %v2705, %v2710
  %v2715 = vrsqrt.pop %v2704
  %v2716 = vmul.f32 %v2715, %v2704
  %v2717 = vmul.f32 %v2716, %v2715
  %v2718 = vmul.f32 0.5, %v2717
  %v2719 = vsub.f32 1.5, %v2718
  %v2720 = vmul.f32 %v2715, %v2719
  %vm2721 = vweird.f32 %v2704
  %vm2722 = vweird.f32 %v2715
  %vm2723 = vmor %vm2721, %vm2722
  %v2724 = vsel %vm2723, %v2715, %v2720
  %2727 = vst [vmem:[#allocation1] sm:$0xff] %v2714
  %2728 = vst [vmem:[#allocation1 + $0x9] sm:$0xff] %v2724
  %s2729 = scalar_lea.vmem [#allocation1], 1
  %v2730 = vld [vmem:[%s2729] ss:$9 sm:$0xff]
  %v2732 = vmul.f32 %v2423, %v2730
  %v2734 = vperm.slane %v2732, 0
  %v2735 = vperm.slane %v2732, 1
  %v2738 = vmul.f32 %v2689, %v2734
  %v2739 = vmul.f32 %v2690, %v2735
  %v2742 = vrot.slane %v2739, 7
  %v2743 = vsel %vm513, %v2738, %v2742
  %v2745 = vsub.f32 %v2425, %v2743
  %v2746 = vmul.f32 %v2494, %v2734
  %v2747 = vmul.f32 %v2495, %v2735
  %v2748 = vmul.f32 %v2496, %v2734
  %v2749 = vmul.f32 %v2497, %v2735
  %v2750 = vmul.f32 %v2498, %v2734
  %v2751 = vmul.f32 %v2499, %v2735
  %v2753 = vperm.slane %v2745, 0
  %v2754 = vperm.slane %v2745, 1
  %v2757 = vadd.f32 %v2746, %v2753
  %v2758 = vadd.f32 %v2747, %v2754
  %v2759 = vadd.f32 %v2748, %v2753
  %v2760 = vadd.f32 %v2749, %v2754
  %v2761 = vadd.f32 %v2750, %v2753
  %v2762 = vadd.f32 %v2751, %v2754
  %v2763 = vpack.c.bf16 %v2759, %v2757
  %v2764 = vpack.c.bf16 %v2760, %v2758
  %v2765 = vpack.c.bf16 %v2761, %v2761
  %v2766 = vpack.c.bf16 %v2762, %v2762
  %v2767 = vld [vmem:[%s8] sm:$0xff]
  %v2768 = vld [vmem:[%s8 + $0x8] sm:$0xff]
  %v2769 = vld [vmem:[%s8 + $0x10] sm:$0xff]
  %v2770 = vld [vmem:[%s8 + $0x18] sm:$0xff]
  %v2771 = vld [vmem:[%s8 + $0x20] sm:$0xff]
  %v2772 = vld [vmem:[%s8 + $0x28] sm:$0xff]
  %v2773 = vld [vmem:[%s8 + $0x30] sm:$0xff]
  %v2774 = vld [vmem:[%s8 + $0x38] sm:$0xff]
  %v2775 = vld [vmem:[%s8 + $0x40] sm:$0xff]
  %v2776 = vld [vmem:[%s8 + $0x48] sm:$0xff]
  %v2777 = vld [vmem:[%s8 + $0x50] sm:$0xff]
  %v2778 = vld [vmem:[%s8 + $0x58] sm:$0xff]
  %v2779 = vld [vmem:[%s8 + $0x60] sm:$0xff]
  %v2780 = vld [vmem:[%s8 + $0x68] sm:$0xff]
  %v2781 = vld [vmem:[%s8 + $0x70] sm:$0xff]
  %v2782 = vld [vmem:[%s8 + $0x78] sm:$0xff]
  %v2783 = vld [vmem:[%s8 + $0x80] sm:$0xff]
  %v2784 = vld [vmem:[%s8 + $0x88] sm:$0xff]
  %v2785 = vld [vmem:[%s8 + $0x90] sm:$0xff]
  %v2786 = vld [vmem:[%s8 + $0x98] sm:$0xff]
  %v2787 = vld [vmem:[%s8 + $0xa0] sm:$0xff]
  %v2788 = vld [vmem:[%s8 + $0xa8] sm:$0xff]
  %v2789 = vld [vmem:[%s8 + $0xb0] sm:$0xff]
  %v2790 = vld [vmem:[%s8 + $0xb8] sm:$0xff]
  %v2791 = vld [vmem:[%s8 + $0xc0] sm:$0xff]
  %v2792 = vld [vmem:[%s8 + $0xc8] sm:$0xff]
  %v2793 = vld [vmem:[%s8 + $0xd0] sm:$0xff]
  %v2794 = vld [vmem:[%s8 + $0xd8] sm:$0xff]
  %v2795 = vld [vmem:[%s8 + $0xe0] sm:$0xff]
  %v2796 = vld [vmem:[%s8 + $0xe8] sm:$0xff]
  %v2797 = vld [vmem:[%s8 + $0xf0] sm:$0xff]
  %v2798 = vld [vmem:[%s8 + $0xf8] sm:$0xff]
  %s2799 = scalar_lea.vmem %s8, 256
  %v2800 = vld [vmem:[%s2799] sm:$0xff]
  %v2801 = vld [vmem:[%s2799 + $0x8] sm:$0xff]
  %v2802 = vld [vmem:[%s2799 + $0x10] sm:$0xff]
  %v2803 = vld [vmem:[%s2799 + $0x18] sm:$0xff]
  %v2804 = vld [vmem:[%s2799 + $0x20] sm:$0xff]
  %v2805 = vld [vmem:[%s2799 + $0x28] sm:$0xff]
  %v2806 = vld [vmem:[%s2799 + $0x30] sm:$0xff]
  %v2807 = vld [vmem:[%s2799 + $0x38] sm:$0xff]
  %v2808 = vld [vmem:[%s2799 + $0x40] sm:$0xff]
  %v2809 = vld [vmem:[%s2799 + $0x48] sm:$0xff]
  %v2810 = vld [vmem:[%s2799 + $0x50] sm:$0xff]
  %v2811 = vld [vmem:[%s2799 + $0x58] sm:$0xff]
  %v2812 = vld [vmem:[%s2799 + $0x60] sm:$0xff]
  %v2813 = vld [vmem:[%s2799 + $0x68] sm:$0xff]
  %v2814 = vld [vmem:[%s2799 + $0x70] sm:$0xff]
  %v2815 = vld [vmem:[%s2799 + $0x78] sm:$0xff]
  %v2816 = vld [vmem:[%s2799 + $0x80] sm:$0xff]
  %v2817 = vld [vmem:[%s2799 + $0x88] sm:$0xff]
  %v2818 = vld [vmem:[%s2799 + $0x90] sm:$0xff]
  %v2819 = vld [vmem:[%s2799 + $0x98] sm:$0xff]
  %v2820 = vld [vmem:[%s2799 + $0xa0] sm:$0xff]
  %v2821 = vld [vmem:[%s2799 + $0xa8] sm:$0xff]
  %v2822 = vld [vmem:[%s2799 + $0xb0] sm:$0xff]
  %v2823 = vld [vmem:[%s2799 + $0xb8] sm:$0xff]
  %v2824 = vld [vmem:[%s2799 + $0xc0] sm:$0xff]
  %v2825 = vld [vmem:[%s2799 + $0xc8] sm:$0xff]
  %v2826 = vld [vmem:[%s2799 + $0xd0] sm:$0xff]
  %v2827 = vld [vmem:[%s2799 + $0xd8] sm:$0xff]
  %v2828 = vld [vmem:[%s2799 + $0xe0] sm:$0xff]
  %v2829 = vld [vmem:[%s2799 + $0xe8] sm:$0xff]
  %v2830 = vld [vmem:[%s2799 + $0xf0] sm:$0xff]
  %v2831 = vld [vmem:[%s2799 + $0xf8] sm:$0xff]
  %v2833 = vshrl.u32 %v2763, 16
  %v2835 = vshll.u32 %v2763, 16
  %v2837 = vrot.slane %v2835, 1
  %v2838 = vor.u32 %v2833, %v2837
  %v2840 = vshll.u32 %v2765, 16
  %v2842 = vrot.slane %v2840, 1
  %v2843 = vsel %vm60, %v2838, %v2842
  %v2845 = vshrl.u32 %v2764, 16
  %v2847 = vshll.u32 %v2764, 16
  %v2849 = vrot.slane %v2847, 1
  %v2850 = vor.u32 %v2845, %v2849
  %v2852 = vshll.u32 %v2766, 16
  %v2854 = vrot.slane %v2852, 1
  %v2855 = vsel %vm60, %v2850, %v2854
  %v2856 = vshrl.u32 %v2765, 16
  %v2858 = vor.u32 %v2856, %v2842
  %v2859 = vshrl.u32 %v2766, 16
  %v2861 = vor.u32 %v2859, %v2854
  %v2898 = vunpack.c.l.b16 %v2800
  %v2899 = vunpack.c.h.b16 %v2800
  %v2900 = vunpack.c.l.b16 %v2801
  %v2901 = vunpack.c.h.b16 %v2801
  %v2902 = vunpack.c.l.b16 %v2802
  %v2903 = vunpack.c.h.b16 %v2802
  %v2904 = vunpack.c.l.b16 %v2803
  %v2905 = vunpack.c.h.b16 %v2803
  %v2906 = vunpack.c.l.b16 %v2804
  %v2907 = vunpack.c.h.b16 %v2804
  %v2908 = vunpack.c.l.b16 %v2805
  %v2909 = vunpack.c.h.b16 %v2805
  %v2910 = vunpack.c.l.b16 %v2806
  %v2911 = vunpack.c.h.b16 %v2806
  %v2912 = vunpack.c.l.b16 %v2807
  %v2913 = vunpack.c.h.b16 %v2807
  %v2914 = vunpack.c.l.b16 %v2808
  %v2915 = vunpack.c.h.b16 %v2808
  %v2916 = vunpack.c.l.b16 %v2809
  %v2917 = vunpack.c.h.b16 %v2809
  %v2918 = vunpack.c.l.b16 %v2810
  %v2919 = vunpack.c.h.b16 %v2810
  %v2920 = vunpack.c.l.b16 %v2811
  %v2921 = vunpack.c.h.b16 %v2811
  %v2922 = vunpack.c.l.b16 %v2812
  %v2923 = vunpack.c.h.b16 %v2812
  %v2924 = vunpack.c.l.b16 %v2813
  %v2925 = vunpack.c.h.b16 %v2813
  %v2926 = vunpack.c.l.b16 %v2814
  %v2927 = vunpack.c.h.b16 %v2814
  %v2928 = vunpack.c.l.b16 %v2815
  %v2929 = vunpack.c.h.b16 %v2815
  %v2930 = vunpack.c.l.b16 %v2816
  %v2931 = vunpack.c.h.b16 %v2816
  %v2932 = vunpack.c.l.b16 %v2817
  %v2933 = vunpack.c.h.b16 %v2817
  %v2934 = vunpack.c.l.b16 %v2818
  %v2935 = vunpack.c.h.b16 %v2818
  %v2936 = vunpack.c.l.b16 %v2819
  %v2937 = vunpack.c.h.b16 %v2819
  %v2938 = vunpack.c.l.b16 %v2820
  %v2939 = vunpack.c.h.b16 %v2820
  %v2940 = vunpack.c.l.b16 %v2821
  %v2941 = vunpack.c.h.b16 %v2821
  %v2942 = vunpack.c.l.b16 %v2822
  %v2943 = vunpack.c.h.b16 %v2822
  %v2944 = vunpack.c.l.b16 %v2823
  %v2945 = vunpack.c.h.b16 %v2823
  %v2946 = vunpack.c.l.b16 %v2824
  %v2947 = vunpack.c.h.b16 %v2824
  %v2948 = vunpack.c.l.b16 %v2825
  %v2949 = vunpack.c.h.b16 %v2825
  %v2950 = vunpack.c.l.b16 %v2826
  %v2951 = vunpack.c.h.b16 %v2826
  %v2952 = vunpack.c.l.b16 %v2827
  %v2953 = vunpack.c.h.b16 %v2827
  %v2954 = vunpack.c.l.b16 %v2828
  %v2955 = vunpack.c.h.b16 %v2828
  %v2956 = vunpack.c.l.b16 %v2829
  %v2957 = vunpack.c.h.b16 %v2829
  %v2958 = vunpack.c.l.b16 %v2830
  %v2959 = vunpack.c.h.b16 %v2830
  %v2960 = vunpack.c.l.b16 %v2831
  %v2961 = vunpack.c.h.b16 %v2831
  %v2962 = vpack.c.b16 %v2900, %v2898
  %v2963 = vpack.c.b16 %v2901, %v2899
  %v2964 = vpack.c.b16 %v2904, %v2902
  %v2965 = vpack.c.b16 %v2905, %v2903
  %v2966 = vpack.c.b16 %v2908, %v2906
  %v2967 = vpack.c.b16 %v2909, %v2907
  %v2968 = vpack.c.b16 %v2912, %v2910
  %v2969 = vpack.c.b16 %v2913, %v2911
  %v2970 = vpack.c.b16 %v2916, %v2914
  %v2971 = vpack.c.b16 %v2917, %v2915
  %v2972 = vpack.c.b16 %v2920, %v2918
  %v2973 = vpack.c.b16 %v2921, %v2919
  %v2974 = vpack.c.b16 %v2924, %v2922
  %v2975 = vpack.c.b16 %v2925, %v2923
  %v2976 = vpack.c.b16 %v2928, %v2926
  %v2977 = vpack.c.b16 %v2929, %v2927
  %v2978 = vpack.c.b16 %v2932, %v2930
  %v2979 = vpack.c.b16 %v2933, %v2931
  %v2980 = vpack.c.b16 %v2936, %v2934
  %v2981 = vpack.c.b16 %v2937, %v2935
  %v2982 = vpack.c.b16 %v2940, %v2938
  %v2983 = vpack.c.b16 %v2941, %v2939
  %v2984 = vpack.c.b16 %v2944, %v2942
  %v2985 = vpack.c.b16 %v2945, %v2943
  %v2986 = vpack.c.b16 %v2948, %v2946
  %v2987 = vpack.c.b16 %v2949, %v2947
  %v2988 = vpack.c.b16 %v2952, %v2950
  %v2989 = vpack.c.b16 %v2953, %v2951
  %v2990 = vpack.c.b16 %v2956, %v2954
  %v2991 = vpack.c.b16 %v2957, %v2955
  %v2992 = vpack.c.b16 %v2960, %v2958
  %v2993 = vpack.c.b16 %v2961, %v2959
  %3026 = vmatpush.bf16.msra.mxu0 %v2976
  %3027 = vmatpush.bf16.msra.mxu0 %v2974
  %3028 = vmatpush.bf16.msra.mxu0 %v2972
  %3029 = vmatpush.bf16.msra.mxu0 %v2970
  %3030 = vmatpush.bf16.msra.mxu0 %v2968
  %3031 = vmatpush.bf16.msra.mxu0 %v2966
  %3032 = vmatpush.bf16.msra.mxu0 %v2964
  %3033 = vmatpush.bf16.msra.mxu0 %v2962
  %3034 = vmatmul.bf16.gmra.mxu0 %v2843
  %v3035 = vpop.f32.mrf.mxu0
  %v3036 = vadd.f32 0.0, %v3035
  %v3037 = vpop.f32.mrf.mxu0
  %v3038 = vadd.f32 0.0, %v3037
  %3039 = vmatmul.bf16.gmra.mxu0 %v2858
  %v3040 = vpop.f32.mrf.mxu0
  %v3041 = vadd.f32 0.0, %v3040
  %v3042 = vpop.f32.mrf.mxu0
  %3043 = vdwg.mxu0
  %3044 = vmatpush.bf16.msra.mxu0 %v2992
  %3045 = vmatpush.bf16.msra.mxu0 %v2990
  %3046 = vmatpush.bf16.msra.mxu0 %v2988
  %3047 = vmatpush.bf16.msra.mxu0 %v2986
  %3048 = vmatpush.bf16.msra.mxu0 %v2984
  %3049 = vmatpush.bf16.msra.mxu0 %v2982
  %3050 = vmatpush.bf16.msra.mxu0 %v2980
  %3051 = vmatpush.bf16.msra.mxu0 %v2978
  %3052 = vmatmul.bf16.gmra.mxu0 %v2855
  %v3053 = vpop.f32.mrf.mxu0
  %v3054 = vadd.f32 %v3036, %v3053
  %v3055 = vpop.f32.mrf.mxu0
  %v3056 = vadd.f32 %v3038, %v3055
  %3057 = vmatmul.bf16.gmra.mxu0 %v2861
  %v3058 = vpop.f32.mrf.mxu0
  %v3059 = vadd.f32 %v3041, %v3058
  %v3060 = vpop.f32.mrf.mxu0
  %3061 = vdwg.mxu0
  %3062 = vmatpush.bf16.msra.mxu0 %v2977
  %3063 = vmatpush.bf16.msra.mxu0 %v2975
  %3064 = vmatpush.bf16.msra.mxu0 %v2973
  %3065 = vmatpush.bf16.msra.mxu0 %v2971
  %3066 = vmatpush.bf16.msra.mxu0 %v2969
  %3067 = vmatpush.bf16.msra.mxu0 %v2967
  %3068 = vmatpush.bf16.msra.mxu0 %v2965
  %3069 = vmatpush.bf16.msra.mxu0 %v2963
  %3070 = vmatmul.bf16.gmra.mxu0 %v2843
  %v3071 = vpop.f32.mrf.mxu0
  %v3072 = vadd.f32 0.0, %v3071
  %v3073 = vpop.f32.mrf.mxu0
  %v3074 = vadd.f32 0.0, %v3073
  %3075 = vmatmul.bf16.gmra.mxu0 %v2858
  %v3076 = vpop.f32.mrf.mxu0
  %v3077 = vadd.f32 0.0, %v3076
  %v3078 = vpop.f32.mrf.mxu0
  %3079 = vdwg.mxu0
  %3080 = vmatpush.bf16.msra.mxu0 %v2993
  %3081 = vmatpush.bf16.msra.mxu0 %v2991
  %3082 = vmatpush.bf16.msra.mxu0 %v2989
  %3083 = vmatpush.bf16.msra.mxu0 %v2987
  %3084 = vmatpush.bf16.msra.mxu0 %v2985
  %3085 = vmatpush.bf16.msra.mxu0 %v2983
  %3086 = vmatpush.bf16.msra.mxu0 %v2981
  %3087 = vmatpush.bf16.msra.mxu0 %v2979
  %3088 = vmatmul.bf16.gmra.mxu0 %v2855
  %v3089 = vpop.f32.mrf.mxu0
  %v3090 = vadd.f32 %v3072, %v3089
  %v3091 = vpop.f32.mrf.mxu0
  %v3092 = vadd.f32 %v3074, %v3091
  %3093 = vmatmul.bf16.gmra.mxu0 %v2861
  %v3094 = vpop.f32.mrf.mxu0
  %v3095 = vadd.f32 %v3077, %v3094
  %v3096 = vpop.f32.mrf.mxu0
  %3097 = vdwg.mxu0
  %v3130 = vunpack.c.l.b16 %v2767
  %v3131 = vunpack.c.h.b16 %v2767
  %v3132 = vunpack.c.l.b16 %v2768
  %v3133 = vunpack.c.h.b16 %v2768
  %v3134 = vunpack.c.l.b16 %v2769
  %v3135 = vunpack.c.h.b16 %v2769
  %v3136 = vunpack.c.l.b16 %v2770
  %v3137 = vunpack.c.h.b16 %v2770
  %v3138 = vunpack.c.l.b16 %v2771
  %v3139 = vunpack.c.h.b16 %v2771
  %v3140 = vunpack.c.l.b16 %v2772
  %v3141 = vunpack.c.h.b16 %v2772
  %v3142 = vunpack.c.l.b16 %v2773
  %v3143 = vunpack.c.h.b16 %v2773
  %v3144 = vunpack.c.l.b16 %v2774
  %v3145 = vunpack.c.h.b16 %v2774
  %v3146 = vunpack.c.l.b16 %v2775
  %v3147 = vunpack.c.h.b16 %v2775
  %v3148 = vunpack.c.l.b16 %v2776
  %v3149 = vunpack.c.h.b16 %v2776
  %v3150 = vunpack.c.l.b16 %v2777
  %v3151 = vunpack.c.h.b16 %v2777
  %v3152 = vunpack.c.l.b16 %v2778
  %v3153 = vunpack.c.h.b16 %v2778
  %v3154 = vunpack.c.l.b16 %v2779
  %v3155 = vunpack.c.h.b16 %v2779
  %v3156 = vunpack.c.l.b16 %v2780
  %v3157 = vunpack.c.h.b16 %v2780
  %v3158 = vunpack.c.l.b16 %v2781
  %v3159 = vunpack.c.h.b16 %v2781
  %v3160 = vunpack.c.l.b16 %v2782
  %v3161 = vunpack.c.h.b16 %v2782
  %v3162 = vunpack.c.l.b16 %v2783
  %v3163 = vunpack.c.h.b16 %v2783
  %v3164 = vunpack.c.l.b16 %v2784
  %v3165 = vunpack.c.h.b16 %v2784
  %v3166 = vunpack.c.l.b16 %v2785
  %v3167 = vunpack.c.h.b16 %v2785
  %v3168 = vunpack.c.l.b16 %v2786
  %v3169 = vunpack.c.h.b16 %v2786
  %v3170 = vunpack.c.l.b16 %v2787
  %v3171 = vunpack.c.h.b16 %v2787
  %v3172 = vunpack.c.l.b16 %v2788
  %v3173 = vunpack.c.h.b16 %v2788
  %v3174 = vunpack.c.l.b16 %v2789
  %v3175 = vunpack.c.h.b16 %v2789
  %v3176 = vunpack.c.l.b16 %v2790
  %v3177 = vunpack.c.h.b16 %v2790
  %v3178 = vunpack.c.l.b16 %v2791
  %v3179 = vunpack.c.h.b16 %v2791
  %v3180 = vunpack.c.l.b16 %v2792
  %v3181 = vunpack.c.h.b16 %v2792
  %v3182 = vunpack.c.l.b16 %v2793
  %v3183 = vunpack.c.h.b16 %v2793
  %v3184 = vunpack.c.l.b16 %v2794
  %v3185 = vunpack.c.h.b16 %v2794
  %v3186 = vunpack.c.l.b16 %v2795
  %v3187 = vunpack.c.h.b16 %v2795
  %v3188 = vunpack.c.l.b16 %v2796
  %v3189 = vunpack.c.h.b16 %v2796
  %v3190 = vunpack.c.l.b16 %v2797
  %v3191 = vunpack.c.h.b16 %v2797
  %v3192 = vunpack.c.l.b16 %v2798
  %v3193 = vunpack.c.h.b16 %v2798
  %v3194 = vpack.c.b16 %v3132, %v3130
  %v3195 = vpack.c.b16 %v3133, %v3131
  %v3196 = vpack.c.b16 %v3136, %v3134
  %v3197 = vpack.c.b16 %v3137, %v3135
  %v3198 = vpack.c.b16 %v3140, %v3138
  %v3199 = vpack.c.b16 %v3141, %v3139
  %v3200 = vpack.c.b16 %v3144, %v3142
  %v3201 = vpack.c.b16 %v3145, %v3143
  %v3202 = vpack.c.b16 %v3148, %v3146
  %v3203 = vpack.c.b16 %v3149, %v3147
  %v3204 = vpack.c.b16 %v3152, %v3150
  %v3205 = vpack.c.b16 %v3153, %v3151
  %v3206 = vpack.c.b16 %v3156, %v3154
  %v3207 = vpack.c.b16 %v3157, %v3155
  %v3208 = vpack.c.b16 %v3160, %v3158
  %v3209 = vpack.c.b16 %v3161, %v3159
  %v3210 = vpack.c.b16 %v3164, %v3162
  %v3211 = vpack.c.b16 %v3165, %v3163
  %v3212 = vpack.c.b16 %v3168, %v3166
  %v3213 = vpack.c.b16 %v3169, %v3167
  %v3214 = vpack.c.b16 %v3172, %v3170
  %v3215 = vpack.c.b16 %v3173, %v3171
  %v3216 = vpack.c.b16 %v3176, %v3174
  %v3217 = vpack.c.b16 %v3177, %v3175
  %v3218 = vpack.c.b16 %v3180, %v3178
  %v3219 = vpack.c.b16 %v3181, %v3179
  %v3220 = vpack.c.b16 %v3184, %v3182
  %v3221 = vpack.c.b16 %v3185, %v3183
  %v3222 = vpack.c.b16 %v3188, %v3186
  %v3223 = vpack.c.b16 %v3189, %v3187
  %v3224 = vpack.c.b16 %v3192, %v3190
  %v3225 = vpack.c.b16 %v3193, %v3191
  %3258 = vmatpush.bf16.msra.mxu0 %v3208
  %3259 = vmatpush.bf16.msra.mxu0 %v3206
  %3260 = vmatpush.bf16.msra.mxu0 %v3204
  %3261 = vmatpush.bf16.msra.mxu0 %v3202
  %3262 = vmatpush.bf16.msra.mxu0 %v3200
  %3263 = vmatpush.bf16.msra.mxu0 %v3198
  %3264 = vmatpush.bf16.msra.mxu0 %v3196
  %3265 = vmatpush.bf16.msra.mxu0 %v3194
  %3266 = vmatmul.bf16.gmra.mxu0 %v2763
  %v3267 = vpop.f32.mrf.mxu0
  %v3268 = vadd.f32 %v3054, %v3267
  %v3269 = vpop.f32.mrf.mxu0
  %v3270 = vadd.f32 %v3056, %v3269
  %3271 = vmatmul.bf16.gmra.mxu0 %v2765
  %v3272 = vpop.f32.mrf.mxu0
  %v3273 = vadd.f32 %v3059, %v3272
  %v3274 = vpop.f32.mrf.mxu0
  %3275 = vdwg.mxu0
  %3276 = vmatpush.bf16.msra.mxu0 %v3224
  %3277 = vmatpush.bf16.msra.mxu0 %v3222
  %3278 = vmatpush.bf16.msra.mxu0 %v3220
  %3279 = vmatpush.bf16.msra.mxu0 %v3218
  %3280 = vmatpush.bf16.msra.mxu0 %v3216
  %3281 = vmatpush.bf16.msra.mxu0 %v3214
  %3282 = vmatpush.bf16.msra.mxu0 %v3212
  %3283 = vmatpush.bf16.msra.mxu0 %v3210
  %3284 = vmatmul.bf16.gmra.mxu0 %v2764
  %v3285 = vpop.f32.mrf.mxu0
  %v3286 = vadd.f32 %v3268, %v3285
  %v3287 = vpop.f32.mrf.mxu0
  %v3288 = vadd.f32 %v3270, %v3287
  %3289 = vmatmul.bf16.gmra.mxu0 %v2766
  %v3290 = vpop.f32.mrf.mxu0
  %v3291 = vadd.f32 %v3273, %v3290
  %v3292 = vpop.f32.mrf.mxu0
  %3293 = vdwg.mxu0
  %3294 = vmatpush.bf16.msra.mxu0 %v3209
  %3295 = vmatpush.bf16.msra.mxu0 %v3207
  %3296 = vmatpush.bf16.msra.mxu0 %v3205
  %3297 = vmatpush.bf16.msra.mxu0 %v3203
  %3298 = vmatpush.bf16.msra.mxu0 %v3201
  %3299 = vmatpush.bf16.msra.mxu0 %v3199
  %3300 = vmatpush.bf16.msra.mxu0 %v3197
  %3301 = vmatpush.bf16.msra.mxu0 %v3195
  %3302 = vmatmul.bf16.gmra.mxu0 %v2763
  %v3303 = vpop.f32.mrf.mxu0
  %v3304 = vadd.f32 %v3090, %v3303
  %v3305 = vpop.f32.mrf.mxu0
  %v3306 = vadd.f32 %v3092, %v3305
  %3307 = vmatmul.bf16.gmra.mxu0 %v2765
  %v3308 = vpop.f32.mrf.mxu0
  %v3309 = vadd.f32 %v3095, %v3308
  %v3310 = vpop.f32.mrf.mxu0
  %3311 = vdwg.mxu0
  %3312 = vmatpush.bf16.msra.mxu0 %v3225
  %3313 = vmatpush.bf16.msra.mxu0 %v3223
  %3314 = vmatpush.bf16.msra.mxu0 %v3221
  %3315 = vmatpush.bf16.msra.mxu0 %v3219
  %3316 = vmatpush.bf16.msra.mxu0 %v3217
  %3317 = vmatpush.bf16.msra.mxu0 %v3215
  %3318 = vmatpush.bf16.msra.mxu0 %v3213
  %3319 = vmatpush.bf16.msra.mxu0 %v3211
  %3320 = vmatmul.bf16.gmra.mxu0 %v2764
  %v3321 = vpop.f32.mrf.mxu0
  %v3322 = vadd.f32 %v3304, %v3321
  %v3323 = vpop.f32.mrf.mxu0
  %v3324 = vadd.f32 %v3306, %v3323
  %3325 = vmatmul.bf16.gmra.mxu0 %v2766
  %v3326 = vpop.f32.mrf.mxu0
  %v3327 = vadd.f32 %v3309, %v3326
  %v3328 = vpop.f32.mrf.mxu0
  %3329 = vdwg.mxu0
  %s3330 = scalar_lea.vmem %s8, 512
  %v3331 = vld [vmem:[%s3330] sm:$0xff]
  %v3332 = vld [vmem:[%s3330 + $0x8] sm:$0xff]
  %v3333 = vld [vmem:[%s3330 + $0x10] sm:$0xff]
  %v3334 = vld [vmem:[%s3330 + $0x18] sm:$0xff]
  %v3335 = vld [vmem:[%s3330 + $0x20] sm:$0xff]
  %v3336 = vld [vmem:[%s3330 + $0x28] sm:$0xff]
  %v3337 = vld [vmem:[%s3330 + $0x30] sm:$0xff]
  %v3338 = vld [vmem:[%s3330 + $0x38] sm:$0xff]
  %v3339 = vld [vmem:[%s3330 + $0x40] sm:$0xff]
  %v3340 = vld [vmem:[%s3330 + $0x48] sm:$0xff]
  %v3341 = vld [vmem:[%s3330 + $0x50] sm:$0xff]
  %v3342 = vld [vmem:[%s3330 + $0x58] sm:$0xff]
  %v3343 = vld [vmem:[%s3330 + $0x60] sm:$0xff]
  %v3344 = vld [vmem:[%s3330 + $0x68] sm:$0xff]
  %v3345 = vld [vmem:[%s3330 + $0x70] sm:$0xff]
  %v3346 = vld [vmem:[%s3330 + $0x78] sm:$0xff]
  %v3347 = vld [vmem:[%s3330 + $0x80] sm:$0xff]
  %v3348 = vld [vmem:[%s3330 + $0x88] sm:$0xff]
  %v3349 = vld [vmem:[%s3330 + $0x90] sm:$0xff]
  %v3350 = vld [vmem:[%s3330 + $0x98] sm:$0xff]
  %v3351 = vld [vmem:[%s3330 + $0xa0] sm:$0xff]
  %v3352 = vld [vmem:[%s3330 + $0xa8] sm:$0xff]
  %v3353 = vld [vmem:[%s3330 + $0xb0] sm:$0xff]
  %v3354 = vld [vmem:[%s3330 + $0xb8] sm:$0xff]
  %v3355 = vld [vmem:[%s3330 + $0xc0] sm:$0xff]
  %v3356 = vld [vmem:[%s3330 + $0xc8] sm:$0xff]
  %v3357 = vld [vmem:[%s3330 + $0xd0] sm:$0xff]
  %v3358 = vld [vmem:[%s3330 + $0xd8] sm:$0xff]
  %v3359 = vld [vmem:[%s3330 + $0xe0] sm:$0xff]
  %v3360 = vld [vmem:[%s3330 + $0xe8] sm:$0xff]
  %v3361 = vld [vmem:[%s3330 + $0xf0] sm:$0xff]
  %v3362 = vld [vmem:[%s3330 + $0xf8] sm:$0xff]
  %v3367 = vrot.slane %v2763, 1
  %v3368 = vrot.slane %v2765, 1
  %v3369 = vsel %vm256, %v3367, %v3368
  %v3370 = vrot.slane %v2764, 1
  %v3371 = vrot.slane %v2766, 1
  %v3372 = vsel %vm256, %v3370, %v3371
  %v3409 = vunpack.c.l.b16 %v3331
  %v3410 = vunpack.c.h.b16 %v3331
  %v3411 = vunpack.c.l.b16 %v3332
  %v3412 = vunpack.c.h.b16 %v3332
  %v3413 = vunpack.c.l.b16 %v3333
  %v3414 = vunpack.c.h.b16 %v3333
  %v3415 = vunpack.c.l.b16 %v3334
  %v3416 = vunpack.c.h.b16 %v3334
  %v3417 = vunpack.c.l.b16 %v3335
  %v3418 = vunpack.c.h.b16 %v3335
  %v3419 = vunpack.c.l.b16 %v3336
  %v3420 = vunpack.c.h.b16 %v3336
  %v3421 = vunpack.c.l.b16 %v3337
  %v3422 = vunpack.c.h.b16 %v3337
  %v3423 = vunpack.c.l.b16 %v3338
  %v3424 = vunpack.c.h.b16 %v3338
  %v3425 = vunpack.c.l.b16 %v3339
  %v3426 = vunpack.c.h.b16 %v3339
  %v3427 = vunpack.c.l.b16 %v3340
  %v3428 = vunpack.c.h.b16 %v3340
  %v3429 = vunpack.c.l.b16 %v3341
  %v3430 = vunpack.c.h.b16 %v3341
  %v3431 = vunpack.c.l.b16 %v3342
  %v3432 = vunpack.c.h.b16 %v3342
  %v3433 = vunpack.c.l.b16 %v3343
  %v3434 = vunpack.c.h.b16 %v3343
  %v3435 = vunpack.c.l.b16 %v3344
  %v3436 = vunpack.c.h.b16 %v3344
  %v3437 = vunpack.c.l.b16 %v3345
  %v3438 = vunpack.c.h.b16 %v3345
  %v3439 = vunpack.c.l.b16 %v3346
  %v3440 = vunpack.c.h.b16 %v3346
  %v3441 = vunpack.c.l.b16 %v3347
  %v3442 = vunpack.c.h.b16 %v3347
  %v3443 = vunpack.c.l.b16 %v3348
  %v3444 = vunpack.c.h.b16 %v3348
  %v3445 = vunpack.c.l.b16 %v3349
  %v3446 = vunpack.c.h.b16 %v3349
  %v3447 = vunpack.c.l.b16 %v3350
  %v3448 = vunpack.c.h.b16 %v3350
  %v3449 = vunpack.c.l.b16 %v3351
  %v3450 = vunpack.c.h.b16 %v3351
  %v3451 = vunpack.c.l.b16 %v3352
  %v3452 = vunpack.c.h.b16 %v3352
  %v3453 = vunpack.c.l.b16 %v3353
  %v3454 = vunpack.c.h.b16 %v3353
  %v3455 = vunpack.c.l.b16 %v3354
  %v3456 = vunpack.c.h.b16 %v3354
  %v3457 = vunpack.c.l.b16 %v3355
  %v3458 = vunpack.c.h.b16 %v3355
  %v3459 = vunpack.c.l.b16 %v3356
  %v3460 = vunpack.c.h.b16 %v3356
  %v3461 = vunpack.c.l.b16 %v3357
  %v3462 = vunpack.c.h.b16 %v3357
  %v3463 = vunpack.c.l.b16 %v3358
  %v3464 = vunpack.c.h.b16 %v3358
  %v3465 = vunpack.c.l.b16 %v3359
  %v3466 = vunpack.c.h.b16 %v3359
  %v3467 = vunpack.c.l.b16 %v3360
  %v3468 = vunpack.c.h.b16 %v3360
  %v3469 = vunpack.c.l.b16 %v3361
  %v3470 = vunpack.c.h.b16 %v3361
  %v3471 = vunpack.c.l.b16 %v3362
  %v3472 = vunpack.c.h.b16 %v3362
  %v3473 = vpack.c.b16 %v3411, %v3409
  %v3474 = vpack.c.b16 %v3412, %v3410
  %v3475 = vpack.c.b16 %v3415, %v3413
  %v3476 = vpack.c.b16 %v3416, %v3414
  %v3477 = vpack.c.b16 %v3419, %v3417
  %v3478 = vpack.c.b16 %v3420, %v3418
  %v3479 = vpack.c.b16 %v3423, %v3421
  %v3480 = vpack.c.b16 %v3424, %v3422
  %v3481 = vpack.c.b16 %v3427, %v3425
  %v3482 = vpack.c.b16 %v3428, %v3426
  %v3483 = vpack.c.b16 %v3431, %v3429
  %v3484 = vpack.c.b16 %v3432, %v3430
  %v3485 = vpack.c.b16 %v3435, %v3433
  %v3486 = vpack.c.b16 %v3436, %v3434
  %v3487 = vpack.c.b16 %v3439, %v3437
  %v3488 = vpack.c.b16 %v3440, %v3438
  %v3489 = vpack.c.b16 %v3443, %v3441
  %v3490 = vpack.c.b16 %v3444, %v3442
  %v3491 = vpack.c.b16 %v3447, %v3445
  %v3492 = vpack.c.b16 %v3448, %v3446
  %v3493 = vpack.c.b16 %v3451, %v3449
  %v3494 = vpack.c.b16 %v3452, %v3450
  %v3495 = vpack.c.b16 %v3455, %v3453
  %v3496 = vpack.c.b16 %v3456, %v3454
  %v3497 = vpack.c.b16 %v3459, %v3457
  %v3498 = vpack.c.b16 %v3460, %v3458
  %v3499 = vpack.c.b16 %v3463, %v3461
  %v3500 = vpack.c.b16 %v3464, %v3462
  %v3501 = vpack.c.b16 %v3467, %v3465
  %v3502 = vpack.c.b16 %v3468, %v3466
  %v3503 = vpack.c.b16 %v3471, %v3469
  %v3504 = vpack.c.b16 %v3472, %v3470
  %3537 = vmatpush.bf16.msra.mxu0 %v3487
  %3538 = vmatpush.bf16.msra.mxu0 %v3485
  %3539 = vmatpush.bf16.msra.mxu0 %v3483
  %3540 = vmatpush.bf16.msra.mxu0 %v3481
  %3541 = vmatpush.bf16.msra.mxu0 %v3479
  %3542 = vmatpush.bf16.msra.mxu0 %v3477
  %3543 = vmatpush.bf16.msra.mxu0 %v3475
  %3544 = vmatpush.bf16.msra.mxu0 %v3473
  %3545 = vmatmul.bf16.gmra.mxu0 %v3369
  %v3546 = vpop.f32.mrf.mxu0
  %v3547 = vadd.f32 0.0, %v3546
  %v3548 = vpop.f32.mrf.mxu0
  %v3549 = vadd.f32 0.0, %v3548
  %3550 = vmatmul.bf16.gmra.mxu0 %v3368
  %v3551 = vpop.f32.mrf.mxu0
  %v3552 = vadd.f32 0.0, %v3551
  %v3553 = vpop.f32.mrf.mxu0
  %3554 = vdwg.mxu0
  %3555 = vmatpush.bf16.msra.mxu0 %v3503
  %3556 = vmatpush.bf16.msra.mxu0 %v3501
  %3557 = vmatpush.bf16.msra.mxu0 %v3499
  %3558 = vmatpush.bf16.msra.mxu0 %v3497
  %3559 = vmatpush.bf16.msra.mxu0 %v3495
  %3560 = vmatpush.bf16.msra.mxu0 %v3493
  %3561 = vmatpush.bf16.msra.mxu0 %v3491
  %3562 = vmatpush.bf16.msra.mxu0 %v3489
  %3563 = vmatmul.bf16.gmra.mxu0 %v3372
  %v3564 = vpop.f32.mrf.mxu0
  %v3565 = vadd.f32 %v3547, %v3564
  %v3566 = vpop.f32.mrf.mxu0
  %v3567 = vadd.f32 %v3549, %v3566
  %3568 = vmatmul.bf16.gmra.mxu0 %v3371
  %v3569 = vpop.f32.mrf.mxu0
  %v3570 = vadd.f32 %v3552, %v3569
  %v3571 = vpop.f32.mrf.mxu0
  %3572 = vdwg.mxu0
  %3573 = vmatpush.bf16.msra.mxu0 %v3488
  %3574 = vmatpush.bf16.msra.mxu0 %v3486
  %3575 = vmatpush.bf16.msra.mxu0 %v3484
  %3576 = vmatpush.bf16.msra.mxu0 %v3482
  %3577 = vmatpush.bf16.msra.mxu0 %v3480
  %3578 = vmatpush.bf16.msra.mxu0 %v3478
  %3579 = vmatpush.bf16.msra.mxu0 %v3476
  %3580 = vmatpush.bf16.msra.mxu0 %v3474
  %3581 = vmatmul.bf16.gmra.mxu0 %v3369
  %v3582 = vpop.f32.mrf.mxu0
  %v3583 = vadd.f32 0.0, %v3582
  %v3584 = vpop.f32.mrf.mxu0
  %v3585 = vadd.f32 0.0, %v3584
  %3586 = vmatmul.bf16.gmra.mxu0 %v3368
  %v3587 = vpop.f32.mrf.mxu0
  %v3588 = vadd.f32 0.0, %v3587
  %v3589 = vpop.f32.mrf.mxu0
  %3590 = vdwg.mxu0
  %3591 = vmatpush.bf16.msra.mxu0 %v3504
  %3592 = vmatpush.bf16.msra.mxu0 %v3502
  %3593 = vmatpush.bf16.msra.mxu0 %v3500
  %3594 = vmatpush.bf16.msra.mxu0 %v3498
  %3595 = vmatpush.bf16.msra.mxu0 %v3496
  %3596 = vmatpush.bf16.msra.mxu0 %v3494
  %3597 = vmatpush.bf16.msra.mxu0 %v3492
  %3598 = vmatpush.bf16.msra.mxu0 %v3490
  %3599 = vmatmul.bf16.gmra.mxu0 %v3372
  %v3600 = vpop.f32.mrf.mxu0
  %v3601 = vadd.f32 %v3583, %v3600
  %v3602 = vpop.f32.mrf.mxu0
  %v3603 = vadd.f32 %v3585, %v3602
  %3604 = vmatmul.bf16.gmra.mxu0 %v3371
  %v3605 = vpop.f32.mrf.mxu0
  %v3606 = vadd.f32 %v3588, %v3605
  %v3607 = vpop.f32.mrf.mxu0
  %3608 = vdwg.mxu0
  %v3609 = vadd.f32 %v3286, %v3565
  %v3610 = vadd.f32 %v3322, %v3601
  %v3611 = vadd.f32 %v3288, %v3567
  %v3612 = vadd.f32 %v3324, %v3603
  %v3613 = vadd.f32 %v3291, %v3570
  %v3614 = vadd.f32 %v3327, %v3606
  %s3615 = scalar_lea.vmem %s1, 69
  %v3616 = vld [vmem:[%s3615] ss:$8 sm:$0x3]
  %s3617 = scalar_lea.vmem %s1, 70
  %v3618 = vld [vmem:[%s3617] ss:$8 sm:$0x3]
  %s3619 = scalar_lea.vmem %s1, 71
  %v3620 = vld [vmem:[%s3619] ss:$8 sm:$0x3]
  %v3622 = vperm.slane %v3616, 0
  %v3623 = vperm.slane %v3616, 1
  %v3626 = vadd.f32 %v3609, %v3622
  %v3627 = vadd.f32 %v3610, %v3623
  %v3628 = vadd.f32 %v3611, %v3622
  %v3629 = vadd.f32 %v3612, %v3623
  %v3630 = vadd.f32 %v3613, %v3622
  %v3631 = vadd.f32 %v3614, %v3623
  %vm3632 = vcmp.gt.f32.partialorder %v3626, 0.0
  %vm3633 = vcmp.gt.f32.partialorder %v3627, 0.0
  %vm3634 = vcmp.gt.f32.partialorder %v3628, 0.0
  %vm3635 = vcmp.gt.f32.partialorder %v3629, 0.0
  %vm3636 = vcmp.gt.f32.partialorder %v3630, 0.0
  %vm3637 = vcmp.gt.f32.partialorder %v3631, 0.0
  %v3638 = vmin.f32 %v3626, 0.0
  %v3639 = vmin.f32 %v3627, 0.0
  %v3640 = vmin.f32 %v3628, 0.0
  %v3641 = vmin.f32 %v3629, 0.0
  %v3642 = vmin.f32 %v3630, 0.0
  %v3643 = vmin.f32 %v3631, 0.0
  %v3644 = vmul.f32 %v3638, 1.442695
  %v3645 = vpow.pop %v3644
  %v3646 = vmul.f32 %v3639, 1.442695
  %v3647 = vpow.pop %v3646
  %v3648 = vmul.f32 %v3640, 1.442695
  %v3649 = vpow.pop %v3648
  %v3650 = vmul.f32 %v3641, 1.442695
  %v3651 = vpow.pop %v3650
  %v3652 = vmul.f32 %v3642, 1.442695
  %v3653 = vpow.pop %v3652
  %v3654 = vmul.f32 %v3643, 1.442695
  %v3655 = vpow.pop %v3654
  %v3656 = vsub.f32 %v3645, 1.0
  %v3657 = vsub.f32 %v3647, 1.0
  %v3658 = vsub.f32 %v3649, 1.0
  %v3659 = vsub.f32 %v3651, 1.0
  %v3660 = vsub.f32 %v3653, 1.0
  %v3661 = vsub.f32 %v3655, 1.0
  %v3662 = vsel %vm3632, %v3626, %v3656
  %v3663 = vsel %vm3633, %v3627, %v3657
  %v3664 = vsel %vm3634, %v3628, %v3658
  %v3665 = vsel %vm3635, %v3629, %v3659
  %v3666 = vsel %vm3636, %v3630, %v3660
  %v3667 = vsel %vm3637, %v3631, %v3661
  %v3668 = vld [vmem:[%s1] sm:$0xff]
  %v3669 = vld [vmem:[%s1 + $0x10] sm:$0xff]
  %v3670 = vld [vmem:[%s1 + $0x20] sm:$0xf]
  %vm3671 = vcmp.gt.f32.partialorder %v3668, 0.5
  %vm3672 = vcmp.gt.f32.partialorder %v3669, 0.5
  %vm3673 = vcmp.gt.f32.partialorder %v3670, 0.5
  %v3674 = vsel %vm3671, 1, 0
  %v3675 = vsel %vm3672, 1, 0
  %v3676 = vsel %vm3673, 1, 0
  %3677 = vset.pattern.permute.xlu0 3
  %3678 = vperm.xlu0 %3677, %v3674
  %v3679 = vpop.permute.xlu0 %3678
  %3680 = vset.pattern.permute.xlu0 3
  %3681 = vperm.xlu0 %3680, %v3675
  %v3682 = vpop.permute.xlu0 %3681
  %3683 = vset.pattern.permute.xlu0 3
  %3684 = vperm.xlu0 %3683, %v3676
  %v3685 = vpop.permute.xlu0 %3684
  %vm3686 = vcmp.eq.s32.totalorder %v3679, 1
  %vm3687 = vcmp.eq.s32.totalorder %v3682, 1
  %vm3688 = vcmp.eq.s32.totalorder %v3685, 1
  %v3689 = vsel %vm3686, %v3662, 0.0
  %v3690 = vsel %vm3686, %v3663, 0.0
  %v3691 = vsel %vm3687, %v3664, 0.0
  %v3692 = vsel %vm3687, %v3665, 0.0
  %v3693 = vsel %vm3688, %v3666, 0.0
  %v3694 = vsel %vm3688, %v3667, 0.0
  %v3695 = vadd.f32 %v3689, %v3691
  %v3696 = vsel %vm118, %v3693, 0.0
  %v3697 = vadd.f32 %v3695, %v3696
  %v3698 = vrot.slane %v3697, 4
  %v3699 = vadd.f32 %v3697, %v3698
  %v3700 = vrot.slane %v3699, 2
  %v3701 = vadd.f32 %v3699, %v3700
  %v3702 = vrot.slane %v3701, 1
  %v3703 = vadd.f32 %v3701, %v3702
  %v3704 = vsel %vm467, %v3690, 0.0
  %v3705 = vsel %vm467, %v3692, 0.0
  %v3706 = vadd.f32 %v3704, %v3705
  %vm3707 = vcmask 519168
  %v3708 = vsel %vm3707, %v3694, 0.0
  %v3709 = vadd.f32 %v3706, %v3708
  %v3710 = vrot.slane %v3709, 4
  %v3711 = vadd.f32 %v3709, %v3710
  %v3712 = vrot.slane %v3711, 2
  %v3713 = vadd.f32 %v3711, %v3712
  %v3714 = vrot.slane %v3713, 1
  %v3715 = vadd.f32 %v3713, %v3714
  %v3716 = vmul.f32 %v3689, %v3689
  %v3717 = vmul.f32 %v3690, %v3690
  %v3718 = vmul.f32 %v3691, %v3691
  %v3719 = vmul.f32 %v3692, %v3692
  %v3720 = vmul.f32 %v3693, %v3693
  %v3721 = vmul.f32 %v3694, %v3694
  %v3722 = vadd.f32 %v3716, %v3718
  %v3723 = vsel %vm118, %v3720, 0.0
  %v3724 = vadd.f32 %v3722, %v3723
  %v3725 = vrot.slane %v3724, 4
  %v3726 = vadd.f32 %v3724, %v3725
  %v3727 = vrot.slane %v3726, 2
  %v3728 = vadd.f32 %v3726, %v3727
  %v3729 = vrot.slane %v3728, 1
  %v3730 = vadd.f32 %v3728, %v3729
  %v3731 = vsel %vm467, %v3717, 0.0
  %v3732 = vsel %vm467, %v3719, 0.0
  %v3733 = vadd.f32 %v3731, %v3732
  %v3734 = vsel %vm3707, %v3721, 0.0
  %v3735 = vadd.f32 %v3733, %v3734
  %v3736 = vrot.slane %v3735, 4
  %v3737 = vadd.f32 %v3735, %v3736
  %v3738 = vrot.slane %v3737, 2
  %v3739 = vadd.f32 %v3737, %v3738
  %v3740 = vrot.slane %v3739, 1
  %v3741 = vadd.f32 %v3739, %v3740
  %v3742 = vsel %vm513, %v3703, %v3730
  %v3743 = vsel %vm513, %v3715, %v3741
  %v3744 = vld [vmem:[%s9] sm:$0xff]
  %v3745 = vld [vmem:[%s9 + $0x8] sm:$0xff]
  %v3746 = vld [vmem:[%s9 + $0x10] sm:$0xff]
  %v3747 = vld [vmem:[%s9 + $0x18] sm:$0xff]
  %v3748 = vld [vmem:[%s9 + $0x20] sm:$0xff]
  %v3749 = vld [vmem:[%s9 + $0x28] sm:$0xff]
  %v3750 = vld [vmem:[%s9 + $0x30] sm:$0xff]
  %v3751 = vld [vmem:[%s9 + $0x38] sm:$0xff]
  %v3752 = vld [vmem:[%s9 + $0x40] sm:$0xff]
  %v3753 = vld [vmem:[%s9 + $0x48] sm:$0xff]
  %v3754 = vld [vmem:[%s9 + $0x50] sm:$0xff]
  %v3755 = vld [vmem:[%s9 + $0x58] sm:$0xff]
  %v3756 = vld [vmem:[%s9 + $0x60] sm:$0xff]
  %v3757 = vld [vmem:[%s9 + $0x68] sm:$0xff]
  %v3758 = vld [vmem:[%s9 + $0x70] sm:$0xff]
  %v3759 = vld [vmem:[%s9 + $0x78] sm:$0xff]
  %v3760 = vld [vmem:[%s9 + $0x80] sm:$0xff]
  %v3761 = vld [vmem:[%s9 + $0x88] sm:$0xff]
  %v3762 = vld [vmem:[%s9 + $0x90] sm:$0xff]
  %v3763 = vld [vmem:[%s9 + $0x98] sm:$0xff]
  %v3764 = vld [vmem:[%s9 + $0xa0] sm:$0xff]
  %v3765 = vld [vmem:[%s9 + $0xa8] sm:$0xff]
  %v3766 = vld [vmem:[%s9 + $0xb0] sm:$0xff]
  %v3767 = vld [vmem:[%s9 + $0xb8] sm:$0xff]
  %v3768 = vld [vmem:[%s9 + $0xc0] sm:$0xff]
  %v3769 = vld [vmem:[%s9 + $0xc8] sm:$0xff]
  %v3770 = vld [vmem:[%s9 + $0xd0] sm:$0xff]
  %v3771 = vld [vmem:[%s9 + $0xd8] sm:$0xff]
  %v3772 = vld [vmem:[%s9 + $0xe0] sm:$0xff]
  %v3773 = vld [vmem:[%s9 + $0xe8] sm:$0xff]
  %v3774 = vld [vmem:[%s9 + $0xf0] sm:$0xff]
  %v3775 = vld [vmem:[%s9 + $0xf8] sm:$0xff]
  %v3776 = vld [vmem:[%s9 + $0x100] sm:$0xff]
  %v3777 = vld [vmem:[%s9 + $0x108] sm:$0xff]
  %v3778 = vld [vmem:[%s9 + $0x110] sm:$0xff]
  %v3779 = vld [vmem:[%s9 + $0x118] sm:$0xff]
  %v3780 = vld [vmem:[%s9 + $0x120] sm:$0xff]
  %v3781 = vld [vmem:[%s9 + $0x128] sm:$0xff]
  %v3782 = vld [vmem:[%s9 + $0x130] sm:$0xff]
  %v3783 = vld [vmem:[%s9 + $0x138] sm:$0xff]
  %v3784 = vld [vmem:[%s9 + $0x140] sm:$0xff]
  %v3785 = vld [vmem:[%s9 + $0x148] sm:$0xff]
  %v3786 = vld [vmem:[%s9 + $0x150] sm:$0xff]
  %v3787 = vld [vmem:[%s9 + $0x158] sm:$0xff]
  %v3788 = vld [vmem:[%s9 + $0x160] sm:$0xff]
  %v3789 = vld [vmem:[%s9 + $0x168] sm:$0xff]
  %v3790 = vld [vmem:[%s9 + $0x170] sm:$0xff]
  %v3791 = vld [vmem:[%s9 + $0x178] sm:$0xff]
  %v3793 = vsel %vm467, %v3743, 0
  %3795 = vmatpush.msra.mxu0 %v3774
  %3796 = vmatpush.msra.mxu0 %v3772
  %3797 = vmatpush.msra.mxu0 %v3770
  %3798 = vmatpush.msra.mxu0 %v3768
  %3799 = vmatpush.msra.mxu0 %v3766
  %3800 = vmatpush.msra.mxu0 %v3764
  %3801 = vmatpush.msra.mxu0 %v3762
  %3802 = vmatpush.msra.mxu0 %v3760
  %3803 = vmatpush.msra.mxu0 %v3758
  %3804 = vmatpush.msra.mxu0 %v3756
  %3805 = vmatpush.msra.mxu0 %v3754
  %3806 = vmatpush.msra.mxu0 %v3752
  %3807 = vmatpush.msra.mxu0 %v3750
  %3808 = vmatpush.msra.mxu0 %v3748
  %3809 = vmatpush.msra.mxu0 %v3746
  %3810 = vmatpush.msra.mxu0 %v3744
  %3811 = vmatmul.f32.gmra.mxu0 %v3742
  %v3812 = vpop.f32.mrf.mxu0
  %v3813 = vadd.f32 0.0, %v3812
  %3814 = vdwg.mxu0
  %3815 = vmatpush.msra.mxu0 0.0
  %3816 = vmatpush.msra.mxu0 0.0
  %3817 = vmatpush.msra.mxu0 0.0
  %3818 = vmatpush.msra.mxu0 0.0
  %3819 = vmatpush.msra.mxu0 0.0
  %3820 = vmatpush.msra.mxu0 0.0
  %3821 = vmatpush.msra.mxu0 0.0
  %3822 = vmatpush.msra.mxu0 0.0
  %3823 = vmatpush.msra.mxu0 %v3790
  %3824 = vmatpush.msra.mxu0 %v3788
  %3825 = vmatpush.msra.mxu0 %v3786
  %3826 = vmatpush.msra.mxu0 %v3784
  %3827 = vmatpush.msra.mxu0 %v3782
  %3828 = vmatpush.msra.mxu0 %v3780
  %3829 = vmatpush.msra.mxu0 %v3778
  %3830 = vmatpush.msra.mxu0 %v3776
  %3831 = vmatmul.f32.gmra.mxu0 %v3793
  %v3832 = vpop.f32.mrf.mxu0
  %v3833 = vadd.f32 %v3813, %v3832
  %3834 = vdwg.mxu0
  %3835 = vmatpush.msra.mxu0 %v3775
  %3836 = vmatpush.msra.mxu0 %v3773
  %3837 = vmatpush.msra.mxu0 %v3771
  %3838 = vmatpush.msra.mxu0 %v3769
  %3839 = vmatpush.msra.mxu0 %v3767
  %3840 = vmatpush.msra.mxu0 %v3765
  %3841 = vmatpush.msra.mxu0 %v3763
  %3842 = vmatpush.msra.mxu0 %v3761
  %3843 = vmatpush.msra.mxu0 %v3759
  %3844 = vmatpush.msra.mxu0 %v3757
  %3845 = vmatpush.msra.mxu0 %v3755
  %3846 = vmatpush.msra.mxu0 %v3753
  %3847 = vmatpush.msra.mxu0 %v3751
  %3848 = vmatpush.msra.mxu0 %v3749
  %3849 = vmatpush.msra.mxu0 %v3747
  %3850 = vmatpush.msra.mxu0 %v3745
  %3851 = vmatmul.f32.gmra.mxu0 %v3742
  %v3852 = vpop.f32.mrf.mxu0
  %v3853 = vadd.f32 0.0, %v3852
  %3854 = vdwg.mxu0
  %3855 = vmatpush.msra.mxu0 0.0
  %3856 = vmatpush.msra.mxu0 0.0
  %3857 = vmatpush.msra.mxu0 0.0
  %3858 = vmatpush.msra.mxu0 0.0
  %3859 = vmatpush.msra.mxu0 0.0
  %3860 = vmatpush.msra.mxu0 0.0
  %3861 = vmatpush.msra.mxu0 0.0
  %3862 = vmatpush.msra.mxu0 0.0
  %3863 = vmatpush.msra.mxu0 %v3791
  %3864 = vmatpush.msra.mxu0 %v3789
  %3865 = vmatpush.msra.mxu0 %v3787
  %3866 = vmatpush.msra.mxu0 %v3785
  %3867 = vmatpush.msra.mxu0 %v3783
  %3868 = vmatpush.msra.mxu0 %v3781
  %3869 = vmatpush.msra.mxu0 %v3779
  %3870 = vmatpush.msra.mxu0 %v3777
  %3871 = vmatmul.f32.gmra.mxu0 %v3793
  %v3872 = vpop.f32.mrf.mxu0
  %v3873 = vadd.f32 %v3853, %v3872
  %3874 = vdwg.mxu0
  %v3875 = vmul.f32 %v3833, 0.013888889
  %v3876 = vmul.f32 %v3873, 0.013888889
  %v3877 = vmul.f32 %v3875, %v3875
  %v3878 = vmul.f32 %v3876, %v3876
  %v3881 = vrot.slane %v3877, 7
  %v3882 = vrot.slane %v3878, 7
  %v3885 = vsub.f32 %v3875, %v3881
  %v3886 = vsub.f32 %v3876, %v3882
  %v3887 = vmax.f32 %v3885, 0.0
  %v3888 = vmax.f32 %v3886, 0.0
  %v3889 = vadd.f32 %v3887, 1e-05
  %v3890 = vadd.f32 %v3888, 1e-05
  %v3891 = vrsqrt.pop %v3889
  %v3892 = vmul.f32 %v3891, %v3889
  %v3893 = vmul.f32 %v3892, %v3891
  %v3894 = vmul.f32 0.5, %v3893
  %v3895 = vsub.f32 1.5, %v3894
  %v3896 = vmul.f32 %v3891, %v3895
  %vm3897 = vweird.f32 %v3889
  %vm3898 = vweird.f32 %v3891
  %vm3899 = vmor %vm3897, %vm3898
  %v3900 = vsel %vm3899, %v3891, %v3896
  %v3901 = vrsqrt.pop %v3890
  %v3902 = vmul.f32 %v3901, %v3890
  %v3903 = vmul.f32 %v3902, %v3901
  %v3904 = vmul.f32 0.5, %v3903
  %v3905 = vsub.f32 1.5, %v3904
  %v3906 = vmul.f32 %v3901, %v3905
  %vm3907 = vweird.f32 %v3890
  %vm3908 = vweird.f32 %v3901
  %vm3909 = vmor %vm3907, %vm3908
  %v3910 = vsel %vm3909, %v3901, %v3906
  %3913 = vst [vmem:[#allocation1] sm:$0xff] %v3900
  %3914 = vst [vmem:[#allocation1 + $0x9] sm:$0xff] %v3910
  %s3915 = scalar_lea.vmem [#allocation1], 1
  %v3916 = vld [vmem:[%s3915] ss:$9 sm:$0xff]
  %v3918 = vmul.f32 %v3618, %v3916
  %v3920 = vperm.slane %v3918, 0
  %v3921 = vperm.slane %v3918, 1
  %v3924 = vmul.f32 %v3875, %v3920
  %v3925 = vmul.f32 %v3876, %v3921
  %v3928 = vrot.slane %v3925, 7
  %v3929 = vsel %vm513, %v3924, %v3928
  %v3931 = vsub.f32 %v3620, %v3929
  %v3932 = vmul.f32 %v3689, %v3920
  %v3933 = vmul.f32 %v3690, %v3921
  %v3934 = vmul.f32 %v3691, %v3920
  %v3935 = vmul.f32 %v3692, %v3921
  %v3936 = vmul.f32 %v3693, %v3920
  %v3937 = vmul.f32 %v3694, %v3921
  %v3939 = vperm.slane %v3931, 0
  %v3940 = vperm.slane %v3931, 1
  %v3943 = vadd.f32 %v3932, %v3939
  %v3944 = vadd.f32 %v3933, %v3940
  %v3945 = vadd.f32 %v3934, %v3939
  %v3946 = vadd.f32 %v3935, %v3940
  %v3947 = vadd.f32 %v3936, %v3939
  %v3948 = vadd.f32 %v3937, %v3940
  %v3951 = vrot.slane %v3945, 5
  %v3952 = vrot.slane %v3946, 5
  %v3955 = vsel %vm513, %v3943, %v3951
  %v3956 = vsel %vm513, %v3944, %v3952
  %v3957 = vpack.c.bf16 %v3955, %v3955
  %v3958 = vpack.c.bf16 %v3956, %v3956
  %v3959 = vld [vmem:[%s10] sm:$0xff]
  %v3960 = vld [vmem:[%s10 + $0x8] sm:$0xff]
  %v3961 = vld [vmem:[%s10 + $0x10] sm:$0xff]
  %v3962 = vld [vmem:[%s10 + $0x18] sm:$0xff]
  %v3963 = vld [vmem:[%s10 + $0x20] sm:$0xff]
  %v3964 = vld [vmem:[%s10 + $0x28] sm:$0xff]
  %v3965 = vld [vmem:[%s10 + $0x30] sm:$0xff]
  %v3966 = vld [vmem:[%s10 + $0x38] sm:$0xff]
  %v3967 = vld [vmem:[%s10 + $0x40] sm:$0xff]
  %v3968 = vld [vmem:[%s10 + $0x48] sm:$0xff]
  %v3969 = vld [vmem:[%s10 + $0x50] sm:$0xff]
  %v3970 = vld [vmem:[%s10 + $0x58] sm:$0xff]
  %v3971 = vld [vmem:[%s10 + $0x60] sm:$0xff]
  %v3972 = vld [vmem:[%s10 + $0x68] sm:$0xff]
  %v3973 = vld [vmem:[%s10 + $0x70] sm:$0xff]
  %v3974 = vld [vmem:[%s10 + $0x78] sm:$0xff]
  %v3975 = vld [vmem:[%s10 + $0x80] sm:$0xff]
  %v3976 = vld [vmem:[%s10 + $0x88] sm:$0xff]
  %v3977 = vld [vmem:[%s10 + $0x90] sm:$0xff]
  %v3978 = vld [vmem:[%s10 + $0x98] sm:$0xff]
  %v3979 = vld [vmem:[%s10 + $0xa0] sm:$0xff]
  %v3980 = vld [vmem:[%s10 + $0xa8] sm:$0xff]
  %v3981 = vld [vmem:[%s10 + $0xb0] sm:$0xff]
  %v3982 = vld [vmem:[%s10 + $0xb8] sm:$0xff]
  %v3985 = vrot.slane %v3943, 1
  %v3986 = vrot.slane %v3944, 1
  %v3989 = vrot.slane %v3945, 6
  %v3990 = vrot.slane %v3946, 6
  %v3993 = vsel %vm513, %v3985, %v3989
  %v3994 = vsel %vm513, %v3986, %v3990
  %v3995 = vpack.c.bf16 %v3993, %v3993
  %v3996 = vpack.c.bf16 %v3994, %v3994
  %s3997 = scalar_lea.vmem %s10, 192
  %v3998 = vld [vmem:[%s3997] sm:$0xff]
  %v3999 = vld [vmem:[%s3997 + $0x8] sm:$0xff]
  %v4000 = vld [vmem:[%s3997 + $0x10] sm:$0xff]
  %v4001 = vld [vmem:[%s3997 + $0x18] sm:$0xff]
  %v4002 = vld [vmem:[%s3997 + $0x20] sm:$0xff]
  %v4003 = vld [vmem:[%s3997 + $0x28] sm:$0xff]
  %v4004 = vld [vmem:[%s3997 + $0x30] sm:$0xff]
  %v4005 = vld [vmem:[%s3997 + $0x38] sm:$0xff]
  %v4006 = vld [vmem:[%s3997 + $0x40] sm:$0xff]
  %v4007 = vld [vmem:[%s3997 + $0x48] sm:$0xff]
  %v4008 = vld [vmem:[%s3997 + $0x50] sm:$0xff]
  %v4009 = vld [vmem:[%s3997 + $0x58] sm:$0xff]
  %v4010 = vld [vmem:[%s3997 + $0x60] sm:$0xff]
  %v4011 = vld [vmem:[%s3997 + $0x68] sm:$0xff]
  %v4012 = vld [vmem:[%s3997 + $0x70] sm:$0xff]
  %v4013 = vld [vmem:[%s3997 + $0x78] sm:$0xff]
  %v4014 = vld [vmem:[%s3997 + $0x80] sm:$0xff]
  %v4015 = vld [vmem:[%s3997 + $0x88] sm:$0xff]
  %v4016 = vld [vmem:[%s3997 + $0x90] sm:$0xff]
  %v4017 = vld [vmem:[%s3997 + $0x98] sm:$0xff]
  %v4018 = vld [vmem:[%s3997 + $0xa0] sm:$0xff]
  %v4019 = vld [vmem:[%s3997 + $0xa8] sm:$0xff]
  %v4020 = vld [vmem:[%s3997 + $0xb0] sm:$0xff]
  %v4021 = vld [vmem:[%s3997 + $0xb8] sm:$0xff]
  %v4046 = vunpack.c.l.b16 %v3998
  %v4047 = vunpack.c.h.b16 %v3998
  %v4048 = vunpack.c.l.b16 %v3999
  %v4049 = vunpack.c.h.b16 %v3999
  %v4050 = vunpack.c.l.b16 %v4000
  %v4051 = vunpack.c.h.b16 %v4000
  %v4052 = vunpack.c.l.b16 %v4001
  %v4053 = vunpack.c.h.b16 %v4001
  %v4054 = vunpack.c.l.b16 %v4002
  %v4055 = vunpack.c.h.b16 %v4002
  %v4056 = vunpack.c.l.b16 %v4003
  %v4057 = vunpack.c.h.b16 %v4003
  %v4058 = vunpack.c.l.b16 %v4004
  %v4059 = vunpack.c.h.b16 %v4004
  %v4060 = vunpack.c.l.b16 %v4005
  %v4061 = vunpack.c.h.b16 %v4005
  %v4062 = vunpack.c.l.b16 %v4006
  %v4063 = vunpack.c.h.b16 %v4006
  %v4064 = vunpack.c.l.b16 %v4007
  %v4065 = vunpack.c.h.b16 %v4007
  %v4066 = vunpack.c.l.b16 %v4008
  %v4067 = vunpack.c.h.b16 %v4008
  %v4068 = vunpack.c.l.b16 %v4009
  %v4069 = vunpack.c.h.b16 %v4009
  %v4070 = vunpack.c.l.b16 %v4010
  %v4071 = vunpack.c.h.b16 %v4010
  %v4072 = vunpack.c.l.b16 %v4011
  %v4073 = vunpack.c.h.b16 %v4011
  %v4074 = vunpack.c.l.b16 %v4012
  %v4075 = vunpack.c.h.b16 %v4012
  %v4076 = vunpack.c.l.b16 %v4013
  %v4077 = vunpack.c.h.b16 %v4013
  %v4078 = vunpack.c.l.b16 %v4014
  %v4079 = vunpack.c.h.b16 %v4014
  %v4080 = vunpack.c.l.b16 %v4015
  %v4081 = vunpack.c.h.b16 %v4015
  %v4082 = vunpack.c.l.b16 %v4016
  %v4083 = vunpack.c.h.b16 %v4016
  %v4084 = vunpack.c.l.b16 %v4017
  %v4085 = vunpack.c.h.b16 %v4017
  %v4086 = vunpack.c.l.b16 %v4018
  %v4087 = vunpack.c.h.b16 %v4018
  %v4088 = vunpack.c.l.b16 %v4019
  %v4089 = vunpack.c.h.b16 %v4019
  %v4090 = vunpack.c.l.b16 %v4020
  %v4091 = vunpack.c.h.b16 %v4020
  %v4092 = vunpack.c.l.b16 %v4021
  %v4093 = vunpack.c.h.b16 %v4021
  %v4094 = vpack.c.b16 %v4048, %v4046
  %v4095 = vpack.c.b16 %v4049, %v4047
  %v4096 = vpack.c.b16 %v4052, %v4050
  %v4097 = vpack.c.b16 %v4053, %v4051
  %v4098 = vpack.c.b16 %v4056, %v4054
  %v4099 = vpack.c.b16 %v4057, %v4055
  %v4100 = vpack.c.b16 %v4060, %v4058
  %v4101 = vpack.c.b16 %v4061, %v4059
  %v4102 = vpack.c.b16 %v4064, %v4062
  %v4103 = vpack.c.b16 %v4065, %v4063
  %v4104 = vpack.c.b16 %v4068, %v4066
  %v4105 = vpack.c.b16 %v4069, %v4067
  %v4106 = vpack.c.b16 %v4072, %v4070
  %v4107 = vpack.c.b16 %v4073, %v4071
  %v4108 = vpack.c.b16 %v4076, %v4074
  %v4109 = vpack.c.b16 %v4077, %v4075
  %v4110 = vpack.c.b16 %v4080, %v4078
  %v4111 = vpack.c.b16 %v4081, %v4079
  %v4112 = vpack.c.b16 %v4084, %v4082
  %v4113 = vpack.c.b16 %v4085, %v4083
  %v4114 = vpack.c.b16 %v4088, %v4086
  %v4115 = vpack.c.b16 %v4089, %v4087
  %v4116 = vpack.c.b16 %v4092, %v4090
  %v4117 = vpack.c.b16 %v4093, %v4091
  %v4143 = vsel %vm467, %v3996, 0
  %4145 = vmatpush.bf16.msra.mxu0 %v4108
  %4146 = vmatpush.bf16.msra.mxu0 %v4106
  %4147 = vmatpush.bf16.msra.mxu0 %v4104
  %4148 = vmatpush.bf16.msra.mxu0 %v4102
  %4149 = vmatpush.bf16.msra.mxu0 %v4100
  %4150 = vmatpush.bf16.msra.mxu0 %v4098
  %4151 = vmatpush.bf16.msra.mxu0 %v4096
  %4152 = vmatpush.bf16.msra.mxu0 %v4094
  %4153 = vmatmul.bf16.gmra.mxu0 %v3995
  %v4154 = vpop.f32.mrf.mxu0
  %v4155 = vadd.f32 0.0, %v4154
  %v4156 = vpop.f32.mrf.mxu0
  %4157 = vdwg.mxu0
  %4158 = vmatpush.bf16.msra.mxu0 0
  %4159 = vmatpush.bf16.msra.mxu0 0
  %4160 = vmatpush.bf16.msra.mxu0 0
  %4161 = vmatpush.bf16.msra.mxu0 0
  %4162 = vmatpush.bf16.msra.mxu0 %v4116
  %4163 = vmatpush.bf16.msra.mxu0 %v4114
  %4164 = vmatpush.bf16.msra.mxu0 %v4112
  %4165 = vmatpush.bf16.msra.mxu0 %v4110
  %4166 = vmatmul.bf16.gmra.mxu0 %v4143
  %v4167 = vpop.f32.mrf.mxu0
  %v4168 = vadd.f32 %v4155, %v4167
  %v4169 = vpop.f32.mrf.mxu0
  %4170 = vdwg.mxu0
  %4171 = vmatpush.bf16.msra.mxu0 %v4109
  %4172 = vmatpush.bf16.msra.mxu0 %v4107
  %4173 = vmatpush.bf16.msra.mxu0 %v4105
  %4174 = vmatpush.bf16.msra.mxu0 %v4103
  %4175 = vmatpush.bf16.msra.mxu0 %v4101
  %4176 = vmatpush.bf16.msra.mxu0 %v4099
  %4177 = vmatpush.bf16.msra.mxu0 %v4097
  %4178 = vmatpush.bf16.msra.mxu0 %v4095
  %4179 = vmatmul.bf16.gmra.mxu0 %v3995
  %v4180 = vpop.f32.mrf.mxu0
  %v4181 = vadd.f32 0.0, %v4180
  %v4182 = vpop.f32.mrf.mxu0
  %4183 = vdwg.mxu0
  %4184 = vmatpush.bf16.msra.mxu0 0
  %4185 = vmatpush.bf16.msra.mxu0 0
  %4186 = vmatpush.bf16.msra.mxu0 0
  %4187 = vmatpush.bf16.msra.mxu0 0
  %4188 = vmatpush.bf16.msra.mxu0 %v4117
  %4189 = vmatpush.bf16.msra.mxu0 %v4115
  %4190 = vmatpush.bf16.msra.mxu0 %v4113
  %4191 = vmatpush.bf16.msra.mxu0 %v4111
  %4192 = vmatmul.bf16.gmra.mxu0 %v4143
  %v4193 = vpop.f32.mrf.mxu0
  %v4194 = vadd.f32 %v4181, %v4193
  %v4195 = vpop.f32.mrf.mxu0
  %4196 = vdwg.mxu0
  %v4221 = vunpack.c.l.b16 %v3959
  %v4222 = vunpack.c.h.b16 %v3959
  %v4223 = vunpack.c.l.b16 %v3960
  %v4224 = vunpack.c.h.b16 %v3960
  %v4225 = vunpack.c.l.b16 %v3961
  %v4226 = vunpack.c.h.b16 %v3961
  %v4227 = vunpack.c.l.b16 %v3962
  %v4228 = vunpack.c.h.b16 %v3962
  %v4229 = vunpack.c.l.b16 %v3963
  %v4230 = vunpack.c.h.b16 %v3963
  %v4231 = vunpack.c.l.b16 %v3964
  %v4232 = vunpack.c.h.b16 %v3964
  %v4233 = vunpack.c.l.b16 %v3965
  %v4234 = vunpack.c.h.b16 %v3965
  %v4235 = vunpack.c.l.b16 %v3966
  %v4236 = vunpack.c.h.b16 %v3966
  %v4237 = vunpack.c.l.b16 %v3967
  %v4238 = vunpack.c.h.b16 %v3967
  %v4239 = vunpack.c.l.b16 %v3968
  %v4240 = vunpack.c.h.b16 %v3968
  %v4241 = vunpack.c.l.b16 %v3969
  %v4242 = vunpack.c.h.b16 %v3969
  %v4243 = vunpack.c.l.b16 %v3970
  %v4244 = vunpack.c.h.b16 %v3970
  %v4245 = vunpack.c.l.b16 %v3971
  %v4246 = vunpack.c.h.b16 %v3971
  %v4247 = vunpack.c.l.b16 %v3972
  %v4248 = vunpack.c.h.b16 %v3972
  %v4249 = vunpack.c.l.b16 %v3973
  %v4250 = vunpack.c.h.b16 %v3973
  %v4251 = vunpack.c.l.b16 %v3974
  %v4252 = vunpack.c.h.b16 %v3974
  %v4253 = vunpack.c.l.b16 %v3975
  %v4254 = vunpack.c.h.b16 %v3975
  %v4255 = vunpack.c.l.b16 %v3976
  %v4256 = vunpack.c.h.b16 %v3976
  %v4257 = vunpack.c.l.b16 %v3977
  %v4258 = vunpack.c.h.b16 %v3977
  %v4259 = vunpack.c.l.b16 %v3978
  %v4260 = vunpack.c.h.b16 %v3978
  %v4261 = vunpack.c.l.b16 %v3979
  %v4262 = vunpack.c.h.b16 %v3979
  %v4263 = vunpack.c.l.b16 %v3980
  %v4264 = vunpack.c.h.b16 %v3980
  %v4265 = vunpack.c.l.b16 %v3981
  %v4266 = vunpack.c.h.b16 %v3981
  %v4267 = vunpack.c.l.b16 %v3982
  %v4268 = vunpack.c.h.b16 %v3982
  %v4269 = vpack.c.b16 %v4223, %v4221
  %v4270 = vpack.c.b16 %v4224, %v4222
  %v4271 = vpack.c.b16 %v4227, %v4225
  %v4272 = vpack.c.b16 %v4228, %v4226
  %v4273 = vpack.c.b16 %v4231, %v4229
  %v4274 = vpack.c.b16 %v4232, %v4230
  %v4275 = vpack.c.b16 %v4235, %v4233
  %v4276 = vpack.c.b16 %v4236, %v4234
  %v4277 = vpack.c.b16 %v4239, %v4237
  %v4278 = vpack.c.b16 %v4240, %v4238
  %v4279 = vpack.c.b16 %v4243, %v4241
  %v4280 = vpack.c.b16 %v4244, %v4242
  %v4281 = vpack.c.b16 %v4247, %v4245
  %v4282 = vpack.c.b16 %v4248, %v4246
  %v4283 = vpack.c.b16 %v4251, %v4249
  %v4284 = vpack.c.b16 %v4252, %v4250
  %v4285 = vpack.c.b16 %v4255, %v4253
  %v4286 = vpack.c.b16 %v4256, %v4254
  %v4287 = vpack.c.b16 %v4259, %v4257
  %v4288 = vpack.c.b16 %v4260, %v4258
  %v4289 = vpack.c.b16 %v4263, %v4261
  %v4290 = vpack.c.b16 %v4264, %v4262
  %v4291 = vpack.c.b16 %v4267, %v4265
  %v4292 = vpack.c.b16 %v4268, %v4266
  %v4318 = vsel %vm467, %v3958, 0
  %4320 = vmatpush.bf16.msra.mxu0 %v4283
  %4321 = vmatpush.bf16.msra.mxu0 %v4281
  %4322 = vmatpush.bf16.msra.mxu0 %v4279
  %4323 = vmatpush.bf16.msra.mxu0 %v4277
  %4324 = vmatpush.bf16.msra.mxu0 %v4275
  %4325 = vmatpush.bf16.msra.mxu0 %v4273
  %4326 = vmatpush.bf16.msra.mxu0 %v4271
  %4327 = vmatpush.bf16.msra.mxu0 %v4269
  %4328 = vmatmul.bf16.gmra.mxu0 %v3957
  %v4329 = vpop.f32.mrf.mxu0
  %v4330 = vadd.f32 %v4168, %v4329
  %v4331 = vpop.f32.mrf.mxu0
  %4332 = vdwg.mxu0
  %4333 = vmatpush.bf16.msra.mxu0 0
  %4334 = vmatpush.bf16.msra.mxu0 0
  %4335 = vmatpush.bf16.msra.mxu0 0
  %4336 = vmatpush.bf16.msra.mxu0 0
  %4337 = vmatpush.bf16.msra.mxu0 %v4291
  %4338 = vmatpush.bf16.msra.mxu0 %v4289
  %4339 = vmatpush.bf16.msra.mxu0 %v4287
  %4340 = vmatpush.bf16.msra.mxu0 %v4285
  %4341 = vmatmul.bf16.gmra.mxu0 %v4318
  %v4342 = vpop.f32.mrf.mxu0
  %v4343 = vadd.f32 %v4330, %v4342
  %v4344 = vpop.f32.mrf.mxu0
  %4345 = vdwg.mxu0
  %4346 = vmatpush.bf16.msra.mxu0 %v4284
  %4347 = vmatpush.bf16.msra.mxu0 %v4282
  %4348 = vmatpush.bf16.msra.mxu0 %v4280
  %4349 = vmatpush.bf16.msra.mxu0 %v4278
  %4350 = vmatpush.bf16.msra.mxu0 %v4276
  %4351 = vmatpush.bf16.msra.mxu0 %v4274
  %4352 = vmatpush.bf16.msra.mxu0 %v4272
  %4353 = vmatpush.bf16.msra.mxu0 %v4270
  %4354 = vmatmul.bf16.gmra.mxu0 %v3957
  %v4355 = vpop.f32.mrf.mxu0
  %v4356 = vadd.f32 %v4194, %v4355
  %v4357 = vpop.f32.mrf.mxu0
  %4358 = vdwg.mxu0
  %4359 = vmatpush.bf16.msra.mxu0 0
  %4360 = vmatpush.bf16.msra.mxu0 0
  %4361 = vmatpush.bf16.msra.mxu0 0
  %4362 = vmatpush.bf16.msra.mxu0 0
  %4363 = vmatpush.bf16.msra.mxu0 %v4292
  %4364 = vmatpush.bf16.msra.mxu0 %v4290
  %4365 = vmatpush.bf16.msra.mxu0 %v4288
  %4366 = vmatpush.bf16.msra.mxu0 %v4286
  %4367 = vmatmul.bf16.gmra.mxu0 %v4318
  %v4368 = vpop.f32.mrf.mxu0
  %v4369 = vadd.f32 %v4356, %v4368
  %v4370 = vpop.f32.mrf.mxu0
  %4371 = vdwg.mxu0
  %v4372 = vrot.slane %v3943, 2
  %v4373 = vrot.slane %v3944, 2
  %v4378 = vrot.slane %v3947, 7
  %v4379 = vrot.slane %v3948, 7
  %v4382 = vsel %vm513, %v4372, %v4378
  %v4383 = vsel %vm513, %v4373, %v4379
  %v4384 = vpack.c.bf16 %v4382, %v4382
  %v4385 = vpack.c.bf16 %v4383, %v4383
  %s4386 = scalar_lea.vmem %s10, 384
  %v4387 = vld [vmem:[%s4386] sm:$0xff]
  %v4388 = vld [vmem:[%s4386 + $0x8] sm:$0xff]
  %v4389 = vld [vmem:[%s4386 + $0x10] sm:$0xff]
  %v4390 = vld [vmem:[%s4386 + $0x18] sm:$0xff]
  %v4391 = vld [vmem:[%s4386 + $0x20] sm:$0xff]
  %v4392 = vld [vmem:[%s4386 + $0x28] sm:$0xff]
  %v4393 = vld [vmem:[%s4386 + $0x30] sm:$0xff]
  %v4394 = vld [vmem:[%s4386 + $0x38] sm:$0xff]
  %v4395 = vld [vmem:[%s4386 + $0x40] sm:$0xff]
  %v4396 = vld [vmem:[%s4386 + $0x48] sm:$0xff]
  %v4397 = vld [vmem:[%s4386 + $0x50] sm:$0xff]
  %v4398 = vld [vmem:[%s4386 + $0x58] sm:$0xff]
  %v4399 = vld [vmem:[%s4386 + $0x60] sm:$0xff]
  %v4400 = vld [vmem:[%s4386 + $0x68] sm:$0xff]
  %v4401 = vld [vmem:[%s4386 + $0x70] sm:$0xff]
  %v4402 = vld [vmem:[%s4386 + $0x78] sm:$0xff]
  %v4403 = vld [vmem:[%s4386 + $0x80] sm:$0xff]
  %v4404 = vld [vmem:[%s4386 + $0x88] sm:$0xff]
  %v4405 = vld [vmem:[%s4386 + $0x90] sm:$0xff]
  %v4406 = vld [vmem:[%s4386 + $0x98] sm:$0xff]
  %v4407 = vld [vmem:[%s4386 + $0xa0] sm:$0xff]
  %v4408 = vld [vmem:[%s4386 + $0xa8] sm:$0xff]
  %v4409 = vld [vmem:[%s4386 + $0xb0] sm:$0xff]
  %v4410 = vld [vmem:[%s4386 + $0xb8] sm:$0xff]
  %v4435 = vunpack.c.l.b16 %v4387
  %v4436 = vunpack.c.h.b16 %v4387
  %v4437 = vunpack.c.l.b16 %v4388
  %v4438 = vunpack.c.h.b16 %v4388
  %v4439 = vunpack.c.l.b16 %v4389
  %v4440 = vunpack.c.h.b16 %v4389
  %v4441 = vunpack.c.l.b16 %v4390
  %v4442 = vunpack.c.h.b16 %v4390
  %v4443 = vunpack.c.l.b16 %v4391
  %v4444 = vunpack.c.h.b16 %v4391
  %v4445 = vunpack.c.l.b16 %v4392
  %v4446 = vunpack.c.h.b16 %v4392
  %v4447 = vunpack.c.l.b16 %v4393
  %v4448 = vunpack.c.h.b16 %v4393
  %v4449 = vunpack.c.l.b16 %v4394
  %v4450 = vunpack.c.h.b16 %v4394
  %v4451 = vunpack.c.l.b16 %v4395
  %v4452 = vunpack.c.h.b16 %v4395
  %v4453 = vunpack.c.l.b16 %v4396
  %v4454 = vunpack.c.h.b16 %v4396
  %v4455 = vunpack.c.l.b16 %v4397
  %v4456 = vunpack.c.h.b16 %v4397
  %v4457 = vunpack.c.l.b16 %v4398
  %v4458 = vunpack.c.h.b16 %v4398
  %v4459 = vunpack.c.l.b16 %v4399
  %v4460 = vunpack.c.h.b16 %v4399
  %v4461 = vunpack.c.l.b16 %v4400
  %v4462 = vunpack.c.h.b16 %v4400
  %v4463 = vunpack.c.l.b16 %v4401
  %v4464 = vunpack.c.h.b16 %v4401
  %v4465 = vunpack.c.l.b16 %v4402
  %v4466 = vunpack.c.h.b16 %v4402
  %v4467 = vunpack.c.l.b16 %v4403
  %v4468 = vunpack.c.h.b16 %v4403
  %v4469 = vunpack.c.l.b16 %v4404
  %v4470 = vunpack.c.h.b16 %v4404
  %v4471 = vunpack.c.l.b16 %v4405
  %v4472 = vunpack.c.h.b16 %v4405
  %v4473 = vunpack.c.l.b16 %v4406
  %v4474 = vunpack.c.h.b16 %v4406
  %v4475 = vunpack.c.l.b16 %v4407
  %v4476 = vunpack.c.h.b16 %v4407
  %v4477 = vunpack.c.l.b16 %v4408
  %v4478 = vunpack.c.h.b16 %v4408
  %v4479 = vunpack.c.l.b16 %v4409
  %v4480 = vunpack.c.h.b16 %v4409
  %v4481 = vunpack.c.l.b16 %v4410
  %v4482 = vunpack.c.h.b16 %v4410
  %v4483 = vpack.c.b16 %v4437, %v4435
  %v4484 = vpack.c.b16 %v4438, %v4436
  %v4485 = vpack.c.b16 %v4441, %v4439
  %v4486 = vpack.c.b16 %v4442, %v4440
  %v4487 = vpack.c.b16 %v4445, %v4443
  %v4488 = vpack.c.b16 %v4446, %v4444
  %v4489 = vpack.c.b16 %v4449, %v4447
  %v4490 = vpack.c.b16 %v4450, %v4448
  %v4491 = vpack.c.b16 %v4453, %v4451
  %v4492 = vpack.c.b16 %v4454, %v4452
  %v4493 = vpack.c.b16 %v4457, %v4455
  %v4494 = vpack.c.b16 %v4458, %v4456
  %v4495 = vpack.c.b16 %v4461, %v4459
  %v4496 = vpack.c.b16 %v4462, %v4460
  %v4497 = vpack.c.b16 %v4465, %v4463
  %v4498 = vpack.c.b16 %v4466, %v4464
  %v4499 = vpack.c.b16 %v4469, %v4467
  %v4500 = vpack.c.b16 %v4470, %v4468
  %v4501 = vpack.c.b16 %v4473, %v4471
  %v4502 = vpack.c.b16 %v4474, %v4472
  %v4503 = vpack.c.b16 %v4477, %v4475
  %v4504 = vpack.c.b16 %v4478, %v4476
  %v4505 = vpack.c.b16 %v4481, %v4479
  %v4506 = vpack.c.b16 %v4482, %v4480
  %v4532 = vsel %vm467, %v4385, 0
  %4534 = vmatpush.bf16.msra.mxu0 %v4497
  %4535 = vmatpush.bf16.msra.mxu0 %v4495
  %4536 = vmatpush.bf16.msra.mxu0 %v4493
  %4537 = vmatpush.bf16.msra.mxu0 %v4491
  %4538 = vmatpush.bf16.msra.mxu0 %v4489
  %4539 = vmatpush.bf16.msra.mxu0 %v4487
  %4540 = vmatpush.bf16.msra.mxu0 %v4485
  %4541 = vmatpush.bf16.msra.mxu0 %v4483
  %4542 = vmatmul.bf16.gmra.mxu0 %v4384
  %v4543 = vpop.f32.mrf.mxu0
  %v4544 = vadd.f32 0.0, %v4543
  %v4545 = vpop.f32.mrf.mxu0
  %4546 = vdwg.mxu0
  %4547 = vmatpush.bf16.msra.mxu0 0
  %4548 = vmatpush.bf16.msra.mxu0 0
  %4549 = vmatpush.bf16.msra.mxu0 0
  %4550 = vmatpush.bf16.msra.mxu0 0
  %4551 = vmatpush.bf16.msra.mxu0 %v4505
  %4552 = vmatpush.bf16.msra.mxu0 %v4503
  %4553 = vmatpush.bf16.msra.mxu0 %v4501
  %4554 = vmatpush.bf16.msra.mxu0 %v4499
  %4555 = vmatmul.bf16.gmra.mxu0 %v4532
  %v4556 = vpop.f32.mrf.mxu0
  %v4557 = vadd.f32 %v4544, %v4556
  %v4558 = vpop.f32.mrf.mxu0
  %4559 = vdwg.mxu0
  %4560 = vmatpush.bf16.msra.mxu0 %v4498
  %4561 = vmatpush.bf16.msra.mxu0 %v4496
  %4562 = vmatpush.bf16.msra.mxu0 %v4494
  %4563 = vmatpush.bf16.msra.mxu0 %v4492
  %4564 = vmatpush.bf16.msra.mxu0 %v4490
  %4565 = vmatpush.bf16.msra.mxu0 %v4488
  %4566 = vmatpush.bf16.msra.mxu0 %v4486
  %4567 = vmatpush.bf16.msra.mxu0 %v4484
  %4568 = vmatmul.bf16.gmra.mxu0 %v4384
  %v4569 = vpop.f32.mrf.mxu0
  %v4570 = vadd.f32 0.0, %v4569
  %v4571 = vpop.f32.mrf.mxu0
  %4572 = vdwg.mxu0
  %4573 = vmatpush.bf16.msra.mxu0 0
  %4574 = vmatpush.bf16.msra.mxu0 0
  %4575 = vmatpush.bf16.msra.mxu0 0
  %4576 = vmatpush.bf16.msra.mxu0 0
  %4577 = vmatpush.bf16.msra.mxu0 %v4506
  %4578 = vmatpush.bf16.msra.mxu0 %v4504
  %4579 = vmatpush.bf16.msra.mxu0 %v4502
  %4580 = vmatpush.bf16.msra.mxu0 %v4500
  %4581 = vmatmul.bf16.gmra.mxu0 %v4532
  %v4582 = vpop.f32.mrf.mxu0
  %v4583 = vadd.f32 %v4570, %v4582
  %v4584 = vpop.f32.mrf.mxu0
  %4585 = vdwg.mxu0
  %v4586 = vadd.f32 %v4343, %v4557
  %v4587 = vadd.f32 %v4369, %v4583
  %v4588 = vrot.slane %v3943, 3
  %v4589 = vrot.slane %v3944, 3
  %v4592 = vsel %vm513, %v4588, %v3947
  %v4593 = vsel %vm513, %v4589, %v3948
  %v4594 = vpack.c.bf16 %v4592, %v4592
  %v4595 = vpack.c.bf16 %v4593, %v4593
  %s4596 = scalar_lea.vmem %s10, 576
  %v4597 = vld [vmem:[%s4596] sm:$0xff]
  %v4598 = vld [vmem:[%s4596 + $0x8] sm:$0xff]
  %v4599 = vld [vmem:[%s4596 + $0x10] sm:$0xff]
  %v4600 = vld [vmem:[%s4596 + $0x18] sm:$0xff]
  %v4601 = vld [vmem:[%s4596 + $0x20] sm:$0xff]
  %v4602 = vld [vmem:[%s4596 + $0x28] sm:$0xff]
  %v4603 = vld [vmem:[%s4596 + $0x30] sm:$0xff]
  %v4604 = vld [vmem:[%s4596 + $0x38] sm:$0xff]
  %v4605 = vld [vmem:[%s4596 + $0x40] sm:$0xff]
  %v4606 = vld [vmem:[%s4596 + $0x48] sm:$0xff]
  %v4607 = vld [vmem:[%s4596 + $0x50] sm:$0xff]
  %v4608 = vld [vmem:[%s4596 + $0x58] sm:$0xff]
  %v4609 = vld [vmem:[%s4596 + $0x60] sm:$0xff]
  %v4610 = vld [vmem:[%s4596 + $0x68] sm:$0xff]
  %v4611 = vld [vmem:[%s4596 + $0x70] sm:$0xff]
  %v4612 = vld [vmem:[%s4596 + $0x78] sm:$0xff]
  %v4613 = vld [vmem:[%s4596 + $0x80] sm:$0xff]
  %v4614 = vld [vmem:[%s4596 + $0x88] sm:$0xff]
  %v4615 = vld [vmem:[%s4596 + $0x90] sm:$0xff]
  %v4616 = vld [vmem:[%s4596 + $0x98] sm:$0xff]
  %v4617 = vld [vmem:[%s4596 + $0xa0] sm:$0xff]
  %v4618 = vld [vmem:[%s4596 + $0xa8] sm:$0xff]
  %v4619 = vld [vmem:[%s4596 + $0xb0] sm:$0xff]
  %v4620 = vld [vmem:[%s4596 + $0xb8] sm:$0xff]
  %v4645 = vunpack.c.l.b16 %v4597
  %v4646 = vunpack.c.h.b16 %v4597
  %v4647 = vunpack.c.l.b16 %v4598
  %v4648 = vunpack.c.h.b16 %v4598
  %v4649 = vunpack.c.l.b16 %v4599
  %v4650 = vunpack.c.h.b16 %v4599
  %v4651 = vunpack.c.l.b16 %v4600
  %v4652 = vunpack.c.h.b16 %v4600
  %v4653 = vunpack.c.l.b16 %v4601
  %v4654 = vunpack.c.h.b16 %v4601
  %v4655 = vunpack.c.l.b16 %v4602
  %v4656 = vunpack.c.h.b16 %v4602
  %v4657 = vunpack.c.l.b16 %v4603
  %v4658 = vunpack.c.h.b16 %v4603
  %v4659 = vunpack.c.l.b16 %v4604
  %v4660 = vunpack.c.h.b16 %v4604
  %v4661 = vunpack.c.l.b16 %v4605
  %v4662 = vunpack.c.h.b16 %v4605
  %v4663 = vunpack.c.l.b16 %v4606
  %v4664 = vunpack.c.h.b16 %v4606
  %v4665 = vunpack.c.l.b16 %v4607
  %v4666 = vunpack.c.h.b16 %v4607
  %v4667 = vunpack.c.l.b16 %v4608
  %v4668 = vunpack.c.h.b16 %v4608
  %v4669 = vunpack.c.l.b16 %v4609
  %v4670 = vunpack.c.h.b16 %v4609
  %v4671 = vunpack.c.l.b16 %v4610
  %v4672 = vunpack.c.h.b16 %v4610
  %v4673 = vunpack.c.l.b16 %v4611
  %v4674 = vunpack.c.h.b16 %v4611
  %v4675 = vunpack.c.l.b16 %v4612
  %v4676 = vunpack.c.h.b16 %v4612
  %v4677 = vunpack.c.l.b16 %v4613
  %v4678 = vunpack.c.h.b16 %v4613
  %v4679 = vunpack.c.l.b16 %v4614
  %v4680 = vunpack.c.h.b16 %v4614
  %v4681 = vunpack.c.l.b16 %v4615
  %v4682 = vunpack.c.h.b16 %v4615
  %v4683 = vunpack.c.l.b16 %v4616
  %v4684 = vunpack.c.h.b16 %v4616
  %v4685 = vunpack.c.l.b16 %v4617
  %v4686 = vunpack.c.h.b16 %v4617
  %v4687 = vunpack.c.l.b16 %v4618
  %v4688 = vunpack.c.h.b16 %v4618
  %v4689 = vunpack.c.l.b16 %v4619
  %v4690 = vunpack.c.h.b16 %v4619
  %v4691 = vunpack.c.l.b16 %v4620
  %v4692 = vunpack.c.h.b16 %v4620
  %v4693 = vpack.c.b16 %v4647, %v4645
  %v4694 = vpack.c.b16 %v4648, %v4646
  %v4695 = vpack.c.b16 %v4651, %v4649
  %v4696 = vpack.c.b16 %v4652, %v4650
  %v4697 = vpack.c.b16 %v4655, %v4653
  %v4698 = vpack.c.b16 %v4656, %v4654
  %v4699 = vpack.c.b16 %v4659, %v4657
  %v4700 = vpack.c.b16 %v4660, %v4658
  %v4701 = vpack.c.b16 %v4663, %v4661
  %v4702 = vpack.c.b16 %v4664, %v4662
  %v4703 = vpack.c.b16 %v4667, %v4665
  %v4704 = vpack.c.b16 %v4668, %v4666
  %v4705 = vpack.c.b16 %v4671, %v4669
  %v4706 = vpack.c.b16 %v4672, %v4670
  %v4707 = vpack.c.b16 %v4675, %v4673
  %v4708 = vpack.c.b16 %v4676, %v4674
  %v4709 = vpack.c.b16 %v4679, %v4677
  %v4710 = vpack.c.b16 %v4680, %v4678
  %v4711 = vpack.c.b16 %v4683, %v4681
  %v4712 = vpack.c.b16 %v4684, %v4682
  %v4713 = vpack.c.b16 %v4687, %v4685
  %v4714 = vpack.c.b16 %v4688, %v4686
  %v4715 = vpack.c.b16 %v4691, %v4689
  %v4716 = vpack.c.b16 %v4692, %v4690
  %v4742 = vsel %vm467, %v4595, 0
  %4744 = vmatpush.bf16.msra.mxu0 %v4707
  %4745 = vmatpush.bf16.msra.mxu0 %v4705
  %4746 = vmatpush.bf16.msra.mxu0 %v4703
  %4747 = vmatpush.bf16.msra.mxu0 %v4701
  %4748 = vmatpush.bf16.msra.mxu0 %v4699
  %4749 = vmatpush.bf16.msra.mxu0 %v4697
  %4750 = vmatpush.bf16.msra.mxu0 %v4695
  %4751 = vmatpush.bf16.msra.mxu0 %v4693
  %4752 = vmatmul.bf16.gmra.mxu0 %v4594
  %v4753 = vpop.f32.mrf.mxu0
  %v4754 = vadd.f32 0.0, %v4753
  %v4755 = vpop.f32.mrf.mxu0
  %4756 = vdwg.mxu0
  %4757 = vmatpush.bf16.msra.mxu0 0
  %4758 = vmatpush.bf16.msra.mxu0 0
  %4759 = vmatpush.bf16.msra.mxu0 0
  %4760 = vmatpush.bf16.msra.mxu0 0
  %4761 = vmatpush.bf16.msra.mxu0 %v4715
  %4762 = vmatpush.bf16.msra.mxu0 %v4713
  %4763 = vmatpush.bf16.msra.mxu0 %v4711
  %4764 = vmatpush.bf16.msra.mxu0 %v4709
  %4765 = vmatmul.bf16.gmra.mxu0 %v4742
  %v4766 = vpop.f32.mrf.mxu0
  %v4767 = vadd.f32 %v4754, %v4766
  %v4768 = vpop.f32.mrf.mxu0
  %4769 = vdwg.mxu0
  %4770 = vmatpush.bf16.msra.mxu0 %v4708
  %4771 = vmatpush.bf16.msra.mxu0 %v4706
  %4772 = vmatpush.bf16.msra.mxu0 %v4704
  %4773 = vmatpush.bf16.msra.mxu0 %v4702
  %4774 = vmatpush.bf16.msra.mxu0 %v4700
  %4775 = vmatpush.bf16.msra.mxu0 %v4698
  %4776 = vmatpush.bf16.msra.mxu0 %v4696
  %4777 = vmatpush.bf16.msra.mxu0 %v4694
  %4778 = vmatmul.bf16.gmra.mxu0 %v4594
  %v4779 = vpop.f32.mrf.mxu0
  %v4780 = vadd.f32 0.0, %v4779
  %v4781 = vpop.f32.mrf.mxu0
  %4782 = vdwg.mxu0
  %4783 = vmatpush.bf16.msra.mxu0 0
  %4784 = vmatpush.bf16.msra.mxu0 0
  %4785 = vmatpush.bf16.msra.mxu0 0
  %4786 = vmatpush.bf16.msra.mxu0 0
  %4787 = vmatpush.bf16.msra.mxu0 %v4716
  %4788 = vmatpush.bf16.msra.mxu0 %v4714
  %4789 = vmatpush.bf16.msra.mxu0 %v4712
  %4790 = vmatpush.bf16.msra.mxu0 %v4710
  %4791 = vmatmul.bf16.gmra.mxu0 %v4742
  %v4792 = vpop.f32.mrf.mxu0
  %v4793 = vadd.f32 %v4780, %v4792
  %v4794 = vpop.f32.mrf.mxu0
  %4795 = vdwg.mxu0
  %v4796 = vadd.f32 %v4586, %v4767
  %v4797 = vadd.f32 %v4587, %v4793
  %v4798 = vrot.slane %v3943, 4
  %v4799 = vrot.slane %v3944, 4
  %v4802 = vrot.slane %v3947, 1
  %v4803 = vrot.slane %v3948, 1
  %v4806 = vsel %vm513, %v4798, %v4802
  %v4807 = vsel %vm513, %v4799, %v4803
  %v4808 = vpack.c.bf16 %v4806, %v4806
  %v4809 = vpack.c.bf16 %v4807, %v4807
  %s4810 = scalar_lea.vmem %s10, 768
  %v4811 = vld [vmem:[%s4810] sm:$0xff]
  %v4812 = vld [vmem:[%s4810 + $0x8] sm:$0xff]
  %v4813 = vld [vmem:[%s4810 + $0x10] sm:$0xff]
  %v4814 = vld [vmem:[%s4810 + $0x18] sm:$0xff]
  %v4815 = vld [vmem:[%s4810 + $0x20] sm:$0xff]
  %v4816 = vld [vmem:[%s4810 + $0x28] sm:$0xff]
  %v4817 = vld [vmem:[%s4810 + $0x30] sm:$0xff]
  %v4818 = vld [vmem:[%s4810 + $0x38] sm:$0xff]
  %v4819 = vld [vmem:[%s4810 + $0x40] sm:$0xff]
  %v4820 = vld [vmem:[%s4810 + $0x48] sm:$0xff]
  %v4821 = vld [vmem:[%s4810 + $0x50] sm:$0xff]
  %v4822 = vld [vmem:[%s4810 + $0x58] sm:$0xff]
  %v4823 = vld [vmem:[%s4810 + $0x60] sm:$0xff]
  %v4824 = vld [vmem:[%s4810 + $0x68] sm:$0xff]
  %v4825 = vld [vmem:[%s4810 + $0x70] sm:$0xff]
  %v4826 = vld [vmem:[%s4810 + $0x78] sm:$0xff]
  %v4827 = vld [vmem:[%s4810 + $0x80] sm:$0xff]
  %v4828 = vld [vmem:[%s4810 + $0x88] sm:$0xff]
  %v4829 = vld [vmem:[%s4810 + $0x90] sm:$0xff]
  %v4830 = vld [vmem:[%s4810 + $0x98] sm:$0xff]
  %v4831 = vld [vmem:[%s4810 + $0xa0] sm:$0xff]
  %v4832 = vld [vmem:[%s4810 + $0xa8] sm:$0xff]
  %v4833 = vld [vmem:[%s4810 + $0xb0] sm:$0xff]
  %v4834 = vld [vmem:[%s4810 + $0xb8] sm:$0xff]
  %v4859 = vunpack.c.l.b16 %v4811
  %v4860 = vunpack.c.h.b16 %v4811
  %v4861 = vunpack.c.l.b16 %v4812
  %v4862 = vunpack.c.h.b16 %v4812
  %v4863 = vunpack.c.l.b16 %v4813
  %v4864 = vunpack.c.h.b16 %v4813
  %v4865 = vunpack.c.l.b16 %v4814
  %v4866 = vunpack.c.h.b16 %v4814
  %v4867 = vunpack.c.l.b16 %v4815
  %v4868 = vunpack.c.h.b16 %v4815
  %v4869 = vunpack.c.l.b16 %v4816
  %v4870 = vunpack.c.h.b16 %v4816
  %v4871 = vunpack.c.l.b16 %v4817
  %v4872 = vunpack.c.h.b16 %v4817
  %v4873 = vunpack.c.l.b16 %v4818
  %v4874 = vunpack.c.h.b16 %v4818
  %v4875 = vunpack.c.l.b16 %v4819
  %v4876 = vunpack.c.h.b16 %v4819
  %v4877 = vunpack.c.l.b16 %v4820
  %v4878 = vunpack.c.h.b16 %v4820
  %v4879 = vunpack.c.l.b16 %v4821
  %v4880 = vunpack.c.h.b16 %v4821
  %v4881 = vunpack.c.l.b16 %v4822
  %v4882 = vunpack.c.h.b16 %v4822
  %v4883 = vunpack.c.l.b16 %v4823
  %v4884 = vunpack.c.h.b16 %v4823
  %v4885 = vunpack.c.l.b16 %v4824
  %v4886 = vunpack.c.h.b16 %v4824
  %v4887 = vunpack.c.l.b16 %v4825
  %v4888 = vunpack.c.h.b16 %v4825
  %v4889 = vunpack.c.l.b16 %v4826
  %v4890 = vunpack.c.h.b16 %v4826
  %v4891 = vunpack.c.l.b16 %v4827
  %v4892 = vunpack.c.h.b16 %v4827
  %v4893 = vunpack.c.l.b16 %v4828
  %v4894 = vunpack.c.h.b16 %v4828
  %v4895 = vunpack.c.l.b16 %v4829
  %v4896 = vunpack.c.h.b16 %v4829
  %v4897 = vunpack.c.l.b16 %v4830
  %v4898 = vunpack.c.h.b16 %v4830
  %v4899 = vunpack.c.l.b16 %v4831
  %v4900 = vunpack.c.h.b16 %v4831
  %v4901 = vunpack.c.l.b16 %v4832
  %v4902 = vunpack.c.h.b16 %v4832
  %v4903 = vunpack.c.l.b16 %v4833
  %v4904 = vunpack.c.h.b16 %v4833
  %v4905 = vunpack.c.l.b16 %v4834
  %v4906 = vunpack.c.h.b16 %v4834
  %v4907 = vpack.c.b16 %v4861, %v4859
  %v4908 = vpack.c.b16 %v4862, %v4860
  %v4909 = vpack.c.b16 %v4865, %v4863
  %v4910 = vpack.c.b16 %v4866, %v4864
  %v4911 = vpack.c.b16 %v4869, %v4867
  %v4912 = vpack.c.b16 %v4870, %v4868
  %v4913 = vpack.c.b16 %v4873, %v4871
  %v4914 = vpack.c.b16 %v4874, %v4872
  %v4915 = vpack.c.b16 %v4877, %v4875
  %v4916 = vpack.c.b16 %v4878, %v4876
  %v4917 = vpack.c.b16 %v4881, %v4879
  %v4918 = vpack.c.b16 %v4882, %v4880
  %v4919 = vpack.c.b16 %v4885, %v4883
  %v4920 = vpack.c.b16 %v4886, %v4884
  %v4921 = vpack.c.b16 %v4889, %v4887
  %v4922 = vpack.c.b16 %v4890, %v4888
  %v4923 = vpack.c.b16 %v4893, %v4891
  %v4924 = vpack.c.b16 %v4894, %v4892
  %v4925 = vpack.c.b16 %v4897, %v4895
  %v4926 = vpack.c.b16 %v4898, %v4896
  %v4927 = vpack.c.b16 %v4901, %v4899
  %v4928 = vpack.c.b16 %v4902, %v4900
  %v4929 = vpack.c.b16 %v4905, %v4903
  %v4930 = vpack.c.b16 %v4906, %v4904
  %v4956 = vsel %vm467, %v4809, 0
  %4958 = vmatpush.bf16.msra.mxu0 %v4921
  %4959 = vmatpush.bf16.msra.mxu0 %v4919
  %4960 = vmatpush.bf16.msra.mxu0 %v4917
  %4961 = vmatpush.bf16.msra.mxu0 %v4915
  %4962 = vmatpush.bf16.msra.mxu0 %v4913
  %4963 = vmatpush.bf16.msra.mxu0 %v4911
  %4964 = vmatpush.bf16.msra.mxu0 %v4909
  %4965 = vmatpush.bf16.msra.mxu0 %v4907
  %4966 = vmatmul.bf16.gmra.mxu0 %v4808
  %v4967 = vpop.f32.mrf.mxu0
  %v4968 = vadd.f32 0.0, %v4967
  %v4969 = vpop.f32.mrf.mxu0
  %4970 = vdwg.mxu0
  %4971 = vmatpush.bf16.msra.mxu0 0
  %4972 = vmatpush.bf16.msra.mxu0 0
  %4973 = vmatpush.bf16.msra.mxu0 0
  %4974 = vmatpush.bf16.msra.mxu0 0
  %4975 = vmatpush.bf16.msra.mxu0 %v4929
  %4976 = vmatpush.bf16.msra.mxu0 %v4927
  %4977 = vmatpush.bf16.msra.mxu0 %v4925
  %4978 = vmatpush.bf16.msra.mxu0 %v4923
  %4979 = vmatmul.bf16.gmra.mxu0 %v4956
  %v4980 = vpop.f32.mrf.mxu0
  %v4981 = vadd.f32 %v4968, %v4980
  %v4982 = vpop.f32.mrf.mxu0
  %4983 = vdwg.mxu0
  %4984 = vmatpush.bf16.msra.mxu0 %v4922
  %4985 = vmatpush.bf16.msra.mxu0 %v4920
  %4986 = vmatpush.bf16.msra.mxu0 %v4918
  %4987 = vmatpush.bf16.msra.mxu0 %v4916
  %4988 = vmatpush.bf16.msra.mxu0 %v4914
  %4989 = vmatpush.bf16.msra.mxu0 %v4912
  %4990 = vmatpush.bf16.msra.mxu0 %v4910
  %4991 = vmatpush.bf16.msra.mxu0 %v4908
  %4992 = vmatmul.bf16.gmra.mxu0 %v4808
  %v4993 = vpop.f32.mrf.mxu0
  %v4994 = vadd.f32 0.0, %v4993
  %v4995 = vpop.f32.mrf.mxu0
  %4996 = vdwg.mxu0
  %4997 = vmatpush.bf16.msra.mxu0 0
  %4998 = vmatpush.bf16.msra.mxu0 0
  %4999 = vmatpush.bf16.msra.mxu0 0
  %5000 = vmatpush.bf16.msra.mxu0 0
  %5001 = vmatpush.bf16.msra.mxu0 %v4930
  %5002 = vmatpush.bf16.msra.mxu0 %v4928
  %5003 = vmatpush.bf16.msra.mxu0 %v4926
  %5004 = vmatpush.bf16.msra.mxu0 %v4924
  %5005 = vmatmul.bf16.gmra.mxu0 %v4956
  %v5006 = vpop.f32.mrf.mxu0
  %v5007 = vadd.f32 %v4994, %v5006
  %v5008 = vpop.f32.mrf.mxu0
  %5009 = vdwg.mxu0
  %v5010 = vadd.f32 %v4796, %v4981
  %v5011 = vadd.f32 %v4797, %v5007
  %v5012 = vrot.slane %v3943, 5
  %v5013 = vrot.slane %v3944, 5
  %v5016 = vrot.slane %v3947, 2
  %v5017 = vrot.slane %v3948, 2
  %v5020 = vsel %vm513, %v5012, %v5016
  %v5021 = vsel %vm513, %v5013, %v5017
  %v5022 = vpack.c.bf16 %v5020, %v5020
  %v5023 = vpack.c.bf16 %v5021, %v5021
  %s5024 = scalar_lea.vmem %s10, 960
  %v5025 = vld [vmem:[%s5024] sm:$0xff]
  %v5026 = vld [vmem:[%s5024 + $0x8] sm:$0xff]
  %v5027 = vld [vmem:[%s5024 + $0x10] sm:$0xff]
  %v5028 = vld [vmem:[%s5024 + $0x18] sm:$0xff]
  %v5029 = vld [vmem:[%s5024 + $0x20] sm:$0xff]
  %v5030 = vld [vmem:[%s5024 + $0x28] sm:$0xff]
  %v5031 = vld [vmem:[%s5024 + $0x30] sm:$0xff]
  %v5032 = vld [vmem:[%s5024 + $0x38] sm:$0xff]
  %v5033 = vld [vmem:[%s5024 + $0x40] sm:$0xff]
  %v5034 = vld [vmem:[%s5024 + $0x48] sm:$0xff]
  %v5035 = vld [vmem:[%s5024 + $0x50] sm:$0xff]
  %v5036 = vld [vmem:[%s5024 + $0x58] sm:$0xff]
  %v5037 = vld [vmem:[%s5024 + $0x60] sm:$0xff]
  %v5038 = vld [vmem:[%s5024 + $0x68] sm:$0xff]
  %v5039 = vld [vmem:[%s5024 + $0x70] sm:$0xff]
  %v5040 = vld [vmem:[%s5024 + $0x78] sm:$0xff]
  %v5041 = vld [vmem:[%s5024 + $0x80] sm:$0xff]
  %v5042 = vld [vmem:[%s5024 + $0x88] sm:$0xff]
  %v5043 = vld [vmem:[%s5024 + $0x90] sm:$0xff]
  %v5044 = vld [vmem:[%s5024 + $0x98] sm:$0xff]
  %v5045 = vld [vmem:[%s5024 + $0xa0] sm:$0xff]
  %v5046 = vld [vmem:[%s5024 + $0xa8] sm:$0xff]
  %v5047 = vld [vmem:[%s5024 + $0xb0] sm:$0xff]
  %v5048 = vld [vmem:[%s5024 + $0xb8] sm:$0xff]
  %v5073 = vunpack.c.l.b16 %v5025
  %v5074 = vunpack.c.h.b16 %v5025
  %v5075 = vunpack.c.l.b16 %v5026
  %v5076 = vunpack.c.h.b16 %v5026
  %v5077 = vunpack.c.l.b16 %v5027
  %v5078 = vunpack.c.h.b16 %v5027
  %v5079 = vunpack.c.l.b16 %v5028
  %v5080 = vunpack.c.h.b16 %v5028
  %v5081 = vunpack.c.l.b16 %v5029
  %v5082 = vunpack.c.h.b16 %v5029
  %v5083 = vunpack.c.l.b16 %v5030
  %v5084 = vunpack.c.h.b16 %v5030
  %v5085 = vunpack.c.l.b16 %v5031
  %v5086 = vunpack.c.h.b16 %v5031
  %v5087 = vunpack.c.l.b16 %v5032
  %v5088 = vunpack.c.h.b16 %v5032
  %v5089 = vunpack.c.l.b16 %v5033
  %v5090 = vunpack.c.h.b16 %v5033
  %v5091 = vunpack.c.l.b16 %v5034
  %v5092 = vunpack.c.h.b16 %v5034
  %v5093 = vunpack.c.l.b16 %v5035
  %v5094 = vunpack.c.h.b16 %v5035
  %v5095 = vunpack.c.l.b16 %v5036
  %v5096 = vunpack.c.h.b16 %v5036
  %v5097 = vunpack.c.l.b16 %v5037
  %v5098 = vunpack.c.h.b16 %v5037
  %v5099 = vunpack.c.l.b16 %v5038
  %v5100 = vunpack.c.h.b16 %v5038
  %v5101 = vunpack.c.l.b16 %v5039
  %v5102 = vunpack.c.h.b16 %v5039
  %v5103 = vunpack.c.l.b16 %v5040
  %v5104 = vunpack.c.h.b16 %v5040
  %v5105 = vunpack.c.l.b16 %v5041
  %v5106 = vunpack.c.h.b16 %v5041
  %v5107 = vunpack.c.l.b16 %v5042
  %v5108 = vunpack.c.h.b16 %v5042
  %v5109 = vunpack.c.l.b16 %v5043
  %v5110 = vunpack.c.h.b16 %v5043
  %v5111 = vunpack.c.l.b16 %v5044
  %v5112 = vunpack.c.h.b16 %v5044
  %v5113 = vunpack.c.l.b16 %v5045
  %v5114 = vunpack.c.h.b16 %v5045
  %v5115 = vunpack.c.l.b16 %v5046
  %v5116 = vunpack.c.h.b16 %v5046
  %v5117 = vunpack.c.l.b16 %v5047
  %v5118 = vunpack.c.h.b16 %v5047
  %v5119 = vunpack.c.l.b16 %v5048
  %v5120 = vunpack.c.h.b16 %v5048
  %v5121 = vpack.c.b16 %v5075, %v5073
  %v5122 = vpack.c.b16 %v5076, %v5074
  %v5123 = vpack.c.b16 %v5079, %v5077
  %v5124 = vpack.c.b16 %v5080, %v5078
  %v5125 = vpack.c.b16 %v5083, %v5081
  %v5126 = vpack.c.b16 %v5084, %v5082
  %v5127 = vpack.c.b16 %v5087, %v5085
  %v5128 = vpack.c.b16 %v5088, %v5086
  %v5129 = vpack.c.b16 %v5091, %v5089
  %v5130 = vpack.c.b16 %v5092, %v5090
  %v5131 = vpack.c.b16 %v5095, %v5093
  %v5132 = vpack.c.b16 %v5096, %v5094
  %v5133 = vpack.c.b16 %v5099, %v5097
  %v5134 = vpack.c.b16 %v5100, %v5098
  %v5135 = vpack.c.b16 %v5103, %v5101
  %v5136 = vpack.c.b16 %v5104, %v5102
  %v5137 = vpack.c.b16 %v5107, %v5105
  %v5138 = vpack.c.b16 %v5108, %v5106
  %v5139 = vpack.c.b16 %v5111, %v5109
  %v5140 = vpack.c.b16 %v5112, %v5110
  %v5141 = vpack.c.b16 %v5115, %v5113
  %v5142 = vpack.c.b16 %v5116, %v5114
  %v5143 = vpack.c.b16 %v5119, %v5117
  %v5144 = vpack.c.b16 %v5120, %v5118
  %v5170 = vsel %vm467, %v5023, 0
  %5172 = vmatpush.bf16.msra.mxu0 %v5135
  %5173 = vmatpush.bf16.msra.mxu0 %v5133
  %5174 = vmatpush.bf16.msra.mxu0 %v5131
  %5175 = vmatpush.bf16.msra.mxu0 %v5129
  %5176 = vmatpush.bf16.msra.mxu0 %v5127
  %5177 = vmatpush.bf16.msra.mxu0 %v5125
  %5178 = vmatpush.bf16.msra.mxu0 %v5123
  %5179 = vmatpush.bf16.msra.mxu0 %v5121
  %5180 = vmatmul.bf16.gmra.mxu0 %v5022
  %v5181 = vpop.f32.mrf.mxu0
  %v5182 = vadd.f32 0.0, %v5181
  %v5183 = vpop.f32.mrf.mxu0
  %5184 = vdwg.mxu0
  %5185 = vmatpush.bf16.msra.mxu0 0
  %5186 = vmatpush.bf16.msra.mxu0 0
  %5187 = vmatpush.bf16.msra.mxu0 0
  %5188 = vmatpush.bf16.msra.mxu0 0
  %5189 = vmatpush.bf16.msra.mxu0 %v5143
  %5190 = vmatpush.bf16.msra.mxu0 %v5141
  %5191 = vmatpush.bf16.msra.mxu0 %v5139
  %5192 = vmatpush.bf16.msra.mxu0 %v5137
  %5193 = vmatmul.bf16.gmra.mxu0 %v5170
  %v5194 = vpop.f32.mrf.mxu0
  %v5195 = vadd.f32 %v5182, %v5194
  %v5196 = vpop.f32.mrf.mxu0
  %5197 = vdwg.mxu0
  %5198 = vmatpush.bf16.msra.mxu0 %v5136
  %5199 = vmatpush.bf16.msra.mxu0 %v5134
  %5200 = vmatpush.bf16.msra.mxu0 %v5132
  %5201 = vmatpush.bf16.msra.mxu0 %v5130
  %5202 = vmatpush.bf16.msra.mxu0 %v5128
  %5203 = vmatpush.bf16.msra.mxu0 %v5126
  %5204 = vmatpush.bf16.msra.mxu0 %v5124
  %5205 = vmatpush.bf16.msra.mxu0 %v5122
  %5206 = vmatmul.bf16.gmra.mxu0 %v5022
  %v5207 = vpop.f32.mrf.mxu0
  %v5208 = vadd.f32 0.0, %v5207
  %v5209 = vpop.f32.mrf.mxu0
  %5210 = vdwg.mxu0
  %5211 = vmatpush.bf16.msra.mxu0 0
  %5212 = vmatpush.bf16.msra.mxu0 0
  %5213 = vmatpush.bf16.msra.mxu0 0
  %5214 = vmatpush.bf16.msra.mxu0 0
  %5215 = vmatpush.bf16.msra.mxu0 %v5144
  %5216 = vmatpush.bf16.msra.mxu0 %v5142
  %5217 = vmatpush.bf16.msra.mxu0 %v5140
  %5218 = vmatpush.bf16.msra.mxu0 %v5138
  %5219 = vmatmul.bf16.gmra.mxu0 %v5170
  %v5220 = vpop.f32.mrf.mxu0
  %v5221 = vadd.f32 %v5208, %v5220
  %v5222 = vpop.f32.mrf.mxu0
  %5223 = vdwg.mxu0
  %v5224 = vadd.f32 %v5010, %v5195
  %v5225 = vadd.f32 %v5011, %v5221
  %s5226 = scalar_lea.vmem %s1, 80
  %v5227 = vld [vmem:[%s5226] ss:$8 sm:$0x3]
  %v5229 = vperm.slane %v5227, 0
  %v5230 = vperm.slane %v5227, 1
  %v5233 = vadd.f32 %v5224, %v5229
  %v5234 = vadd.f32 %v5225, %v5230
  %v5237 = vrot.slane %v5234, 6
  %v5238 = vsel %vm458, %v5233, %v5237
  %vm5240 = vcmask 125954
  %vm5241 = vmor %vm5240, %vm458
  %5242 = vst.msk [vmem:[%s11] sm:$0xf] %vm5241, %v5238
  // Predicated region
  $region46: #{l1_mlp_embed_forward.1} parent=0 // pred_check
    _
  $region47: #{l1_mlp_embed_forward.1} parent=0 // pred_check_branch
    %5244 = sbr.rel (0) target = $region49
  $region48: #{l1_mlp_embed_forward.1} parent=0 // pred_region
    _
  $region49: #{l1_mlp_embed_forward.1} parent=0 // pred_fallthru
    _
  // Predicated region
  $region50: #{l1_mlp_embed_forward.1} parent=0 // pred_check
    _
  $region51: #{l1_mlp_embed_forward.1} parent=0 // pred_check_branch
    %5246 = sbr.rel (0) target = $region53
  $region52: #{l1_mlp_embed_forward.1} parent=0 // pred_region
    _
  $region53: #{l1_mlp_embed_forward.1} parent=0 // pred_fallthru
    _

</llo_original>
